<compile_context>
chip_gen: v7x
topology: tpu7x:2x2x1
jax: 0.10.0
libtpu: 0.0.40
codegen_flags: <defaults>
</compile_context>

<pallas_src>
import functools

import jax
import jax.numpy as jnp
from jax.experimental import pallas as pl
from jax.experimental.pallas import tpu as pltpu

LANE = 128
SUBLANE = 8


def _round_up(n, m):
    return ((n + m - 1) // m) * m


# -----------------------------------------------------------------------------
# Weight packing: torch Conv1d weight (C_out, C_in, K) -> per-tap (K, Cp_in, Cp_out)
# with channels zero-padded; only weights carry padding, not streamed activations.
# -----------------------------------------------------------------------------
def _pack_taps(w, cp_in, cp_out, dtype):
    c_out, c_in, k = w.shape
    wt = jnp.transpose(w, (2, 1, 0))                                     # (K, C_in, C_out)
    wt = jnp.pad(wt, ((0, 0), (0, cp_in - c_in), (0, cp_out - c_out)))
    return wt.astype(dtype)


def _pack_bias(b, cp_out):
    return jnp.pad(b, (0, cp_out - b.shape[0])).reshape(1, cp_out).astype(jnp.float32)


# -----------------------------------------------------------------------------
# Fused whole-encoder kernel (one batch element per grid step, all layers in VMEM)
# -----------------------------------------------------------------------------
def _encoder_kernel(xe_ref, xo_ref,
                    w1_ref, b1_ref, w2_ref, b2_ref, w3_ref, b3_ref,
                    w4_ref, b4_ref, w5_ref, b5_ref, wr1_ref, wr2_ref,
                    o_ref, *, n_res):
    f32 = jnp.float32
    cdt = w2_ref.dtype                       # MXU operand dtype (bf16 or f32)

    def mm(a, w):                            # one per-tap MXU matmul, f32 accumulate
        return jnp.dot(a.astype(cdt), w, preferred_element_type=f32)

    def zrow(v):
        return jnp.zeros((1, v.shape[1]), v.dtype)

    def sdown(v):                            # tap l-1 with zero halo: [0, v[:-1]]
        return jnp.concatenate([zrow(v), v[:-1]], axis=0)

    def sup(v):                              # tap l+1 with zero halo: [v[1:], 0]
        return jnp.concatenate([v[1:], zrow(v)], axis=0)

    def prepend0(v):                         # [0, v]  (length + 1)
        return jnp.concatenate([zrow(v), v], axis=0)

    def append0(v):                          # [v, 0]  (length + 1)
        return jnp.concatenate([v, zrow(v)], axis=0)

    def conv_k3(v, w_ref):                   # k=3, pad=1, stride=1 (half-res stage)
        return mm(sdown(v), w_ref[0]) + mm(v, w_ref[1]) + mm(sup(v), w_ref[2])

    def phase_conv_k3(e, o, w_ref):          # k=3, pad=1, stride=1 on even/odd phases
        w0, w1, w2 = w_ref[0], w_ref[1], w_ref[2]
        ye = mm(sdown(o), w0) + mm(e, w1) + mm(o, w2)       # out rows 0,2,4,...
        yo = mm(e, w0) + mm(o, w1) + mm(sup(e), w2)         # out rows 1,3,5,...
        return ye, yo

    # ---- full-resolution stage, carried as even/odd half-res phases ----------------
    xe = xe_ref[...]                         # (H, Cf) compact input channels
    xo = xo_ref[...]

    c1e, c1o = phase_conv_k3(xe, xo, w1_ref)
    b1 = b1_ref[...]
    x1e = jnp.maximum(c1e + b1, 0.0)         # relu(conv_1(x))        (f32)
    x1o = jnp.maximum(c1o + b1, 0.0)

    c2e, c2o = phase_conv_k3(x1e, x1o, w2_ref)
    b2 = b2_ref[...]
    x2e = jnp.maximum(c2e + b2, 0.0) + x1e   # relu(conv_2) + x_conv_1 (residual in f32)
    x2o = jnp.maximum(c2o + b2, 0.0) + x1o

    # ---- conv_3: k=4, stride=2, pad=2 downsample -----------------------------------
    # out[l] = x2[2l-2]W0 + x2[2l-1]W1 + x2[2l]W2 + x2[2l+1]W3
    #        = E[l-1]W0 + O[l-1]W1 + E[l]W2 + O[l]W3   (unit-stride taps, length H+1)
    y3 = (mm(prepend0(x2e), w3_ref[0]) + mm(prepend0(x2o), w3_ref[1])
          + mm(append0(x2e), w3_ref[2]) + mm(append0(x2o), w3_ref[3]))
    x3 = jnp.maximum(y3 + b3_ref[...], 0.0)  # (Lh, Cp) relu(conv_3)

    # ---- half-resolution stage ------------------------------------------------------
    x4 = jnp.maximum(conv_k3(x3, w4_ref) + b4_ref[...], 0.0) + x3   # relu(conv_4)+x3
    x5 = jnp.maximum(conv_k3(x4, w5_ref) + b5_ref[...], 0.0) + x4   # relu(conv_5)+x4

    # ---- residual stack: same (wr1, wr2) every iteration ([Residual(...)] * N) ------
    wr2 = wr2_ref[...].astype(f32)           # k=1 projection kept in f32 (precision)

    def res_body(_, h):
        r = jnp.maximum(h, 0.0)              # single ReLU; zero halo rows stay zero
        s = jnp.maximum(conv_k3(r, wr1_ref), 0.0)
        return h + jnp.dot(s, wr2, preferred_element_type=f32)

    h = jax.lax.fori_loop(0, n_res, res_body, x5, unroll=True)

    # ResidualStack epilogue + encoder skip: relu(stack(x5)) + x5, f32 output
    o_ref[...] = (jnp.maximum(h, 0.0) + x5).astype(o_ref.dtype)


# -----------------------------------------------------------------------------
# Full encoder forward (matches PyTorch ConvolutionalEncoder.forward)
# -----------------------------------------------------------------------------
def convolutional_encoder_forward(inputs_ncl, params, *, num_residual_layers,
                                  compute_dtype=jnp.bfloat16):
    """inputs_ncl: (B, features_filters, L) NCL.  Returns (B, num_hiddens, L//2+1) f32."""
    b_, c_feat, l_in = inputs_ncl.shape
    assert l_in % 2 == 0, "sequence length must be even for the stride-2 conv_3"
    num_hiddens = params["w1"].shape[0]
    num_res_hid = params["wr1"].shape[0]
    cp = _round_up(max(num_hiddens, num_res_hid), LANE)       # lane-dense hidden width
    cfp = _round_up(c_feat, SUBLANE)                          # compact input channels
    h_half = l_in // 2                                        # phase length
    l_half = h_half + 1                                       # length after conv_3

    w1 = _pack_taps(params["w1"], cfp, cp, compute_dtype)     # (3, cfp, cp)
    w2 = _pack_taps(params["w2"], cp, cp, compute_dtype)      # (3, cp, cp)
    w3 = _pack_taps(params["w3"], cp, cp, compute_dtype)      # (4, cp, cp)
    w4 = _pack_taps(params["w4"], cp, cp, compute_dtype)
    w5 = _pack_taps(params["w5"], cp, cp, compute_dtype)
    wr1 = _pack_taps(params["wr1"], cp, cp, compute_dtype)
    wr2 = _pack_taps(params["wr2"], cp, cp, jnp.float32)[0]   # (cp, cp) f32 k=1 proj
    b1, b2, b3, b4, b5 = (_pack_bias(params[k], cp) for k in ("b1", "b2", "b3", "b4", "b5"))

    # Single layout change at the model boundary: NCL -> channels-last, compact
    # channel pad (13 -> 16), and an even/odd phase split of the COMPACT input so the
    # stride-2 layer only needs unit-stride taps in-kernel.  This touches ~cfp/cp of
    # one activation's worth of bytes (vs. the per-layer 128-lane pads/slices before).
    x = jnp.transpose(inputs_ncl, (0, 2, 1)).astype(compute_dtype)
    x = jnp.pad(x, ((0, 0), (0, 0), (0, cfp - c_feat)))
    xe, xo = x[:, 0::2, :], x[:, 1::2, :]                     # (B, H, cfp) each

    kernel = functools.partial(_encoder_kernel, n_res=num_residual_layers)

    # Honest advisory cost estimate (padded dims = what the MXU / DMA actually do).
    itm = xe.dtype.itemsize
    flops = 2 * b_ * (l_in * 3 * cfp * cp + l_in * 3 * cp * cp          # conv1, conv2
                      + l_half * 4 * cp * cp                            # conv3
                      + 2 * l_half * 3 * cp * cp                        # conv4, conv5
                      + num_residual_layers * l_half * (3 * cp * cp + cp * cp))
    weight_bytes = sum(int(a.size) * a.dtype.itemsize
                       for a in (w1, w2, w3, w4, w5, wr1, wr2, b1, b2, b3, b4, b5))
    bytes_accessed = b_ * l_in * cfp * itm + b_ * l_half * cp * 4 + weight_bytes

    out = pl.pallas_call(
        kernel,
        out_shape=jax.ShapeDtypeStruct((b_, l_half, cp), jnp.float32),
        grid_spec=pltpu.PrefetchScalarGridSpec(
            num_scalar_prefetch=0,
            grid=(b_,),
            in_specs=[
                pl.BlockSpec((None, h_half, cfp), lambda i: (i, 0, 0)),   # x even phase
                pl.BlockSpec((None, h_half, cfp), lambda i: (i, 0, 0)),   # x odd phase
                pl.BlockSpec(w1.shape, lambda i: (0, 0, 0)),
                pl.BlockSpec(b1.shape, lambda i: (0, 0)),
                pl.BlockSpec(w2.shape, lambda i: (0, 0, 0)),
                pl.BlockSpec(b2.shape, lambda i: (0, 0)),
                pl.BlockSpec(w3.shape, lambda i: (0, 0, 0)),
                pl.BlockSpec(b3.shape, lambda i: (0, 0)),
                pl.BlockSpec(w4.shape, lambda i: (0, 0, 0)),
                pl.BlockSpec(b4.shape, lambda i: (0, 0)),
                pl.BlockSpec(w5.shape, lambda i: (0, 0, 0)),
                pl.BlockSpec(b5.shape, lambda i: (0, 0)),
                pl.BlockSpec(wr1.shape, lambda i: (0, 0, 0)),
                pl.BlockSpec(wr2.shape, lambda i: (0, 0)),
            ],
            out_specs=pl.BlockSpec((None, l_half, cp), lambda i: (i, 0, 0)),
        ),
        compiler_params=pltpu.CompilerParams(dimension_semantics=("parallel",)),
        cost_estimate=pl.CostEstimate(flops=int(flops), transcendentals=0,
                                      bytes_accessed=int(bytes_accessed)),
    )(xe, xo, w1, b1, w2, b2, w3, b3, w4, b4, w5, b5, wr1, wr2)

    out = out[:, :, :num_hiddens]
    return jnp.transpose(out, (0, 2, 1))                      # back to NCL, f32


# -----------------------------------------------------------------------------
# Pure-JAX f32 reference (for verification)
# -----------------------------------------------------------------------------
def encoder_reference(x_ncl, params, *, num_residual_layers):
    hp = jax.lax.Precision.HIGHEST

    def conv(x, w, b=None, stride=1, pad=0):
        y = jax.lax.conv_general_dilated(
            x, w, window_strides=(stride,), padding=((pad, pad),),
            dimension_numbers=("NCH", "OIH", "NCH"), precision=hp)
        if b is not None:
            y = y + b[None, :, None]
        return y

    relu = lambda t: jnp.maximum(t, 0.0)
    x1 = relu(conv(x_ncl, params["w1"], params["b1"], 1, 1))
    x2 = relu(conv(x1, params["w2"], params["b2"], 1, 1)) + x1
    x3 = relu(conv(x2, params["w3"], params["b3"], 2, 2))
    x4 = relu(conv(x3, params["w4"], params["b4"], 1, 1)) + x3
    x5 = relu(conv(x4, params["w5"], params["b5"], 1, 1)) + x4
    h = x5
    for _ in range(num_residual_layers):
        h = h + conv(relu(conv(relu(h), params["wr1"], None, 1, 1)),
                     params["wr2"], None, 1, 0)
    return relu(h) + x5


@functools.partial(jax.jit, static_argnames=("num_residual_layers", "compute_dtype"))
def _jitted_forward(x, params, num_residual_layers, compute_dtype):
    return convolutional_encoder_forward(
        x, params, num_residual_layers=num_residual_layers, compute_dtype=compute_dtype)


if __name__ == "__main__":
    # Small deterministic config:
    #   ConvolutionalEncoder(features_filters=13, num_hiddens=64,
    #                        num_residual_layers=2, num_residual_hiddens=32)
    B, L = 2, 16
    features_filters = 13
    num_hiddens = 64
    num_residual_layers = 2
    num_residual_hiddens = 32

    key = jax.random.PRNGKey(0)
    keys = jax.random.split(key, 13)
    scale = 0.05

    def nrm(k, shape):
        return scale * jax.random.normal(k, shape, dtype=jnp.float32)

    params = {
        "w1": nrm(keys[0], (num_hiddens, features_filters, 3)), "b1": nrm(keys[1], (num_hiddens,)),
        "w2": nrm(keys[2], (num_hiddens, num_hiddens, 3)),      "b2": nrm(keys[3], (num_hiddens,)),
        "w3": nrm(keys[4], (num_hiddens, num_hiddens, 4)),      "b3": nrm(keys[5], (num_hiddens,)),
        "w4": nrm(keys[6], (num_hiddens, num_hiddens, 3)),      "b4": nrm(keys[7], (num_hiddens,)),
        "w5": nrm(keys[8], (num_hiddens, num_hiddens, 3)),      "b5": nrm(keys[9], (num_hiddens,)),
        "wr1": nrm(keys[10], (num_residual_hiddens, num_hiddens, 3)),
        "wr2": nrm(keys[11], (num_hiddens, num_residual_hiddens, 1)),
    }
    x = jax.random.normal(keys[12], (B, features_filters, L), dtype=jnp.float32)

    ref = encoder_reference(x, params, num_residual_layers=num_residual_layers)

    # f32 compute path: tight correctness check.
    out_f32 = jax.block_until_ready(
        _jitted_forward(x, params, num_residual_layers=num_residual_layers,
                        compute_dtype=jnp.float32))
    assert out_f32.shape == ref.shape, (out_f32.shape, ref.shape)
    assert jnp.allclose(out_f32, ref, atol=5e-3, rtol=5e-3)

    # bf16 compute path (perf path: bf16 MXU operands, f32 accumulation / epilogues).
    out_bf16 = jax.block_until_ready(
        _jitted_forward(x, params, num_residual_layers=num_residual_layers,
                        compute_dtype=jnp.bfloat16))
    assert out_bf16.shape == ref.shape
    assert jnp.allclose(out_bf16, ref, atol=5e-2, rtol=5e-2)

    print("KERNEL_OK")
</pallas_src>

<mosaic_0001>
module attributes {stable_mosaic.version = 11 : i64} {
  func.func @_encoder_kernel(%arg0: i32, %arg1: memref<1x8x16xf32, #tpu.memory_space<vmem>>, %arg2: memref<1x8x16xf32, #tpu.memory_space<vmem>>, %arg3: memref<3x16x128xf32, #tpu.memory_space<vmem>>, %arg4: memref<1x128xf32, #tpu.memory_space<vmem>>, %arg5: memref<3x128x128xf32, #tpu.memory_space<vmem>>, %arg6: memref<1x128xf32, #tpu.memory_space<vmem>>, %arg7: memref<4x128x128xf32, #tpu.memory_space<vmem>>, %arg8: memref<1x128xf32, #tpu.memory_space<vmem>>, %arg9: memref<3x128x128xf32, #tpu.memory_space<vmem>>, %arg10: memref<1x128xf32, #tpu.memory_space<vmem>>, %arg11: memref<3x128x128xf32, #tpu.memory_space<vmem>>, %arg12: memref<1x128xf32, #tpu.memory_space<vmem>>, %arg13: memref<3x128x128xf32, #tpu.memory_space<vmem>>, %arg14: memref<128x128xf32, #tpu.memory_space<vmem>>, %arg15: memref<1x9x128xf32, #tpu.memory_space<vmem>>) attributes {dimension_semantics = [#tpu.dimension_semantics<parallel>], iteration_bounds = array<i64: 2>, scalar_prefetch = 0 : i64, scratch_operands = 0 : i64, tpu.core_type = #tpu.core_type<tc>, window_params = [{transform_indices = @transform_0, window_bounds = array<i64: 1, 8, 16>}, {transform_indices = @transform_1, window_bounds = array<i64: 1, 8, 16>}, {pipeline_mode = #tpu.pipeline_mode<synchronous>, transform_indices = @transform_2, window_bounds = array<i64: 3, 16, 128>}, {pipeline_mode = #tpu.pipeline_mode<synchronous>, transform_indices = @transform_3, window_bounds = array<i64: 1, 128>}, {pipeline_mode = #tpu.pipeline_mode<synchronous>, transform_indices = @transform_4, window_bounds = array<i64: 3, 128, 128>}, {pipeline_mode = #tpu.pipeline_mode<synchronous>, transform_indices = @transform_5, window_bounds = array<i64: 1, 128>}, {pipeline_mode = #tpu.pipeline_mode<synchronous>, transform_indices = @transform_6, window_bounds = array<i64: 4, 128, 128>}, {pipeline_mode = #tpu.pipeline_mode<synchronous>, transform_indices = @transform_7, window_bounds = array<i64: 1, 128>}, {pipeline_mode = #tpu.pipeline_mode<synchronous>, transform_indices = @transform_8, window_bounds = array<i64: 3, 128, 128>}, {pipeline_mode = #tpu.pipeline_mode<synchronous>, transform_indices = @transform_9, window_bounds = array<i64: 1, 128>}, {pipeline_mode = #tpu.pipeline_mode<synchronous>, transform_indices = @transform_10, window_bounds = array<i64: 3, 128, 128>}, {pipeline_mode = #tpu.pipeline_mode<synchronous>, transform_indices = @transform_11, window_bounds = array<i64: 1, 128>}, {pipeline_mode = #tpu.pipeline_mode<synchronous>, transform_indices = @transform_12, window_bounds = array<i64: 3, 128, 128>}, {pipeline_mode = #tpu.pipeline_mode<synchronous>, transform_indices = @transform_13, window_bounds = array<i64: 128, 128>}, {transform_indices = @transform_14, window_bounds = array<i64: 1, 9, 128>}]} {
    %c0 = arith.constant 0 : index
    %c0_0 = arith.constant 0 : index
    %c0_1 = arith.constant 0 : index
    %0 = vector.load %arg1[%c0, %c0_0, %c0_1] : memref<1x8x16xf32, #tpu.memory_space<vmem>>, vector<1x8x16xf32>
    %1 = vector.shape_cast %0 : vector<1x8x16xf32> to vector<8x16xf32>
    %c0_2 = arith.constant 0 : index
    %c0_3 = arith.constant 0 : index
    %c0_4 = arith.constant 0 : index
    %2 = vector.load %arg2[%c0_2, %c0_3, %c0_4] : memref<1x8x16xf32, #tpu.memory_space<vmem>>, vector<1x8x16xf32>
    %3 = vector.shape_cast %2 : vector<1x8x16xf32> to vector<8x16xf32>
    %c0_5 = arith.constant 0 : index
    %c0_6 = arith.constant 0 : index
    %c0_7 = arith.constant 0 : index
    %4 = vector.load %arg3[%c0_5, %c0_6, %c0_7] : memref<3x16x128xf32, #tpu.memory_space<vmem>>, vector<1x16x128xf32>
    %5 = vector.shape_cast %4 : vector<1x16x128xf32> to vector<16x128xf32>
    %c1 = arith.constant 1 : index
    %c0_8 = arith.constant 0 : index
    %c0_9 = arith.constant 0 : index
    %6 = vector.load %arg3[%c1, %c0_8, %c0_9] : memref<3x16x128xf32, #tpu.memory_space<vmem>>, vector<1x16x128xf32>
    %7 = vector.shape_cast %6 : vector<1x16x128xf32> to vector<16x128xf32>
    %c2 = arith.constant 2 : index
    %c0_10 = arith.constant 0 : index
    %c0_11 = arith.constant 0 : index
    %8 = vector.load %arg3[%c2, %c0_10, %c0_11] : memref<3x16x128xf32, #tpu.memory_space<vmem>>, vector<1x16x128xf32>
    %9 = vector.shape_cast %8 : vector<1x16x128xf32> to vector<16x128xf32>
    %cst = arith.constant 0.000000e+00 : f32
    %10 = vector.broadcast %cst : f32 to vector<1x16xf32>
    %11 = vector.extract_strided_slice %3 {offsets = [0, 0], sizes = [7, 16], strides = [1, 1]} : vector<8x16xf32> to vector<7x16xf32>
    %12 = tpu.concatenate %10, %11 in 0 : vector<1x16xf32>, vector<7x16xf32> -> vector<8x16xf32>
    %cst_12 = arith.constant dense<0.000000e+00> : vector<8x128xf32>
    %13 = tpu.matmul %12, %5, %cst_12 {dimension_numbers = #tpu.dot_dimension_numbers<[1], [0], [0], [1], [0, 0, 1, 1], [], []>} : vector<8x16xf32>, vector<16x128xf32>, vector<8x128xf32> -> vector<8x128xf32>
    %cst_13 = arith.constant dense<0.000000e+00> : vector<8x128xf32>
    %14 = tpu.matmul %1, %7, %cst_13 {dimension_numbers = #tpu.dot_dimension_numbers<[1], [0], [0], [1], [0, 0, 1, 1], [], []>} : vector<8x16xf32>, vector<16x128xf32>, vector<8x128xf32> -> vector<8x128xf32>
    %15 = arith.addf %13, %14 : vector<8x128xf32>
    %cst_14 = arith.constant dense<0.000000e+00> : vector<8x128xf32>
    %16 = tpu.matmul %3, %9, %cst_14 {dimension_numbers = #tpu.dot_dimension_numbers<[1], [0], [0], [1], [0, 0, 1, 1], [], []>} : vector<8x16xf32>, vector<16x128xf32>, vector<8x128xf32> -> vector<8x128xf32>
    %17 = arith.addf %15, %16 : vector<8x128xf32>
    %cst_15 = arith.constant dense<0.000000e+00> : vector<8x128xf32>
    %18 = tpu.matmul %1, %5, %cst_15 {dimension_numbers = #tpu.dot_dimension_numbers<[1], [0], [0], [1], [0, 0, 1, 1], [], []>} : vector<8x16xf32>, vector<16x128xf32>, vector<8x128xf32> -> vector<8x128xf32>
    %cst_16 = arith.constant dense<0.000000e+00> : vector<8x128xf32>
    %19 = tpu.matmul %3, %7, %cst_16 {dimension_numbers = #tpu.dot_dimension_numbers<[1], [0], [0], [1], [0, 0, 1, 1], [], []>} : vector<8x16xf32>, vector<16x128xf32>, vector<8x128xf32> -> vector<8x128xf32>
    %20 = arith.addf %18, %19 : vector<8x128xf32>
    %21 = vector.extract_strided_slice %1 {offsets = [1, 0], sizes = [7, 16], strides = [1, 1]} : vector<8x16xf32> to vector<7x16xf32>
    %cst_17 = arith.constant 0.000000e+00 : f32
    %22 = vector.broadcast %cst_17 : f32 to vector<1x16xf32>
    %23 = tpu.concatenate %21, %22 in 0 : vector<7x16xf32>, vector<1x16xf32> -> vector<8x16xf32>
    %cst_18 = arith.constant dense<0.000000e+00> : vector<8x128xf32>
    %24 = tpu.matmul %23, %9, %cst_18 {dimension_numbers = #tpu.dot_dimension_numbers<[1], [0], [0], [1], [0, 0, 1, 1], [], []>} : vector<8x16xf32>, vector<16x128xf32>, vector<8x128xf32> -> vector<8x128xf32>
    %25 = arith.addf %20, %24 : vector<8x128xf32>
    %c0_19 = arith.constant 0 : index
    %c0_20 = arith.constant 0 : index
    %26 = vector.load %arg4[%c0_19, %c0_20] : memref<1x128xf32, #tpu.memory_space<vmem>>, vector<1x128xf32>
    %27 = vector.broadcast %26 : vector<1x128xf32> to vector<8x128xf32>
    %28 = arith.addf %17, %27 : vector<8x128xf32>
    %cst_21 = arith.constant 0.000000e+00 : f32
    %29 = vector.broadcast %cst_21 : f32 to vector<8x128xf32>
    %30 = arith.maximumf %28, %29 : vector<8x128xf32>
    %31 = vector.broadcast %26 : vector<1x128xf32> to vector<8x128xf32>
    %32 = arith.addf %25, %31 : vector<8x128xf32>
    %cst_22 = arith.constant 0.000000e+00 : f32
    %33 = vector.broadcast %cst_22 : f32 to vector<8x128xf32>
    %34 = arith.maximumf %32, %33 : vector<8x128xf32>
    %c0_23 = arith.constant 0 : index
    %c0_24 = arith.constant 0 : index
    %c0_25 = arith.constant 0 : index
    %35 = vector.load %arg5[%c0_23, %c0_24, %c0_25] : memref<3x128x128xf32, #tpu.memory_space<vmem>>, vector<1x128x128xf32>
    %36 = vector.shape_cast %35 : vector<1x128x128xf32> to vector<128x128xf32>
    %c1_26 = arith.constant 1 : index
    %c0_27 = arith.constant 0 : index
    %c0_28 = arith.constant 0 : index
    %37 = vector.load %arg5[%c1_26, %c0_27, %c0_28] : memref<3x128x128xf32, #tpu.memory_space<vmem>>, vector<1x128x128xf32>
    %38 = vector.shape_cast %37 : vector<1x128x128xf32> to vector<128x128xf32>
    %c2_29 = arith.constant 2 : index
    %c0_30 = arith.constant 0 : index
    %c0_31 = arith.constant 0 : index
    %39 = vector.load %arg5[%c2_29, %c0_30, %c0_31] : memref<3x128x128xf32, #tpu.memory_space<vmem>>, vector<1x128x128xf32>
    %40 = vector.shape_cast %39 : vector<1x128x128xf32> to vector<128x128xf32>
    %cst_32 = arith.constant 0.000000e+00 : f32
    %41 = vector.broadcast %cst_32 : f32 to vector<1x128xf32>
    %42 = vector.extract_strided_slice %34 {offsets = [0, 0], sizes = [7, 128], strides = [1, 1]} : vector<8x128xf32> to vector<7x128xf32>
    %43 = tpu.concatenate %41, %42 in 0 : vector<1x128xf32>, vector<7x128xf32> -> vector<8x128xf32>
    %cst_33 = arith.constant dense<0.000000e+00> : vector<8x128xf32>
    %44 = tpu.matmul %43, %36, %cst_33 {dimension_numbers = #tpu.dot_dimension_numbers<[1], [0], [0], [1], [0, 0, 1, 1], [], []>} : vector<8x128xf32>, vector<128x128xf32>, vector<8x128xf32> -> vector<8x128xf32>
    %cst_34 = arith.constant dense<0.000000e+00> : vector<8x128xf32>
    %45 = tpu.matmul %30, %38, %cst_34 {dimension_numbers = #tpu.dot_dimension_numbers<[1], [0], [0], [1], [0, 0, 1, 1], [], []>} : vector<8x128xf32>, vector<128x128xf32>, vector<8x128xf32> -> vector<8x128xf32>
    %46 = arith.addf %44, %45 : vector<8x128xf32>
    %cst_35 = arith.constant dense<0.000000e+00> : vector<8x128xf32>
    %47 = tpu.matmul %34, %40, %cst_35 {dimension_numbers = #tpu.dot_dimension_numbers<[1], [0], [0], [1], [0, 0, 1, 1], [], []>} : vector<8x128xf32>, vector<128x128xf32>, vector<8x128xf32> -> vector<8x128xf32>
    %48 = arith.addf %46, %47 : vector<8x128xf32>
    %cst_36 = arith.constant dense<0.000000e+00> : vector<8x128xf32>
    %49 = tpu.matmul %30, %36, %cst_36 {dimension_numbers = #tpu.dot_dimension_numbers<[1], [0], [0], [1], [0, 0, 1, 1], [], []>} : vector<8x128xf32>, vector<128x128xf32>, vector<8x128xf32> -> vector<8x128xf32>
    %cst_37 = arith.constant dense<0.000000e+00> : vector<8x128xf32>
    %50 = tpu.matmul %34, %38, %cst_37 {dimension_numbers = #tpu.dot_dimension_numbers<[1], [0], [0], [1], [0, 0, 1, 1], [], []>} : vector<8x128xf32>, vector<128x128xf32>, vector<8x128xf32> -> vector<8x128xf32>
    %51 = arith.addf %49, %50 : vector<8x128xf32>
    %52 = vector.extract_strided_slice %30 {offsets = [1, 0], sizes = [7, 128], strides = [1, 1]} : vector<8x128xf32> to vector<7x128xf32>
    %cst_38 = arith.constant 0.000000e+00 : f32
    %53 = vector.broadcast %cst_38 : f32 to vector<1x128xf32>
    %54 = tpu.concatenate %52, %53 in 0 : vector<7x128xf32>, vector<1x128xf32> -> vector<8x128xf32>
    %cst_39 = arith.constant dense<0.000000e+00> : vector<8x128xf32>
    %55 = tpu.matmul %54, %40, %cst_39 {dimension_numbers = #tpu.dot_dimension_numbers<[1], [0], [0], [1], [0, 0, 1, 1], [], []>} : vector<8x128xf32>, vector<128x128xf32>, vector<8x128xf32> -> vector<8x128xf32>
    %56 = arith.addf %51, %55 : vector<8x128xf32>
    %c0_40 = arith.constant 0 : index
    %c0_41 = arith.constant 0 : index
    %57 = vector.load %arg6[%c0_40, %c0_41] : memref<1x128xf32, #tpu.memory_space<vmem>>, vector<1x128xf32>
    %58 = vector.broadcast %57 : vector<1x128xf32> to vector<8x128xf32>
    %59 = arith.addf %48, %58 : vector<8x128xf32>
    %cst_42 = arith.constant 0.000000e+00 : f32
    %60 = vector.broadcast %cst_42 : f32 to vector<8x128xf32>
    %61 = arith.maximumf %59, %60 : vector<8x128xf32>
    %62 = arith.addf %61, %30 : vector<8x128xf32>
    %63 = vector.broadcast %57 : vector<1x128xf32> to vector<8x128xf32>
    %64 = arith.addf %56, %63 : vector<8x128xf32>
    %cst_43 = arith.constant 0.000000e+00 : f32
    %65 = vector.broadcast %cst_43 : f32 to vector<8x128xf32>
    %66 = arith.maximumf %64, %65 : vector<8x128xf32>
    %67 = arith.addf %66, %34 : vector<8x128xf32>
    %cst_44 = arith.constant 0.000000e+00 : f32
    %68 = vector.broadcast %cst_44 : f32 to vector<1x128xf32>
    %69 = tpu.concatenate %68, %62 in 0 : vector<1x128xf32>, vector<8x128xf32> -> vector<9x128xf32>
    %c0_45 = arith.constant 0 : index
    %c0_46 = arith.constant 0 : index
    %c0_47 = arith.constant 0 : index
    %70 = vector.load %arg7[%c0_45, %c0_46, %c0_47] : memref<4x128x128xf32, #tpu.memory_space<vmem>>, vector<1x128x128xf32>
    %71 = vector.shape_cast %70 : vector<1x128x128xf32> to vector<128x128xf32>
    %cst_48 = arith.constant dense<0.000000e+00> : vector<9x128xf32>
    %72 = tpu.matmul %69, %71, %cst_48 {dimension_numbers = #tpu.dot_dimension_numbers<[1], [0], [0], [1], [0, 0, 1, 1], [], []>} : vector<9x128xf32>, vector<128x128xf32>, vector<9x128xf32> -> vector<9x128xf32>
    %cst_49 = arith.constant 0.000000e+00 : f32
    %73 = vector.broadcast %cst_49 : f32 to vector<1x128xf32>
    %74 = tpu.concatenate %73, %67 in 0 : vector<1x128xf32>, vector<8x128xf32> -> vector<9x128xf32>
    %c1_50 = arith.constant 1 : index
    %c0_51 = arith.constant 0 : index
    %c0_52 = arith.constant 0 : index
    %75 = vector.load %arg7[%c1_50, %c0_51, %c0_52] : memref<4x128x128xf32, #tpu.memory_space<vmem>>, vector<1x128x128xf32>
    %76 = vector.shape_cast %75 : vector<1x128x128xf32> to vector<128x128xf32>
    %cst_53 = arith.constant dense<0.000000e+00> : vector<9x128xf32>
    %77 = tpu.matmul %74, %76, %cst_53 {dimension_numbers = #tpu.dot_dimension_numbers<[1], [0], [0], [1], [0, 0, 1, 1], [], []>} : vector<9x128xf32>, vector<128x128xf32>, vector<9x128xf32> -> vector<9x128xf32>
    %78 = arith.addf %72, %77 : vector<9x128xf32>
    %cst_54 = arith.constant 0.000000e+00 : f32
    %79 = vector.broadcast %cst_54 : f32 to vector<1x128xf32>
    %80 = tpu.concatenate %62, %79 in 0 : vector<8x128xf32>, vector<1x128xf32> -> vector<9x128xf32>
    %c2_55 = arith.constant 2 : index
    %c0_56 = arith.constant 0 : index
    %c0_57 = arith.constant 0 : index
    %81 = vector.load %arg7[%c2_55, %c0_56, %c0_57] : memref<4x128x128xf32, #tpu.memory_space<vmem>>, vector<1x128x128xf32>
    %82 = vector.shape_cast %81 : vector<1x128x128xf32> to vector<128x128xf32>
    %cst_58 = arith.constant dense<0.000000e+00> : vector<9x128xf32>
    %83 = tpu.matmul %80, %82, %cst_58 {dimension_numbers = #tpu.dot_dimension_numbers<[1], [0], [0], [1], [0, 0, 1, 1], [], []>} : vector<9x128xf32>, vector<128x128xf32>, vector<9x128xf32> -> vector<9x128xf32>
    %84 = arith.addf %78, %83 : vector<9x128xf32>
    %cst_59 = arith.constant 0.000000e+00 : f32
    %85 = vector.broadcast %cst_59 : f32 to vector<1x128xf32>
    %86 = tpu.concatenate %67, %85 in 0 : vector<8x128xf32>, vector<1x128xf32> -> vector<9x128xf32>
    %c3 = arith.constant 3 : index
    %c0_60 = arith.constant 0 : index
    %c0_61 = arith.constant 0 : index
    %87 = vector.load %arg7[%c3, %c0_60, %c0_61] : memref<4x128x128xf32, #tpu.memory_space<vmem>>, vector<1x128x128xf32>
    %88 = vector.shape_cast %87 : vector<1x128x128xf32> to vector<128x128xf32>
    %cst_62 = arith.constant dense<0.000000e+00> : vector<9x128xf32>
    %89 = tpu.matmul %86, %88, %cst_62 {dimension_numbers = #tpu.dot_dimension_numbers<[1], [0], [0], [1], [0, 0, 1, 1], [], []>} : vector<9x128xf32>, vector<128x128xf32>, vector<9x128xf32> -> vector<9x128xf32>
    %90 = arith.addf %84, %89 : vector<9x128xf32>
    %c0_63 = arith.constant 0 : index
    %c0_64 = arith.constant 0 : index
    %91 = vector.load %arg8[%c0_63, %c0_64] : memref<1x128xf32, #tpu.memory_space<vmem>>, vector<1x128xf32>
    %92 = vector.broadcast %91 : vector<1x128xf32> to vector<9x128xf32>
    %93 = arith.addf %90, %92 : vector<9x128xf32>
    %cst_65 = arith.constant 0.000000e+00 : f32
    %94 = vector.broadcast %cst_65 : f32 to vector<9x128xf32>
    %95 = arith.maximumf %93, %94 : vector<9x128xf32>
    %cst_66 = arith.constant 0.000000e+00 : f32
    %96 = vector.broadcast %cst_66 : f32 to vector<1x128xf32>
    %97 = vector.extract_strided_slice %95 {offsets = [0, 0], sizes = [8, 128], strides = [1, 1]} : vector<9x128xf32> to vector<8x128xf32>
    %98 = tpu.concatenate %96, %97 in 0 : vector<1x128xf32>, vector<8x128xf32> -> vector<9x128xf32>
    %c0_67 = arith.constant 0 : index
    %c0_68 = arith.constant 0 : index
    %c0_69 = arith.constant 0 : index
    %99 = vector.load %arg9[%c0_67, %c0_68, %c0_69] : memref<3x128x128xf32, #tpu.memory_space<vmem>>, vector<1x128x128xf32>
    %100 = vector.shape_cast %99 : vector<1x128x128xf32> to vector<128x128xf32>
    %cst_70 = arith.constant dense<0.000000e+00> : vector<9x128xf32>
    %101 = tpu.matmul %98, %100, %cst_70 {dimension_numbers = #tpu.dot_dimension_numbers<[1], [0], [0], [1], [0, 0, 1, 1], [], []>} : vector<9x128xf32>, vector<128x128xf32>, vector<9x128xf32> -> vector<9x128xf32>
    %c1_71 = arith.constant 1 : index
    %c0_72 = arith.constant 0 : index
    %c0_73 = arith.constant 0 : index
    %102 = vector.load %arg9[%c1_71, %c0_72, %c0_73] : memref<3x128x128xf32, #tpu.memory_space<vmem>>, vector<1x128x128xf32>
    %103 = vector.shape_cast %102 : vector<1x128x128xf32> to vector<128x128xf32>
    %cst_74 = arith.constant dense<0.000000e+00> : vector<9x128xf32>
    %104 = tpu.matmul %95, %103, %cst_74 {dimension_numbers = #tpu.dot_dimension_numbers<[1], [0], [0], [1], [0, 0, 1, 1], [], []>} : vector<9x128xf32>, vector<128x128xf32>, vector<9x128xf32> -> vector<9x128xf32>
    %105 = arith.addf %101, %104 : vector<9x128xf32>
    %106 = vector.extract_strided_slice %95 {offsets = [1, 0], sizes = [8, 128], strides = [1, 1]} : vector<9x128xf32> to vector<8x128xf32>
    %cst_75 = arith.constant 0.000000e+00 : f32
    %107 = vector.broadcast %cst_75 : f32 to vector<1x128xf32>
    %108 = tpu.concatenate %106, %107 in 0 : vector<8x128xf32>, vector<1x128xf32> -> vector<9x128xf32>
    %c2_76 = arith.constant 2 : index
    %c0_77 = arith.constant 0 : index
    %c0_78 = arith.constant 0 : index
    %109 = vector.load %arg9[%c2_76, %c0_77, %c0_78] : memref<3x128x128xf32, #tpu.memory_space<vmem>>, vector<1x128x128xf32>
    %110 = vector.shape_cast %109 : vector<1x128x128xf32> to vector<128x128xf32>
    %cst_79 = arith.constant dense<0.000000e+00> : vector<9x128xf32>
    %111 = tpu.matmul %108, %110, %cst_79 {dimension_numbers = #tpu.dot_dimension_numbers<[1], [0], [0], [1], [0, 0, 1, 1], [], []>} : vector<9x128xf32>, vector<128x128xf32>, vector<9x128xf32> -> vector<9x128xf32>
    %112 = arith.addf %105, %111 : vector<9x128xf32>
    %c0_80 = arith.constant 0 : index
    %c0_81 = arith.constant 0 : index
    %113 = vector.load %arg10[%c0_80, %c0_81] : memref<1x128xf32, #tpu.memory_space<vmem>>, vector<1x128xf32>
    %114 = vector.broadcast %113 : vector<1x128xf32> to vector<9x128xf32>
    %115 = arith.addf %112, %114 : vector<9x128xf32>
    %cst_82 = arith.constant 0.000000e+00 : f32
    %116 = vector.broadcast %cst_82 : f32 to vector<9x128xf32>
    %117 = arith.maximumf %115, %116 : vector<9x128xf32>
    %118 = arith.addf %117, %95 : vector<9x128xf32>
    %cst_83 = arith.constant 0.000000e+00 : f32
    %119 = vector.broadcast %cst_83 : f32 to vector<1x128xf32>
    %120 = vector.extract_strided_slice %118 {offsets = [0, 0], sizes = [8, 128], strides = [1, 1]} : vector<9x128xf32> to vector<8x128xf32>
    %121 = tpu.concatenate %119, %120 in 0 : vector<1x128xf32>, vector<8x128xf32> -> vector<9x128xf32>
    %c0_84 = arith.constant 0 : index
    %c0_85 = arith.constant 0 : index
    %c0_86 = arith.constant 0 : index
    %122 = vector.load %arg11[%c0_84, %c0_85, %c0_86] : memref<3x128x128xf32, #tpu.memory_space<vmem>>, vector<1x128x128xf32>
    %123 = vector.shape_cast %122 : vector<1x128x128xf32> to vector<128x128xf32>
    %cst_87 = arith.constant dense<0.000000e+00> : vector<9x128xf32>
    %124 = tpu.matmul %121, %123, %cst_87 {dimension_numbers = #tpu.dot_dimension_numbers<[1], [0], [0], [1], [0, 0, 1, 1], [], []>} : vector<9x128xf32>, vector<128x128xf32>, vector<9x128xf32> -> vector<9x128xf32>
    %c1_88 = arith.constant 1 : index
    %c0_89 = arith.constant 0 : index
    %c0_90 = arith.constant 0 : index
    %125 = vector.load %arg11[%c1_88, %c0_89, %c0_90] : memref<3x128x128xf32, #tpu.memory_space<vmem>>, vector<1x128x128xf32>
    %126 = vector.shape_cast %125 : vector<1x128x128xf32> to vector<128x128xf32>
    %cst_91 = arith.constant dense<0.000000e+00> : vector<9x128xf32>
    %127 = tpu.matmul %118, %126, %cst_91 {dimension_numbers = #tpu.dot_dimension_numbers<[1], [0], [0], [1], [0, 0, 1, 1], [], []>} : vector<9x128xf32>, vector<128x128xf32>, vector<9x128xf32> -> vector<9x128xf32>
    %128 = arith.addf %124, %127 : vector<9x128xf32>
    %129 = vector.extract_strided_slice %118 {offsets = [1, 0], sizes = [8, 128], strides = [1, 1]} : vector<9x128xf32> to vector<8x128xf32>
    %cst_92 = arith.constant 0.000000e+00 : f32
    %130 = vector.broadcast %cst_92 : f32 to vector<1x128xf32>
    %131 = tpu.concatenate %129, %130 in 0 : vector<8x128xf32>, vector<1x128xf32> -> vector<9x128xf32>
    %c2_93 = arith.constant 2 : index
    %c0_94 = arith.constant 0 : index
    %c0_95 = arith.constant 0 : index
    %132 = vector.load %arg11[%c2_93, %c0_94, %c0_95] : memref<3x128x128xf32, #tpu.memory_space<vmem>>, vector<1x128x128xf32>
    %133 = vector.shape_cast %132 : vector<1x128x128xf32> to vector<128x128xf32>
    %cst_96 = arith.constant dense<0.000000e+00> : vector<9x128xf32>
    %134 = tpu.matmul %131, %133, %cst_96 {dimension_numbers = #tpu.dot_dimension_numbers<[1], [0], [0], [1], [0, 0, 1, 1], [], []>} : vector<9x128xf32>, vector<128x128xf32>, vector<9x128xf32> -> vector<9x128xf32>
    %135 = arith.addf %128, %134 : vector<9x128xf32>
    %c0_97 = arith.constant 0 : index
    %c0_98 = arith.constant 0 : index
    %136 = vector.load %arg12[%c0_97, %c0_98] : memref<1x128xf32, #tpu.memory_space<vmem>>, vector<1x128xf32>
    %137 = vector.broadcast %136 : vector<1x128xf32> to vector<9x128xf32>
    %138 = arith.addf %135, %137 : vector<9x128xf32>
    %cst_99 = arith.constant 0.000000e+00 : f32
    %139 = vector.broadcast %cst_99 : f32 to vector<9x128xf32>
    %140 = arith.maximumf %138, %139 : vector<9x128xf32>
    %141 = arith.addf %140, %118 : vector<9x128xf32>
    %c0_100 = arith.constant 0 : index
    %c0_101 = arith.constant 0 : index
    %142 = vector.load %arg14[%c0_100, %c0_101] : memref<128x128xf32, #tpu.memory_space<vmem>>, vector<128x128xf32>
    %c0_i32 = arith.constant 0 : i32
    %cst_102 = arith.constant 0.000000e+00 : f32
    %143 = vector.broadcast %cst_102 : f32 to vector<9x128xf32>
    %144 = arith.maximumf %141, %143 : vector<9x128xf32>
    %cst_103 = arith.constant 0.000000e+00 : f32
    %145 = vector.broadcast %cst_103 : f32 to vector<1x128xf32>
    %146 = vector.extract_strided_slice %144 {offsets = [0, 0], sizes = [8, 128], strides = [1, 1]} : vector<9x128xf32> to vector<8x128xf32>
    %147 = tpu.concatenate %145, %146 in 0 : vector<1x128xf32>, vector<8x128xf32> -> vector<9x128xf32>
    %c0_104 = arith.constant 0 : index
    %c0_105 = arith.constant 0 : index
    %c0_106 = arith.constant 0 : index
    %148 = vector.load %arg13[%c0_104, %c0_105, %c0_106] : memref<3x128x128xf32, #tpu.memory_space<vmem>>, vector<1x128x128xf32>
    %149 = vector.shape_cast %148 : vector<1x128x128xf32> to vector<128x128xf32>
    %cst_107 = arith.constant dense<0.000000e+00> : vector<9x128xf32>
    %150 = tpu.matmul %147, %149, %cst_107 {dimension_numbers = #tpu.dot_dimension_numbers<[1], [0], [0], [1], [0, 0, 1, 1], [], []>} : vector<9x128xf32>, vector<128x128xf32>, vector<9x128xf32> -> vector<9x128xf32>
    %c1_108 = arith.constant 1 : index
    %c0_109 = arith.constant 0 : index
    %c0_110 = arith.constant 0 : index
    %151 = vector.load %arg13[%c1_108, %c0_109, %c0_110] : memref<3x128x128xf32, #tpu.memory_space<vmem>>, vector<1x128x128xf32>
    %152 = vector.shape_cast %151 : vector<1x128x128xf32> to vector<128x128xf32>
    %cst_111 = arith.constant dense<0.000000e+00> : vector<9x128xf32>
    %153 = tpu.matmul %144, %152, %cst_111 {dimension_numbers = #tpu.dot_dimension_numbers<[1], [0], [0], [1], [0, 0, 1, 1], [], []>} : vector<9x128xf32>, vector<128x128xf32>, vector<9x128xf32> -> vector<9x128xf32>
    %154 = arith.addf %150, %153 : vector<9x128xf32>
    %155 = vector.extract_strided_slice %144 {offsets = [1, 0], sizes = [8, 128], strides = [1, 1]} : vector<9x128xf32> to vector<8x128xf32>
    %cst_112 = arith.constant 0.000000e+00 : f32
    %156 = vector.broadcast %cst_112 : f32 to vector<1x128xf32>
    %157 = tpu.concatenate %155, %156 in 0 : vector<8x128xf32>, vector<1x128xf32> -> vector<9x128xf32>
    %c2_113 = arith.constant 2 : index
    %c0_114 = arith.constant 0 : index
    %c0_115 = arith.constant 0 : index
    %158 = vector.load %arg13[%c2_113, %c0_114, %c0_115] : memref<3x128x128xf32, #tpu.memory_space<vmem>>, vector<1x128x128xf32>
    %159 = vector.shape_cast %158 : vector<1x128x128xf32> to vector<128x128xf32>
    %cst_116 = arith.constant dense<0.000000e+00> : vector<9x128xf32>
    %160 = tpu.matmul %157, %159, %cst_116 {dimension_numbers = #tpu.dot_dimension_numbers<[1], [0], [0], [1], [0, 0, 1, 1], [], []>} : vector<9x128xf32>, vector<128x128xf32>, vector<9x128xf32> -> vector<9x128xf32>
    %161 = arith.addf %154, %160 : vector<9x128xf32>
    %cst_117 = arith.constant 0.000000e+00 : f32
    %162 = vector.broadcast %cst_117 : f32 to vector<9x128xf32>
    %163 = arith.maximumf %161, %162 : vector<9x128xf32>
    %cst_118 = arith.constant dense<0.000000e+00> : vector<9x128xf32>
    %164 = tpu.matmul %163, %142, %cst_118 {dimension_numbers = #tpu.dot_dimension_numbers<[1], [0], [0], [1], [0, 0, 1, 1], [], []>} : vector<9x128xf32>, vector<128x128xf32>, vector<9x128xf32> -> vector<9x128xf32>
    %165 = arith.addf %141, %164 : vector<9x128xf32>
    %c1_i32 = arith.constant 1 : i32
    %cst_119 = arith.constant 0.000000e+00 : f32
    %166 = vector.broadcast %cst_119 : f32 to vector<9x128xf32>
    %167 = arith.maximumf %165, %166 : vector<9x128xf32>
    %cst_120 = arith.constant 0.000000e+00 : f32
    %168 = vector.broadcast %cst_120 : f32 to vector<1x128xf32>
    %169 = vector.extract_strided_slice %167 {offsets = [0, 0], sizes = [8, 128], strides = [1, 1]} : vector<9x128xf32> to vector<8x128xf32>
    %170 = tpu.concatenate %168, %169 in 0 : vector<1x128xf32>, vector<8x128xf32> -> vector<9x128xf32>
    %c0_121 = arith.constant 0 : index
    %c0_122 = arith.constant 0 : index
    %c0_123 = arith.constant 0 : index
    %171 = vector.load %arg13[%c0_121, %c0_122, %c0_123] : memref<3x128x128xf32, #tpu.memory_space<vmem>>, vector<1x128x128xf32>
    %172 = vector.shape_cast %171 : vector<1x128x128xf32> to vector<128x128xf32>
    %cst_124 = arith.constant dense<0.000000e+00> : vector<9x128xf32>
    %173 = tpu.matmul %170, %172, %cst_124 {dimension_numbers = #tpu.dot_dimension_numbers<[1], [0], [0], [1], [0, 0, 1, 1], [], []>} : vector<9x128xf32>, vector<128x128xf32>, vector<9x128xf32> -> vector<9x128xf32>
    %c1_125 = arith.constant 1 : index
    %c0_126 = arith.constant 0 : index
    %c0_127 = arith.constant 0 : index
    %174 = vector.load %arg13[%c1_125, %c0_126, %c0_127] : memref<3x128x128xf32, #tpu.memory_space<vmem>>, vector<1x128x128xf32>
    %175 = vector.shape_cast %174 : vector<1x128x128xf32> to vector<128x128xf32>
    %cst_128 = arith.constant dense<0.000000e+00> : vector<9x128xf32>
    %176 = tpu.matmul %167, %175, %cst_128 {dimension_numbers = #tpu.dot_dimension_numbers<[1], [0], [0], [1], [0, 0, 1, 1], [], []>} : vector<9x128xf32>, vector<128x128xf32>, vector<9x128xf32> -> vector<9x128xf32>
    %177 = arith.addf %173, %176 : vector<9x128xf32>
    %178 = vector.extract_strided_slice %167 {offsets = [1, 0], sizes = [8, 128], strides = [1, 1]} : vector<9x128xf32> to vector<8x128xf32>
    %cst_129 = arith.constant 0.000000e+00 : f32
    %179 = vector.broadcast %cst_129 : f32 to vector<1x128xf32>
    %180 = tpu.concatenate %178, %179 in 0 : vector<8x128xf32>, vector<1x128xf32> -> vector<9x128xf32>
    %c2_130 = arith.constant 2 : index
    %c0_131 = arith.constant 0 : index
    %c0_132 = arith.constant 0 : index
    %181 = vector.load %arg13[%c2_130, %c0_131, %c0_132] : memref<3x128x128xf32, #tpu.memory_space<vmem>>, vector<1x128x128xf32>
    %182 = vector.shape_cast %181 : vector<1x128x128xf32> to vector<128x128xf32>
    %cst_133 = arith.constant dense<0.000000e+00> : vector<9x128xf32>
    %183 = tpu.matmul %180, %182, %cst_133 {dimension_numbers = #tpu.dot_dimension_numbers<[1], [0], [0], [1], [0, 0, 1, 1], [], []>} : vector<9x128xf32>, vector<128x128xf32>, vector<9x128xf32> -> vector<9x128xf32>
    %184 = arith.addf %177, %183 : vector<9x128xf32>
    %cst_134 = arith.constant 0.000000e+00 : f32
    %185 = vector.broadcast %cst_134 : f32 to vector<9x128xf32>
    %186 = arith.maximumf %184, %185 : vector<9x128xf32>
    %cst_135 = arith.constant dense<0.000000e+00> : vector<9x128xf32>
    %187 = tpu.matmul %186, %142, %cst_135 {dimension_numbers = #tpu.dot_dimension_numbers<[1], [0], [0], [1], [0, 0, 1, 1], [], []>} : vector<9x128xf32>, vector<128x128xf32>, vector<9x128xf32> -> vector<9x128xf32>
    %188 = arith.addf %165, %187 : vector<9x128xf32>
    %cst_136 = arith.constant 0.000000e+00 : f32
    %189 = vector.broadcast %cst_136 : f32 to vector<9x128xf32>
    %190 = arith.maximumf %188, %189 : vector<9x128xf32>
    %191 = arith.addf %190, %141 : vector<9x128xf32>
    %c0_137 = arith.constant 0 : index
    %c0_138 = arith.constant 0 : index
    %c0_139 = arith.constant 0 : index
    %192 = vector.load %arg15[%c0_137, %c0_138, %c0_139] : memref<1x9x128xf32, #tpu.memory_space<vmem>>, vector<1x9x128xf32>
    %193 = vector.shape_cast %192 : vector<1x9x128xf32> to vector<9x128xf32>
    %194 = vector.shape_cast %191 : vector<9x128xf32> to vector<1x9x128xf32>
    tpu.vector_store %arg15[%c0_137, %c0_138, %c0_139], %194 {strides = array<i32>} : memref<1x9x128xf32, #tpu.memory_space<vmem>>, vector<1x9x128xf32>,
    return
  }
  func.func @transform_0(%arg0: i32) -> (i32, i32, i32) {
    %c0_i32 = arith.constant 0 : i32
    %c0_i32_0 = arith.constant 0 : i32
    %c0_i32_1 = arith.constant 0 : i32
    return %arg0, %c0_i32, %c0_i32_0 : i32, i32, i32
  }
  func.func @transform_1(%arg0: i32) -> (i32, i32, i32) {
    %c0_i32 = arith.constant 0 : i32
    %c0_i32_0 = arith.constant 0 : i32
    %c0_i32_1 = arith.constant 0 : i32
    return %arg0, %c0_i32, %c0_i32_0 : i32, i32, i32
  }
  func.func @transform_2(%arg0: i32) -> (i32, i32, i32) {
    %c0_i32 = arith.constant 0 : i32
    %c0_i32_0 = arith.constant 0 : i32
    %c0_i32_1 = arith.constant 0 : i32
    %c0_i32_2 = arith.constant 0 : i32
    return %c0_i32, %c0_i32_0, %c0_i32_1 : i32, i32, i32
  }
  func.func @transform_3(%arg0: i32) -> (i32, i32) {
    %c0_i32 = arith.constant 0 : i32
    %c0_i32_0 = arith.constant 0 : i32
    %c0_i32_1 = arith.constant 0 : i32
    return %c0_i32, %c0_i32_0 : i32, i32
  }
  func.func @transform_4(%arg0: i32) -> (i32, i32, i32) {
    %c0_i32 = arith.constant 0 : i32
    %c0_i32_0 = arith.constant 0 : i32
    %c0_i32_1 = arith.constant 0 : i32
    %c0_i32_2 = arith.constant 0 : i32
    return %c0_i32, %c0_i32_0, %c0_i32_1 : i32, i32, i32
  }
  func.func @transform_5(%arg0: i32) -> (i32, i32) {
    %c0_i32 = arith.constant 0 : i32
    %c0_i32_0 = arith.constant 0 : i32
    %c0_i32_1 = arith.constant 0 : i32
    return %c0_i32, %c0_i32_0 : i32, i32
  }
  func.func @transform_6(%arg0: i32) -> (i32, i32, i32) {
    %c0_i32 = arith.constant 0 : i32
    %c0_i32_0 = arith.constant 0 : i32
    %c0_i32_1 = arith.constant 0 : i32
    %c0_i32_2 = arith.constant 0 : i32
    return %c0_i32, %c0_i32_0, %c0_i32_1 : i32, i32, i32
  }
  func.func @transform_7(%arg0: i32) -> (i32, i32) {
    %c0_i32 = arith.constant 0 : i32
    %c0_i32_0 = arith.constant 0 : i32
    %c0_i32_1 = arith.constant 0 : i32
    return %c0_i32, %c0_i32_0 : i32, i32
  }
  func.func @transform_8(%arg0: i32) -> (i32, i32, i32) {
    %c0_i32 = arith.constant 0 : i32
    %c0_i32_0 = arith.constant 0 : i32
    %c0_i32_1 = arith.constant 0 : i32
    %c0_i32_2 = arith.constant 0 : i32
    return %c0_i32, %c0_i32_0, %c0_i32_1 : i32, i32, i32
  }
  func.func @transform_9(%arg0: i32) -> (i32, i32) {
    %c0_i32 = arith.constant 0 : i32
    %c0_i32_0 = arith.constant 0 : i32
    %c0_i32_1 = arith.constant 0 : i32
    return %c0_i32, %c0_i32_0 : i32, i32
  }
  func.func @transform_10(%arg0: i32) -> (i32, i32, i32) {
    %c0_i32 = arith.constant 0 : i32
    %c0_i32_0 = arith.constant 0 : i32
    %c0_i32_1 = arith.constant 0 : i32
    %c0_i32_2 = arith.constant 0 : i32
    return %c0_i32, %c0_i32_0, %c0_i32_1 : i32, i32, i32
  }
  func.func @transform_11(%arg0: i32) -> (i32, i32) {
    %c0_i32 = arith.constant 0 : i32
    %c0_i32_0 = arith.constant 0 : i32
    %c0_i32_1 = arith.constant 0 : i32
    return %c0_i32, %c0_i32_0 : i32, i32
  }
  func.func @transform_12(%arg0: i32) -> (i32, i32, i32) {
    %c0_i32 = arith.constant 0 : i32
    %c0_i32_0 = arith.constant 0 : i32
    %c0_i32_1 = arith.constant 0 : i32
    %c0_i32_2 = arith.constant 0 : i32
    return %c0_i32, %c0_i32_0, %c0_i32_1 : i32, i32, i32
  }
  func.func @transform_13(%arg0: i32) -> (i32, i32) {
    %c0_i32 = arith.constant 0 : i32
    %c0_i32_0 = arith.constant 0 : i32
    %c0_i32_1 = arith.constant 0 : i32
    return %c0_i32, %c0_i32_0 : i32, i32
  }
  func.func @transform_14(%arg0: i32) -> (i32, i32, i32) {
    %c0_i32 = arith.constant 0 : i32
    %c0_i32_0 = arith.constant 0 : i32
    %c0_i32_1 = arith.constant 0 : i32
    return %arg0, %c0_i32, %c0_i32_0 : i32, i32, i32
  }
}

</mosaic_0001>

<llo_original>
// kernel: _jitted_forward.1
$region0: #{_jitted_forward.1}
  #allocation0 [shape = 'u32[]', space=smem, size = 0x4, offset = 0x4, fixed_abs, tag = 'smem constant byte address 0x4 - core index']
  #allocation1 [shape = 'u32[144,128]{1,0:T(1,128)}', space=vmem, size = 0x12000, scoped, tag = 'internal scratch']
  %s0 = inlined_call_operand.vmem [shape: f32[2,8,16], index: 0, kind: input, shape index: {}]
  %s1 = inlined_call_operand.vmem [shape: f32[2,8,16], index: 1, kind: input, shape index: {}]
  %s2 = inlined_call_operand.vmem [shape: f32[3,16,128], index: 2, kind: input, shape index: {}]
  %s3 = inlined_call_operand.vmem [shape: f32[1,128], index: 3, kind: input, shape index: {}]
  %s4 = inlined_call_operand.vmem [shape: f32[3,128,128], index: 4, kind: input, shape index: {}]
  %s5 = inlined_call_operand.vmem [shape: f32[1,128], index: 5, kind: input, shape index: {}]
  %s6 = inlined_call_operand.vmem [shape: f32[4,128,128], index: 6, kind: input, shape index: {}]
  %s7 = inlined_call_operand.vmem [shape: f32[1,128], index: 7, kind: input, shape index: {}]
  %s8 = inlined_call_operand.vmem [shape: f32[3,128,128], index: 8, kind: input, shape index: {}]
  %s9 = inlined_call_operand.vmem [shape: f32[1,128], index: 9, kind: input, shape index: {}]
  %s10 = inlined_call_operand.vmem [shape: f32[3,128,128], index: 10, kind: input, shape index: {}]
  %s11 = inlined_call_operand.vmem [shape: f32[1,128], index: 11, kind: input, shape index: {}]
  %s12 = inlined_call_operand.vmem [shape: f32[3,128,128], index: 12, kind: input, shape index: {}]
  %s13 = inlined_call_operand.vmem [shape: f32[128,128], index: 13, kind: input, shape index: {}]
  %s14 = inlined_call_operand.vmem [shape: f32[2,9,128], index: 14, kind: output, shape index: {}]
  %s15 = sld [smem:[#allocation0]]
  $region89: #{_jitted_forward.1} parent=0
    _
  %s17 = ssub.s32 1, %s15
  %s18 = scalar_select 0, %s17, %s15
  loop: start=0, step=1, limit=4
  $region2: #{_jitted_forward.1} parent=0 // loop_pre_header
    _
  $region3: #{_jitted_forward.1} parent=0 // loop_header
    %s20 = sphi 0, %s24
    %p21 = scmp.ge.s32.totalorder %s20, 4
    %s30 = sphi 0, %s32
    %s33 = sphi 0, %s30
    %s34 = sphi 0, %s33
    %s50 = sphi 0, %s34
    %s56 = sphi 0, %s58
    %s59 = sphi 0, %s56
    %s60 = sphi 0, %s59
    %s76 = sphi 0, %s60
    %s80 = sphi 0, %s80
    %s82 = sphi 0, %s80
    %s83 = sphi 0, %s82
    %s97 = sphi 0, %s83
    %s101 = sphi 0, %s101
    %s103 = sphi 0, %s101
    %s104 = sphi 0, %s103
    %s118 = sphi 0, %s104
    %s122 = sphi 0, %s122
    %s124 = sphi 0, %s122
    %s125 = sphi 0, %s124
    %s139 = sphi 0, %s125
    %s143 = sphi 0, %s143
    %s145 = sphi 0, %s143
    %s146 = sphi 0, %s145
    %s160 = sphi 0, %s146
    %s164 = sphi 0, %s164
    %s166 = sphi 0, %s164
    %s167 = sphi 0, %s166
    %s181 = sphi 0, %s167
    %s185 = sphi 0, %s185
    %s187 = sphi 0, %s185
    %s188 = sphi 0, %s187
    %s202 = sphi 0, %s188
    %s206 = sphi 0, %s206
    %s208 = sphi 0, %s206
    %s209 = sphi 0, %s208
    %s223 = sphi 0, %s209
    %s227 = sphi 0, %s227
    %s229 = sphi 0, %s227
    %s230 = sphi 0, %s229
    %s244 = sphi 0, %s230
    %s248 = sphi 0, %s248
    %s250 = sphi 0, %s248
    %s251 = sphi 0, %s250
    %s265 = sphi 0, %s251
    %s269 = sphi 0, %s269
    %s271 = sphi 0, %s269
    %s272 = sphi 0, %s271
    %s286 = sphi 0, %s272
    %s290 = sphi 0, %s290
    %s292 = sphi 0, %s290
    %s293 = sphi 0, %s292
    %s307 = sphi 0, %s293
    %s311 = sphi 0, %s311
    %s313 = sphi 0, %s311
    %s314 = sphi 0, %s313
    %s328 = sphi 0, %s314
    %s334 = sphi 0, %s336
    %s337 = sphi 0, %s334
    %s338 = sphi 0, %s337
    %s354 = sphi 0, %s338
  $region4: #{_jitted_forward.1} parent=0 // loop_header_branch
    %23 = sbr.rel (%p21) target = $region8
  $region5: #{_jitted_forward.1} parent=0 // loop_body
    %s25 = ssub.s32 %s20, 1
    %s26 = ssub.s32 %s20, 2
    %s27 = sadd.s32 %s20, 1
    %s28 = ssub.s32 %s20, %s27
    %p29 = scmp.eq.s32.totalorder %s28, 0
    %s31 = sadd.s32 %s30, 1
    %s32 = scalar_select %p29, %s30, %s31
    %p35 = pneg %p29
    %p36 = scmp.eq.s32.totalorder %s20, 1
    %p37 = por %p35, %p36
    %p38 = scmp.ne.s32.totalorder %s30, %s33
    %p39 = scmp.eq.s32.totalorder %s20, 0
    %p40 = por %p38, %p39
    %p41 = scmp.ne.s32.totalorder %s30, %s33
    %p42 = scmp.eq.s32.totalorder %s25, 1
    %p43 = por %p41, %p42
    %p44 = scmp.ne.s32.totalorder %s33, %s34
    %p45 = scmp.eq.s32.totalorder %s25, 0
    %p46 = por %p44, %p45
    %p47 = scmp.ne.s32.totalorder %s33, %s34
    %p48 = scmp.eq.s32.totalorder %s26, 1
    %p49 = por %p47, %p48
    %p51 = scmp.ne.s32.totalorder %s34, %s50
    %p52 = scmp.eq.s32.totalorder %s26, 0
    %p53 = por %p51, %p52
    %s54 = ssub.s32 %s20, %s27
    %p55 = scmp.eq.s32.totalorder %s54, 0
    %s57 = sadd.s32 %s56, 1
    %s58 = scalar_select %p55, %s56, %s57
    %p61 = pneg %p55
    %p62 = scmp.eq.s32.totalorder %s20, 1
    %p63 = por %p61, %p62
    %p64 = scmp.ne.s32.totalorder %s56, %s59
    %p65 = scmp.eq.s32.totalorder %s20, 0
    %p66 = por %p64, %p65
    %p67 = scmp.ne.s32.totalorder %s56, %s59
    %p68 = scmp.eq.s32.totalorder %s25, 1
    %p69 = por %p67, %p68
    %p70 = scmp.ne.s32.totalorder %s59, %s60
    %p71 = scmp.eq.s32.totalorder %s25, 0
    %p72 = por %p70, %p71
    %p73 = scmp.ne.s32.totalorder %s59, %s60
    %p74 = scmp.eq.s32.totalorder %s26, 1
    %p75 = por %p73, %p74
    %p77 = scmp.ne.s32.totalorder %s60, %s76
    %p78 = scmp.eq.s32.totalorder %s26, 0
    %p79 = por %p77, %p78
    %s81 = sadd.s32 %s80, 1
    %p84 = scmp.eq.s32.totalorder %s20, 1
    %p85 = scmp.ne.s32.totalorder %s80, %s82
    %p86 = scmp.eq.s32.totalorder %s20, 0
    %p87 = por %p85, %p86
    %p88 = scmp.ne.s32.totalorder %s80, %s82
    %p89 = scmp.eq.s32.totalorder %s25, 1
    %p90 = por %p88, %p89
    %p91 = scmp.ne.s32.totalorder %s82, %s83
    %p92 = scmp.eq.s32.totalorder %s25, 0
    %p93 = por %p91, %p92
    %p94 = scmp.ne.s32.totalorder %s82, %s83
    %p95 = scmp.eq.s32.totalorder %s26, 1
    %p96 = por %p94, %p95
    %p98 = scmp.ne.s32.totalorder %s83, %s97
    %p99 = scmp.eq.s32.totalorder %s26, 0
    %p100 = por %p98, %p99
    %s102 = sadd.s32 %s101, 1
    %p105 = scmp.eq.s32.totalorder %s20, 1
    %p106 = scmp.ne.s32.totalorder %s101, %s103
    %p107 = scmp.eq.s32.totalorder %s20, 0
    %p108 = por %p106, %p107
    %p109 = scmp.ne.s32.totalorder %s101, %s103
    %p110 = scmp.eq.s32.totalorder %s25, 1
    %p111 = por %p109, %p110
    %p112 = scmp.ne.s32.totalorder %s103, %s104
    %p113 = scmp.eq.s32.totalorder %s25, 0
    %p114 = por %p112, %p113
    %p115 = scmp.ne.s32.totalorder %s103, %s104
    %p116 = scmp.eq.s32.totalorder %s26, 1
    %p117 = por %p115, %p116
    %p119 = scmp.ne.s32.totalorder %s104, %s118
    %p120 = scmp.eq.s32.totalorder %s26, 0
    %p121 = por %p119, %p120
    %s123 = sadd.s32 %s122, 1
    %p126 = scmp.eq.s32.totalorder %s20, 1
    %p127 = scmp.ne.s32.totalorder %s122, %s124
    %p128 = scmp.eq.s32.totalorder %s20, 0
    %p129 = por %p127, %p128
    %p130 = scmp.ne.s32.totalorder %s122, %s124
    %p131 = scmp.eq.s32.totalorder %s25, 1
    %p132 = por %p130, %p131
    %p133 = scmp.ne.s32.totalorder %s124, %s125
    %p134 = scmp.eq.s32.totalorder %s25, 0
    %p135 = por %p133, %p134
    %p136 = scmp.ne.s32.totalorder %s124, %s125
    %p137 = scmp.eq.s32.totalorder %s26, 1
    %p138 = por %p136, %p137
    %p140 = scmp.ne.s32.totalorder %s125, %s139
    %p141 = scmp.eq.s32.totalorder %s26, 0
    %p142 = por %p140, %p141
    %s144 = sadd.s32 %s143, 1
    %p147 = scmp.eq.s32.totalorder %s20, 1
    %p148 = scmp.ne.s32.totalorder %s143, %s145
    %p149 = scmp.eq.s32.totalorder %s20, 0
    %p150 = por %p148, %p149
    %p151 = scmp.ne.s32.totalorder %s143, %s145
    %p152 = scmp.eq.s32.totalorder %s25, 1
    %p153 = por %p151, %p152
    %p154 = scmp.ne.s32.totalorder %s145, %s146
    %p155 = scmp.eq.s32.totalorder %s25, 0
    %p156 = por %p154, %p155
    %p157 = scmp.ne.s32.totalorder %s145, %s146
    %p158 = scmp.eq.s32.totalorder %s26, 1
    %p159 = por %p157, %p158
    %p161 = scmp.ne.s32.totalorder %s146, %s160
    %p162 = scmp.eq.s32.totalorder %s26, 0
    %p163 = por %p161, %p162
    %s165 = sadd.s32 %s164, 1
    %p168 = scmp.eq.s32.totalorder %s20, 1
    %p169 = scmp.ne.s32.totalorder %s164, %s166
    %p170 = scmp.eq.s32.totalorder %s20, 0
    %p171 = por %p169, %p170
    %p172 = scmp.ne.s32.totalorder %s164, %s166
    %p173 = scmp.eq.s32.totalorder %s25, 1
    %p174 = por %p172, %p173
    %p175 = scmp.ne.s32.totalorder %s166, %s167
    %p176 = scmp.eq.s32.totalorder %s25, 0
    %p177 = por %p175, %p176
    %p178 = scmp.ne.s32.totalorder %s166, %s167
    %p179 = scmp.eq.s32.totalorder %s26, 1
    %p180 = por %p178, %p179
    %p182 = scmp.ne.s32.totalorder %s167, %s181
    %p183 = scmp.eq.s32.totalorder %s26, 0
    %p184 = por %p182, %p183
    %s186 = sadd.s32 %s185, 1
    %p189 = scmp.eq.s32.totalorder %s20, 1
    %p190 = scmp.ne.s32.totalorder %s185, %s187
    %p191 = scmp.eq.s32.totalorder %s20, 0
    %p192 = por %p190, %p191
    %p193 = scmp.ne.s32.totalorder %s185, %s187
    %p194 = scmp.eq.s32.totalorder %s25, 1
    %p195 = por %p193, %p194
    %p196 = scmp.ne.s32.totalorder %s187, %s188
    %p197 = scmp.eq.s32.totalorder %s25, 0
    %p198 = por %p196, %p197
    %p199 = scmp.ne.s32.totalorder %s187, %s188
    %p200 = scmp.eq.s32.totalorder %s26, 1
    %p201 = por %p199, %p200
    %p203 = scmp.ne.s32.totalorder %s188, %s202
    %p204 = scmp.eq.s32.totalorder %s26, 0
    %p205 = por %p203, %p204
    %s207 = sadd.s32 %s206, 1
    %p210 = scmp.eq.s32.totalorder %s20, 1
    %p211 = scmp.ne.s32.totalorder %s206, %s208
    %p212 = scmp.eq.s32.totalorder %s20, 0
    %p213 = por %p211, %p212
    %p214 = scmp.ne.s32.totalorder %s206, %s208
    %p215 = scmp.eq.s32.totalorder %s25, 1
    %p216 = por %p214, %p215
    %p217 = scmp.ne.s32.totalorder %s208, %s209
    %p218 = scmp.eq.s32.totalorder %s25, 0
    %p219 = por %p217, %p218
    %p220 = scmp.ne.s32.totalorder %s208, %s209
    %p221 = scmp.eq.s32.totalorder %s26, 1
    %p222 = por %p220, %p221
    %p224 = scmp.ne.s32.totalorder %s209, %s223
    %p225 = scmp.eq.s32.totalorder %s26, 0
    %p226 = por %p224, %p225
    %s228 = sadd.s32 %s227, 1
    %p231 = scmp.eq.s32.totalorder %s20, 1
    %p232 = scmp.ne.s32.totalorder %s227, %s229
    %p233 = scmp.eq.s32.totalorder %s20, 0
    %p234 = por %p232, %p233
    %p235 = scmp.ne.s32.totalorder %s227, %s229
    %p236 = scmp.eq.s32.totalorder %s25, 1
    %p237 = por %p235, %p236
    %p238 = scmp.ne.s32.totalorder %s229, %s230
    %p239 = scmp.eq.s32.totalorder %s25, 0
    %p240 = por %p238, %p239
    %p241 = scmp.ne.s32.totalorder %s229, %s230
    %p242 = scmp.eq.s32.totalorder %s26, 1
    %p243 = por %p241, %p242
    %p245 = scmp.ne.s32.totalorder %s230, %s244
    %p246 = scmp.eq.s32.totalorder %s26, 0
    %p247 = por %p245, %p246
    %s249 = sadd.s32 %s248, 1
    %p252 = scmp.eq.s32.totalorder %s20, 1
    %p253 = scmp.ne.s32.totalorder %s248, %s250
    %p254 = scmp.eq.s32.totalorder %s20, 0
    %p255 = por %p253, %p254
    %p256 = scmp.ne.s32.totalorder %s248, %s250
    %p257 = scmp.eq.s32.totalorder %s25, 1
    %p258 = por %p256, %p257
    %p259 = scmp.ne.s32.totalorder %s250, %s251
    %p260 = scmp.eq.s32.totalorder %s25, 0
    %p261 = por %p259, %p260
    %p262 = scmp.ne.s32.totalorder %s250, %s251
    %p263 = scmp.eq.s32.totalorder %s26, 1
    %p264 = por %p262, %p263
    %p266 = scmp.ne.s32.totalorder %s251, %s265
    %p267 = scmp.eq.s32.totalorder %s26, 0
    %p268 = por %p266, %p267
    %s270 = sadd.s32 %s269, 1
    %p273 = scmp.eq.s32.totalorder %s20, 1
    %p274 = scmp.ne.s32.totalorder %s269, %s271
    %p275 = scmp.eq.s32.totalorder %s20, 0
    %p276 = por %p274, %p275
    %p277 = scmp.ne.s32.totalorder %s269, %s271
    %p278 = scmp.eq.s32.totalorder %s25, 1
    %p279 = por %p277, %p278
    %p280 = scmp.ne.s32.totalorder %s271, %s272
    %p281 = scmp.eq.s32.totalorder %s25, 0
    %p282 = por %p280, %p281
    %p283 = scmp.ne.s32.totalorder %s271, %s272
    %p284 = scmp.eq.s32.totalorder %s26, 1
    %p285 = por %p283, %p284
    %p287 = scmp.ne.s32.totalorder %s272, %s286
    %p288 = scmp.eq.s32.totalorder %s26, 0
    %p289 = por %p287, %p288
    %s291 = sadd.s32 %s290, 1
    %p294 = scmp.eq.s32.totalorder %s20, 1
    %p295 = scmp.ne.s32.totalorder %s290, %s292
    %p296 = scmp.eq.s32.totalorder %s20, 0
    %p297 = por %p295, %p296
    %p298 = scmp.ne.s32.totalorder %s290, %s292
    %p299 = scmp.eq.s32.totalorder %s25, 1
    %p300 = por %p298, %p299
    %p301 = scmp.ne.s32.totalorder %s292, %s293
    %p302 = scmp.eq.s32.totalorder %s25, 0
    %p303 = por %p301, %p302
    %p304 = scmp.ne.s32.totalorder %s292, %s293
    %p305 = scmp.eq.s32.totalorder %s26, 1
    %p306 = por %p304, %p305
    %p308 = scmp.ne.s32.totalorder %s293, %s307
    %p309 = scmp.eq.s32.totalorder %s26, 0
    %p310 = por %p308, %p309
    %s312 = sadd.s32 %s311, 1
    %p315 = scmp.eq.s32.totalorder %s20, 1
    %p316 = scmp.ne.s32.totalorder %s311, %s313
    %p317 = scmp.eq.s32.totalorder %s20, 0
    %p318 = por %p316, %p317
    %p319 = scmp.ne.s32.totalorder %s311, %s313
    %p320 = scmp.eq.s32.totalorder %s25, 1
    %p321 = por %p319, %p320
    %p322 = scmp.ne.s32.totalorder %s313, %s314
    %p323 = scmp.eq.s32.totalorder %s25, 0
    %p324 = por %p322, %p323
    %p325 = scmp.ne.s32.totalorder %s313, %s314
    %p326 = scmp.eq.s32.totalorder %s26, 1
    %p327 = por %p325, %p326
    %p329 = scmp.ne.s32.totalorder %s314, %s328
    %p330 = scmp.eq.s32.totalorder %s26, 0
    %p331 = por %p329, %p330
    %s332 = ssub.s32 %s20, %s27
    %p333 = scmp.eq.s32.totalorder %s332, 0
    %s335 = sadd.s32 %s334, 1
    %s336 = scalar_select %p333, %s334, %s335
    %p339 = pneg %p333
    %p340 = scmp.eq.s32.totalorder %s20, 1
    %p341 = por %p339, %p340
    %p342 = scmp.ne.s32.totalorder %s334, %s337
    %p343 = scmp.eq.s32.totalorder %s20, 0
    %p344 = por %p342, %p343
    %p345 = scmp.ne.s32.totalorder %s334, %s337
    %p346 = scmp.eq.s32.totalorder %s25, 1
    %p347 = por %p345, %p346
    %p348 = scmp.ne.s32.totalorder %s337, %s338
    %p349 = scmp.eq.s32.totalorder %s25, 0
    %p350 = por %p348, %p349
    %p351 = scmp.ne.s32.totalorder %s337, %s338
    %p352 = scmp.eq.s32.totalorder %s26, 1
    %p353 = por %p351, %p352
    %p355 = scmp.ne.s32.totalorder %s338, %s354
    %p356 = scmp.eq.s32.totalorder %s26, 0
    %p357 = por %p355, %p356
    %p358 = scmp.le.s32.totalorder 1, %s20
    %p359 = scmp.lt.s32.totalorder %s20, 3
    %p360 = pnand %p358, %p359
    %p361 = pneg %p360
    // Predicated region
    $region9: #{_jitted_forward.1} parent=5 // pred_check
      _
    $region10: #{_jitted_forward.1} parent=5 // pred_check_branch
      %363 = sbr.rel (%p360) target = $region12
    $region11: #{_jitted_forward.1} parent=5 // pred_region
      %s364 = ssub.s32 %s20, 1
      // Predicated region
      $region13: #{_jitted_forward.1} parent=11 // pred_check
        %p365 = pneg %p93
      $region14: #{_jitted_forward.1} parent=11 // pred_check_branch
        %367 = sbr.rel (%p365) target = $region16
      $region15: #{_jitted_forward.1} parent=11 // pred_region
        _
      $region16: #{_jitted_forward.1} parent=11 // pred_fallthru
        _
      // Predicated region
      $region17: #{_jitted_forward.1} parent=11 // pred_check
        %p368 = pneg %p114
      $region18: #{_jitted_forward.1} parent=11 // pred_check_branch
        %370 = sbr.rel (%p368) target = $region20
      $region19: #{_jitted_forward.1} parent=11 // pred_region
        _
      $region20: #{_jitted_forward.1} parent=11 // pred_fallthru
        _
      // Predicated region
      $region21: #{_jitted_forward.1} parent=11 // pred_check
        %p371 = pneg %p135
      $region22: #{_jitted_forward.1} parent=11 // pred_check_branch
        %373 = sbr.rel (%p371) target = $region24
      $region23: #{_jitted_forward.1} parent=11 // pred_region
        _
      $region24: #{_jitted_forward.1} parent=11 // pred_fallthru
        _
      // Predicated region
      $region25: #{_jitted_forward.1} parent=11 // pred_check
        %p374 = pneg %p156
      $region26: #{_jitted_forward.1} parent=11 // pred_check_branch
        %376 = sbr.rel (%p374) target = $region28
      $region27: #{_jitted_forward.1} parent=11 // pred_region
        _
      $region28: #{_jitted_forward.1} parent=11 // pred_fallthru
        _
      // Predicated region
      $region29: #{_jitted_forward.1} parent=11 // pred_check
        %p377 = pneg %p177
      $region30: #{_jitted_forward.1} parent=11 // pred_check_branch
        %379 = sbr.rel (%p377) target = $region32
      $region31: #{_jitted_forward.1} parent=11 // pred_region
        _
      $region32: #{_jitted_forward.1} parent=11 // pred_fallthru
        _
      // Predicated region
      $region33: #{_jitted_forward.1} parent=11 // pred_check
        %p380 = pneg %p198
      $region34: #{_jitted_forward.1} parent=11 // pred_check_branch
        %382 = sbr.rel (%p380) target = $region36
      $region35: #{_jitted_forward.1} parent=11 // pred_region
        _
      $region36: #{_jitted_forward.1} parent=11 // pred_fallthru
        _
      // Predicated region
      $region37: #{_jitted_forward.1} parent=11 // pred_check
        %p383 = pneg %p219
      $region38: #{_jitted_forward.1} parent=11 // pred_check_branch
        %385 = sbr.rel (%p383) target = $region40
      $region39: #{_jitted_forward.1} parent=11 // pred_region
        _
      $region40: #{_jitted_forward.1} parent=11 // pred_fallthru
        _
      // Predicated region
      $region41: #{_jitted_forward.1} parent=11 // pred_check
        %p386 = pneg %p240
      $region42: #{_jitted_forward.1} parent=11 // pred_check_branch
        %388 = sbr.rel (%p386) target = $region44
      $region43: #{_jitted_forward.1} parent=11 // pred_region
        _
      $region44: #{_jitted_forward.1} parent=11 // pred_fallthru
        _
      // Predicated region
      $region45: #{_jitted_forward.1} parent=11 // pred_check
        %p389 = pneg %p261
      $region46: #{_jitted_forward.1} parent=11 // pred_check_branch
        %391 = sbr.rel (%p389) target = $region48
      $region47: #{_jitted_forward.1} parent=11 // pred_region
        _
      $region48: #{_jitted_forward.1} parent=11 // pred_fallthru
        _
      // Predicated region
      $region49: #{_jitted_forward.1} parent=11 // pred_check
        %p392 = pneg %p282
      $region50: #{_jitted_forward.1} parent=11 // pred_check_branch
        %394 = sbr.rel (%p392) target = $region52
      $region51: #{_jitted_forward.1} parent=11 // pred_region
        _
      $region52: #{_jitted_forward.1} parent=11 // pred_fallthru
        _
      // Predicated region
      $region53: #{_jitted_forward.1} parent=11 // pred_check
        %p395 = pneg %p303
      $region54: #{_jitted_forward.1} parent=11 // pred_check_branch
        %397 = sbr.rel (%p395) target = $region56
      $region55: #{_jitted_forward.1} parent=11 // pred_region
        _
      $region56: #{_jitted_forward.1} parent=11 // pred_fallthru
        _
      // Predicated region
      $region57: #{_jitted_forward.1} parent=11 // pred_check
        %p398 = pneg %p324
      $region58: #{_jitted_forward.1} parent=11 // pred_check_branch
        %400 = sbr.rel (%p398) target = $region60
      $region59: #{_jitted_forward.1} parent=11 // pred_region
        _
      $region60: #{_jitted_forward.1} parent=11 // pred_fallthru
        _
    $region12: #{_jitted_forward.1} parent=5 // pred_fallthru
      _
    %p401 = scmp.lt.s32.totalorder %s20, 2
    // Predicated region
    $region61: #{_jitted_forward.1} parent=5 // pred_check
      %p402 = pneg %p401
    $region62: #{_jitted_forward.1} parent=5 // pred_check_branch
      %404 = sbr.rel (%p402) target = $region64
    $region63: #{_jitted_forward.1} parent=5 // pred_region
      // Predicated region
      $region65: #{_jitted_forward.1} parent=63 // pred_check
        %p405 = pneg %p40
      $region66: #{_jitted_forward.1} parent=63 // pred_check_branch
        %407 = sbr.rel (%p405) target = $region68
      $region67: #{_jitted_forward.1} parent=63 // pred_region
        %p408 = scmp.lt.s32.totalorder %s20, 1
        %s409 = scalar_select %p408, %s20, 1
        %s410 = smul.addr %s409, 8
        %s411 = scalar_lea.vmem %s0, %s410
      $region68: #{_jitted_forward.1} parent=63 // pred_fallthru
        _
      // Predicated region
      $region69: #{_jitted_forward.1} parent=63 // pred_check
        %p412 = pneg %p66
      $region70: #{_jitted_forward.1} parent=63 // pred_check_branch
        %414 = sbr.rel (%p412) target = $region72
      $region71: #{_jitted_forward.1} parent=63 // pred_region
        %p415 = scmp.lt.s32.totalorder %s20, 1
        %s416 = scalar_select %p415, %s20, 1
        %s417 = smul.addr %s416, 8
        %s418 = scalar_lea.vmem %s1, %s417
      $region72: #{_jitted_forward.1} parent=63 // pred_fallthru
        _
    $region64: #{_jitted_forward.1} parent=5 // pred_fallthru
      _
    %p419 = scmp.le.s32.totalorder 1, %s20
    %p420 = scmp.lt.s32.totalorder %s20, 3
    %p421 = pnand %p419, %p420
    %p422 = pneg %p421
    // Predicated region
    $region73: #{_jitted_forward.1} parent=5 // pred_check
      _
    $region74: #{_jitted_forward.1} parent=5 // pred_check_branch
      %424 = sbr.rel (%p421) target = $region76
    $region75: #{_jitted_forward.1} parent=5 // pred_region
      %s425 = ssub.s32 %s20, 1
      %p426 = scmp.lt.s32.totalorder %s25, 1
      %s427 = scalar_select %p426, %s25, 1
      %s428 = smul.addr %s427, 8
      %s429 = scalar_lea.vmem %s0, %s428
      %p430 = pneg %p46
      %p431 = pneg %p43
      %p432 = scmp.lt.s32.totalorder %s25, 1
      %s433 = scalar_select %p432, %s25, 1
      %s434 = smul.addr %s433, 8
      %s435 = scalar_lea.vmem %s1, %s434
      %p436 = pneg %p72
      %p437 = pneg %p69
      %p438 = pneg %p93
      %p439 = pneg %p90
      %p440 = pneg %p114
      %p441 = pneg %p111
      %p442 = pneg %p135
      %p443 = pneg %p132
      %p444 = pneg %p156
      %p445 = pneg %p153
      %p446 = pneg %p177
      %p447 = pneg %p174
      %p448 = pneg %p198
      %p449 = pneg %p195
      %p450 = pneg %p219
      %p451 = pneg %p216
      %p452 = pneg %p240
      %p453 = pneg %p237
      %p454 = pneg %p261
      %p455 = pneg %p258
      %p456 = pneg %p282
      %p457 = pneg %p279
      %p458 = pneg %p303
      %p459 = pneg %p300
      %p460 = pneg %p324
      %p461 = pneg %p321
      %p462 = pneg %p350
      %p463 = pneg %p347
      %p464 = scmp.lt.s32.totalorder %s25, 1
      %s465 = scalar_select %p464, %s25, 1
      %s466 = smul.addr %s465, 2
      %s467 = smul.addr %s466, 8
      %s468 = scalar_lea.vmem %s14, %s467
      %p469 = scmp.lt.s32.totalorder %s25, 1
      %s470 = scalar_select %p469, %s25, 1
      %s471 = smul.addr %s470, 8
      %s472 = scalar_lea.vmem %s0, %s471
      %p473 = scmp.lt.s32.totalorder %s25, 1
      %s474 = scalar_select %p473, %s25, 1
      %s475 = smul.addr %s474, 8
      %s476 = scalar_lea.vmem %s1, %s475
      %p477 = scmp.lt.s32.totalorder %s25, 1
      %s478 = scalar_select %p477, %s25, 1
      %s479 = smul.addr %s478, 2
      %s480 = smul.addr %s479, 8
      %s481 = scalar_lea.vmem %s14, %s480
      %v482 = vld [vmem:[%s472] sm:$0xff]
      %v483 = vld [vmem:[%s476] sm:$0xff]
      %v484 = vld [vmem:[%s2] sm:$0xff]
      %v485 = vld [vmem:[%s2 + $0x8] sm:$0xff]
      %s486 = scalar_lea.vmem %s2, 16
      %v487 = vld [vmem:[%s486] sm:$0xff]
      %v488 = vld [vmem:[%s486 + $0x8] sm:$0xff]
      %s489 = scalar_lea.vmem %s2, 32
      %v490 = vld [vmem:[%s489] sm:$0xff]
      %v491 = vld [vmem:[%s489 + $0x8] sm:$0xff]
      %v493 = vrot.slane %v483, 7
      %vm495 = vcmask 1040384
      %v496 = vsel %vm495, 0.0, %v493
      %vm497 = vcmask 130048
      %v499 = vsel %vm497, %v482, 0
      %501 = vmatprep.subr.mxu0 0.0
      %502 = vmatpush1.msra.mxu0 %v487
      %503 = vmatprep.subr.mxu0 0.0
      %504 = vmatpush1.msra.mxu0 %v488
      %505 = vmatprep.subr.mxu0 0.0
      %506 = vmatpush1.msra.mxu0 0.0
      %507 = vmatprep.subr.mxu0 0.0
      %508 = vmatpush1.msra.mxu0 0.0
      %509 = vmatprep.subr.mxu0 0.0
      %510 = vmatpush1.msra.mxu0 0.0
      %511 = vmatprep.subr.mxu0 0.0
      %512 = vmatpush1.msra.mxu0 0.0
      %513 = vmatprep.subr.mxu0 0.0
      %514 = vmatpush1.msra.mxu0 0.0
      %515 = vmatprep.subr.mxu0 0.0
      %516 = vmatpush1.msra.mxu0 0.0
      %517 = vmatprep.subr.mxu0 0.0
      %518 = vmatpush1.msra.mxu0 0.0
      %519 = vmatprep.subr.mxu0 0.0
      %520 = vmatpush1.msra.mxu0 0.0
      %521 = vmatprep.subr.mxu0 0.0
      %522 = vmatpush1.msra.mxu0 0.0
      %523 = vmatprep.subr.mxu0 0.0
      %524 = vmatpush1.msra.mxu0 0.0
      %525 = vmatprep.subr.mxu0 0.0
      %526 = vmatpush1.msra.mxu0 0.0
      %527 = vmatprep.subr.mxu0 0.0
      %528 = vmatpush1.msra.mxu0 0.0
      %529 = vmatprep.subr.mxu0 0.0
      %530 = vmatpush1.msra.mxu0 0.0
      %531 = vmatprep.subr.mxu0 0.0
      %532 = vmatpush1.msra.mxu0 0.0
      %533 = vmatprep.subr.mxu0 0.0
      %534 = vmatpush1.msra.mxu0 0.0
      %535 = vmatprep.subr.mxu0 0.0
      %536 = vmatpush1.msra.mxu0 0.0
      %537 = vmatprep.subr.mxu0 0.0
      %538 = vmatpush1.msra.mxu0 0.0
      %539 = vmatprep.subr.mxu0 0.0
      %540 = vmatpush1.msra.mxu0 0.0
      %541 = vmatprep.subr.mxu0 0.0
      %542 = vmatpush1.msra.mxu0 0.0
      %543 = vmatprep.subr.mxu0 0.0
      %544 = vmatpush1.msra.mxu0 0.0
      %545 = vmatprep.subr.mxu0 0.0
      %546 = vmatpush1.msra.mxu0 0.0
      %547 = vmatprep.subr.mxu0 0.0
      %548 = vmatpush1.msra.mxu0 0.0
      %549 = vmatprep.subr.mxu0 0.0
      %550 = vmatpush1.msra.mxu0 0.0
      %551 = vmatprep.subr.mxu0 0.0
      %552 = vmatpush1.msra.mxu0 0.0
      %553 = vmatprep.subr.mxu0 0.0
      %554 = vmatpush1.msra.mxu0 0.0
      %555 = vmatprep.subr.mxu0 0.0
      %556 = vmatpush1.msra.mxu0 0.0
      %557 = vmatprep.subr.mxu0 0.0
      %558 = vmatpush1.msra.mxu0 0.0
      %559 = vmatprep.subr.mxu0 0.0
      %560 = vmatpush1.msra.mxu0 0.0
      %561 = vmatprep.subr.mxu0 0.0
      %562 = vmatpush1.msra.mxu0 0.0
      %563 = vmatprep.subr.mxu0 0.0
      %564 = vmatpush1.msra.mxu0 0.0
      %565 = vmatprep.mubr.f32.mxu0 0.0
      %566 = vmatmul.mubr.f32.gmra.mrb[0].mxu0 %v499
      %v567 = vpop.f32.mrb[0].mxu0
      %v568 = vadd.f32 0.0, %v567
      %v569 = vpop.f32.mrb[0].mxu0
      %570 = vdwg.mxu0
      %v572 = vsel %vm497, %v496, 0
      %574 = vmatprep.subr.mxu0 0.0
      %575 = vmatpush1.msra.mxu0 %v484
      %576 = vmatprep.subr.mxu0 0.0
      %577 = vmatpush1.msra.mxu0 %v485
      %578 = vmatprep.subr.mxu0 0.0
      %579 = vmatpush1.msra.mxu0 0.0
      %580 = vmatprep.subr.mxu0 0.0
      %581 = vmatpush1.msra.mxu0 0.0
      %582 = vmatprep.subr.mxu0 0.0
      %583 = vmatpush1.msra.mxu0 0.0
      %584 = vmatprep.subr.mxu0 0.0
      %585 = vmatpush1.msra.mxu0 0.0
      %586 = vmatprep.subr.mxu0 0.0
      %587 = vmatpush1.msra.mxu0 0.0
      %588 = vmatprep.subr.mxu0 0.0
      %589 = vmatpush1.msra.mxu0 0.0
      %590 = vmatprep.subr.mxu0 0.0
      %591 = vmatpush1.msra.mxu0 0.0
      %592 = vmatprep.subr.mxu0 0.0
      %593 = vmatpush1.msra.mxu0 0.0
      %594 = vmatprep.subr.mxu0 0.0
      %595 = vmatpush1.msra.mxu0 0.0
      %596 = vmatprep.subr.mxu0 0.0
      %597 = vmatpush1.msra.mxu0 0.0
      %598 = vmatprep.subr.mxu0 0.0
      %599 = vmatpush1.msra.mxu0 0.0
      %600 = vmatprep.subr.mxu0 0.0
      %601 = vmatpush1.msra.mxu0 0.0
      %602 = vmatprep.subr.mxu0 0.0
      %603 = vmatpush1.msra.mxu0 0.0
      %604 = vmatprep.subr.mxu0 0.0
      %605 = vmatpush1.msra.mxu0 0.0
      %606 = vmatprep.subr.mxu0 0.0
      %607 = vmatpush1.msra.mxu0 0.0
      %608 = vmatprep.subr.mxu0 0.0
      %609 = vmatpush1.msra.mxu0 0.0
      %610 = vmatprep.subr.mxu0 0.0
      %611 = vmatpush1.msra.mxu0 0.0
      %612 = vmatprep.subr.mxu0 0.0
      %613 = vmatpush1.msra.mxu0 0.0
      %614 = vmatprep.subr.mxu0 0.0
      %615 = vmatpush1.msra.mxu0 0.0
      %616 = vmatprep.subr.mxu0 0.0
      %617 = vmatpush1.msra.mxu0 0.0
      %618 = vmatprep.subr.mxu0 0.0
      %619 = vmatpush1.msra.mxu0 0.0
      %620 = vmatprep.subr.mxu0 0.0
      %621 = vmatpush1.msra.mxu0 0.0
      %622 = vmatprep.subr.mxu0 0.0
      %623 = vmatpush1.msra.mxu0 0.0
      %624 = vmatprep.subr.mxu0 0.0
      %625 = vmatpush1.msra.mxu0 0.0
      %626 = vmatprep.subr.mxu0 0.0
      %627 = vmatpush1.msra.mxu0 0.0
      %628 = vmatprep.subr.mxu0 0.0
      %629 = vmatpush1.msra.mxu0 0.0
      %630 = vmatprep.subr.mxu0 0.0
      %631 = vmatpush1.msra.mxu0 0.0
      %632 = vmatprep.subr.mxu0 0.0
      %633 = vmatpush1.msra.mxu0 0.0
      %634 = vmatprep.subr.mxu0 0.0
      %635 = vmatpush1.msra.mxu0 0.0
      %636 = vmatprep.subr.mxu0 0.0
      %637 = vmatpush1.msra.mxu0 0.0
      %638 = vmatprep.mubr.f32.mxu0 0.0
      %639 = vmatmul.mubr.f32.gmra.mrb[0].mxu0 %v572
      %v640 = vpop.f32.mrb[0].mxu0
      %v641 = vadd.f32 %v568, %v640
      %v642 = vpop.f32.mrb[0].mxu0
      %643 = vdwg.mxu0
      %v644 = vsel %vm497, %v483, 0
      %646 = vmatprep.subr.mxu0 0.0
      %647 = vmatpush1.msra.mxu0 %v490
      %648 = vmatprep.subr.mxu0 0.0
      %649 = vmatpush1.msra.mxu0 %v491
      %650 = vmatprep.subr.mxu0 0.0
      %651 = vmatpush1.msra.mxu0 0.0
      %652 = vmatprep.subr.mxu0 0.0
      %653 = vmatpush1.msra.mxu0 0.0
      %654 = vmatprep.subr.mxu0 0.0
      %655 = vmatpush1.msra.mxu0 0.0
      %656 = vmatprep.subr.mxu0 0.0
      %657 = vmatpush1.msra.mxu0 0.0
      %658 = vmatprep.subr.mxu0 0.0
      %659 = vmatpush1.msra.mxu0 0.0
      %660 = vmatprep.subr.mxu0 0.0
      %661 = vmatpush1.msra.mxu0 0.0
      %662 = vmatprep.subr.mxu0 0.0
      %663 = vmatpush1.msra.mxu0 0.0
      %664 = vmatprep.subr.mxu0 0.0
      %665 = vmatpush1.msra.mxu0 0.0
      %666 = vmatprep.subr.mxu0 0.0
      %667 = vmatpush1.msra.mxu0 0.0
      %668 = vmatprep.subr.mxu0 0.0
      %669 = vmatpush1.msra.mxu0 0.0
      %670 = vmatprep.subr.mxu0 0.0
      %671 = vmatpush1.msra.mxu0 0.0
      %672 = vmatprep.subr.mxu0 0.0
      %673 = vmatpush1.msra.mxu0 0.0
      %674 = vmatprep.subr.mxu0 0.0
      %675 = vmatpush1.msra.mxu0 0.0
      %676 = vmatprep.subr.mxu0 0.0
      %677 = vmatpush1.msra.mxu0 0.0
      %678 = vmatprep.subr.mxu0 0.0
      %679 = vmatpush1.msra.mxu0 0.0
      %680 = vmatprep.subr.mxu0 0.0
      %681 = vmatpush1.msra.mxu0 0.0
      %682 = vmatprep.subr.mxu0 0.0
      %683 = vmatpush1.msra.mxu0 0.0
      %684 = vmatprep.subr.mxu0 0.0
      %685 = vmatpush1.msra.mxu0 0.0
      %686 = vmatprep.subr.mxu0 0.0
      %687 = vmatpush1.msra.mxu0 0.0
      %688 = vmatprep.subr.mxu0 0.0
      %689 = vmatpush1.msra.mxu0 0.0
      %690 = vmatprep.subr.mxu0 0.0
      %691 = vmatpush1.msra.mxu0 0.0
      %692 = vmatprep.subr.mxu0 0.0
      %693 = vmatpush1.msra.mxu0 0.0
      %694 = vmatprep.subr.mxu0 0.0
      %695 = vmatpush1.msra.mxu0 0.0
      %696 = vmatprep.subr.mxu0 0.0
      %697 = vmatpush1.msra.mxu0 0.0
      %698 = vmatprep.subr.mxu0 0.0
      %699 = vmatpush1.msra.mxu0 0.0
      %700 = vmatprep.subr.mxu0 0.0
      %701 = vmatpush1.msra.mxu0 0.0
      %702 = vmatprep.subr.mxu0 0.0
      %703 = vmatpush1.msra.mxu0 0.0
      %704 = vmatprep.subr.mxu0 0.0
      %705 = vmatpush1.msra.mxu0 0.0
      %706 = vmatprep.subr.mxu0 0.0
      %707 = vmatpush1.msra.mxu0 0.0
      %708 = vmatprep.subr.mxu0 0.0
      %709 = vmatpush1.msra.mxu0 0.0
      %710 = vmatprep.mubr.f32.mxu0 0.0
      %711 = vmatmul.mubr.f32.gmra.mrb[0].mxu0 %v644
      %v712 = vpop.f32.mrb[0].mxu0
      %v713 = vadd.f32 0.0, %v712
      %v714 = vpop.f32.mrb[0].mxu0
      %715 = vdwg.mxu0
      %v716 = vadd.f32 %v641, %v713
      %717 = vmatprep.subr.mxu0 0.0
      %718 = vmatpush1.msra.mxu0 %v487
      %719 = vmatprep.subr.mxu0 0.0
      %720 = vmatpush1.msra.mxu0 %v488
      %721 = vmatprep.subr.mxu0 0.0
      %722 = vmatpush1.msra.mxu0 0.0
      %723 = vmatprep.subr.mxu0 0.0
      %724 = vmatpush1.msra.mxu0 0.0
      %725 = vmatprep.subr.mxu0 0.0
      %726 = vmatpush1.msra.mxu0 0.0
      %727 = vmatprep.subr.mxu0 0.0
      %728 = vmatpush1.msra.mxu0 0.0
      %729 = vmatprep.subr.mxu0 0.0
      %730 = vmatpush1.msra.mxu0 0.0
      %731 = vmatprep.subr.mxu0 0.0
      %732 = vmatpush1.msra.mxu0 0.0
      %733 = vmatprep.subr.mxu0 0.0
      %734 = vmatpush1.msra.mxu0 0.0
      %735 = vmatprep.subr.mxu0 0.0
      %736 = vmatpush1.msra.mxu0 0.0
      %737 = vmatprep.subr.mxu0 0.0
      %738 = vmatpush1.msra.mxu0 0.0
      %739 = vmatprep.subr.mxu0 0.0
      %740 = vmatpush1.msra.mxu0 0.0
      %741 = vmatprep.subr.mxu0 0.0
      %742 = vmatpush1.msra.mxu0 0.0
      %743 = vmatprep.subr.mxu0 0.0
      %744 = vmatpush1.msra.mxu0 0.0
      %745 = vmatprep.subr.mxu0 0.0
      %746 = vmatpush1.msra.mxu0 0.0
      %747 = vmatprep.subr.mxu0 0.0
      %748 = vmatpush1.msra.mxu0 0.0
      %749 = vmatprep.subr.mxu0 0.0
      %750 = vmatpush1.msra.mxu0 0.0
      %751 = vmatprep.subr.mxu0 0.0
      %752 = vmatpush1.msra.mxu0 0.0
      %753 = vmatprep.subr.mxu0 0.0
      %754 = vmatpush1.msra.mxu0 0.0
      %755 = vmatprep.subr.mxu0 0.0
      %756 = vmatpush1.msra.mxu0 0.0
      %757 = vmatprep.subr.mxu0 0.0
      %758 = vmatpush1.msra.mxu0 0.0
      %759 = vmatprep.subr.mxu0 0.0
      %760 = vmatpush1.msra.mxu0 0.0
      %761 = vmatprep.subr.mxu0 0.0
      %762 = vmatpush1.msra.mxu0 0.0
      %763 = vmatprep.subr.mxu0 0.0
      %764 = vmatpush1.msra.mxu0 0.0
      %765 = vmatprep.subr.mxu0 0.0
      %766 = vmatpush1.msra.mxu0 0.0
      %767 = vmatprep.subr.mxu0 0.0
      %768 = vmatpush1.msra.mxu0 0.0
      %769 = vmatprep.subr.mxu0 0.0
      %770 = vmatpush1.msra.mxu0 0.0
      %771 = vmatprep.subr.mxu0 0.0
      %772 = vmatpush1.msra.mxu0 0.0
      %773 = vmatprep.subr.mxu0 0.0
      %774 = vmatpush1.msra.mxu0 0.0
      %775 = vmatprep.subr.mxu0 0.0
      %776 = vmatpush1.msra.mxu0 0.0
      %777 = vmatprep.subr.mxu0 0.0
      %778 = vmatpush1.msra.mxu0 0.0
      %779 = vmatprep.subr.mxu0 0.0
      %780 = vmatpush1.msra.mxu0 0.0
      %781 = vmatprep.mubr.f32.mxu0 0.0
      %782 = vmatmul.mubr.f32.gmra.mrb[0].mxu0 %v644
      %v783 = vpop.f32.mrb[0].mxu0
      %v784 = vadd.f32 0.0, %v783
      %v785 = vpop.f32.mrb[0].mxu0
      %786 = vdwg.mxu0
      %787 = vmatprep.subr.mxu0 0.0
      %788 = vmatpush1.msra.mxu0 %v484
      %789 = vmatprep.subr.mxu0 0.0
      %790 = vmatpush1.msra.mxu0 %v485
      %791 = vmatprep.subr.mxu0 0.0
      %792 = vmatpush1.msra.mxu0 0.0
      %793 = vmatprep.subr.mxu0 0.0
      %794 = vmatpush1.msra.mxu0 0.0
      %795 = vmatprep.subr.mxu0 0.0
      %796 = vmatpush1.msra.mxu0 0.0
      %797 = vmatprep.subr.mxu0 0.0
      %798 = vmatpush1.msra.mxu0 0.0
      %799 = vmatprep.subr.mxu0 0.0
      %800 = vmatpush1.msra.mxu0 0.0
      %801 = vmatprep.subr.mxu0 0.0
      %802 = vmatpush1.msra.mxu0 0.0
      %803 = vmatprep.subr.mxu0 0.0
      %804 = vmatpush1.msra.mxu0 0.0
      %805 = vmatprep.subr.mxu0 0.0
      %806 = vmatpush1.msra.mxu0 0.0
      %807 = vmatprep.subr.mxu0 0.0
      %808 = vmatpush1.msra.mxu0 0.0
      %809 = vmatprep.subr.mxu0 0.0
      %810 = vmatpush1.msra.mxu0 0.0
      %811 = vmatprep.subr.mxu0 0.0
      %812 = vmatpush1.msra.mxu0 0.0
      %813 = vmatprep.subr.mxu0 0.0
      %814 = vmatpush1.msra.mxu0 0.0
      %815 = vmatprep.subr.mxu0 0.0
      %816 = vmatpush1.msra.mxu0 0.0
      %817 = vmatprep.subr.mxu0 0.0
      %818 = vmatpush1.msra.mxu0 0.0
      %819 = vmatprep.subr.mxu0 0.0
      %820 = vmatpush1.msra.mxu0 0.0
      %821 = vmatprep.subr.mxu0 0.0
      %822 = vmatpush1.msra.mxu0 0.0
      %823 = vmatprep.subr.mxu0 0.0
      %824 = vmatpush1.msra.mxu0 0.0
      %825 = vmatprep.subr.mxu0 0.0
      %826 = vmatpush1.msra.mxu0 0.0
      %827 = vmatprep.subr.mxu0 0.0
      %828 = vmatpush1.msra.mxu0 0.0
      %829 = vmatprep.subr.mxu0 0.0
      %830 = vmatpush1.msra.mxu0 0.0
      %831 = vmatprep.subr.mxu0 0.0
      %832 = vmatpush1.msra.mxu0 0.0
      %833 = vmatprep.subr.mxu0 0.0
      %834 = vmatpush1.msra.mxu0 0.0
      %835 = vmatprep.subr.mxu0 0.0
      %836 = vmatpush1.msra.mxu0 0.0
      %837 = vmatprep.subr.mxu0 0.0
      %838 = vmatpush1.msra.mxu0 0.0
      %839 = vmatprep.subr.mxu0 0.0
      %840 = vmatpush1.msra.mxu0 0.0
      %841 = vmatprep.subr.mxu0 0.0
      %842 = vmatpush1.msra.mxu0 0.0
      %843 = vmatprep.subr.mxu0 0.0
      %844 = vmatpush1.msra.mxu0 0.0
      %845 = vmatprep.subr.mxu0 0.0
      %846 = vmatpush1.msra.mxu0 0.0
      %847 = vmatprep.subr.mxu0 0.0
      %848 = vmatpush1.msra.mxu0 0.0
      %849 = vmatprep.subr.mxu0 0.0
      %850 = vmatpush1.msra.mxu0 0.0
      %851 = vmatprep.mubr.f32.mxu0 0.0
      %852 = vmatmul.mubr.f32.gmra.mrb[0].mxu0 %v499
      %v853 = vpop.f32.mrb[0].mxu0
      %v854 = vadd.f32 %v784, %v853
      %v855 = vpop.f32.mrb[0].mxu0
      %856 = vdwg.mxu0
      %v857 = vrot.slane %v482, 1
      %vm859 = vcmask 1046528
      %v860 = vsel %vm859, %v857, 0.0
      %v862 = vsel %vm497, %v860, 0
      %864 = vmatprep.subr.mxu0 0.0
      %865 = vmatpush1.msra.mxu0 %v490
      %866 = vmatprep.subr.mxu0 0.0
      %867 = vmatpush1.msra.mxu0 %v491
      %868 = vmatprep.subr.mxu0 0.0
      %869 = vmatpush1.msra.mxu0 0.0
      %870 = vmatprep.subr.mxu0 0.0
      %871 = vmatpush1.msra.mxu0 0.0
      %872 = vmatprep.subr.mxu0 0.0
      %873 = vmatpush1.msra.mxu0 0.0
      %874 = vmatprep.subr.mxu0 0.0
      %875 = vmatpush1.msra.mxu0 0.0
      %876 = vmatprep.subr.mxu0 0.0
      %877 = vmatpush1.msra.mxu0 0.0
      %878 = vmatprep.subr.mxu0 0.0
      %879 = vmatpush1.msra.mxu0 0.0
      %880 = vmatprep.subr.mxu0 0.0
      %881 = vmatpush1.msra.mxu0 0.0
      %882 = vmatprep.subr.mxu0 0.0
      %883 = vmatpush1.msra.mxu0 0.0
      %884 = vmatprep.subr.mxu0 0.0
      %885 = vmatpush1.msra.mxu0 0.0
      %886 = vmatprep.subr.mxu0 0.0
      %887 = vmatpush1.msra.mxu0 0.0
      %888 = vmatprep.subr.mxu0 0.0
      %889 = vmatpush1.msra.mxu0 0.0
      %890 = vmatprep.subr.mxu0 0.0
      %891 = vmatpush1.msra.mxu0 0.0
      %892 = vmatprep.subr.mxu0 0.0
      %893 = vmatpush1.msra.mxu0 0.0
      %894 = vmatprep.subr.mxu0 0.0
      %895 = vmatpush1.msra.mxu0 0.0
      %896 = vmatprep.subr.mxu0 0.0
      %897 = vmatpush1.msra.mxu0 0.0
      %898 = vmatprep.subr.mxu0 0.0
      %899 = vmatpush1.msra.mxu0 0.0
      %900 = vmatprep.subr.mxu0 0.0
      %901 = vmatpush1.msra.mxu0 0.0
      %902 = vmatprep.subr.mxu0 0.0
      %903 = vmatpush1.msra.mxu0 0.0
      %904 = vmatprep.subr.mxu0 0.0
      %905 = vmatpush1.msra.mxu0 0.0
      %906 = vmatprep.subr.mxu0 0.0
      %907 = vmatpush1.msra.mxu0 0.0
      %908 = vmatprep.subr.mxu0 0.0
      %909 = vmatpush1.msra.mxu0 0.0
      %910 = vmatprep.subr.mxu0 0.0
      %911 = vmatpush1.msra.mxu0 0.0
      %912 = vmatprep.subr.mxu0 0.0
      %913 = vmatpush1.msra.mxu0 0.0
      %914 = vmatprep.subr.mxu0 0.0
      %915 = vmatpush1.msra.mxu0 0.0
      %916 = vmatprep.subr.mxu0 0.0
      %917 = vmatpush1.msra.mxu0 0.0
      %918 = vmatprep.subr.mxu0 0.0
      %919 = vmatpush1.msra.mxu0 0.0
      %920 = vmatprep.subr.mxu0 0.0
      %921 = vmatpush1.msra.mxu0 0.0
      %922 = vmatprep.subr.mxu0 0.0
      %923 = vmatpush1.msra.mxu0 0.0
      %924 = vmatprep.subr.mxu0 0.0
      %925 = vmatpush1.msra.mxu0 0.0
      %926 = vmatprep.subr.mxu0 0.0
      %927 = vmatpush1.msra.mxu0 0.0
      %928 = vmatprep.mubr.f32.mxu0 0.0
      %929 = vmatmul.mubr.f32.gmra.mrb[0].mxu0 %v862
      %v930 = vpop.f32.mrb[0].mxu0
      %v931 = vadd.f32 0.0, %v930
      %v932 = vpop.f32.mrb[0].mxu0
      %933 = vdwg.mxu0
      %v934 = vadd.f32 %v854, %v931
      %v935 = vld [vmem:[%s3] sm:$0x1]
      %v937 = vlaneseq
      %v938 = vshrl.u32 %v937, 7
      %v939 = vsub.s32 0, %v938
      %v940 = vrot.slane %v935, %v939
      %v942 = vadd.f32 %v716, %v940
      %v943 = vmax.f32 %v942, 0.0
      %v944 = vadd.f32 %v934, %v940
      %v945 = vmax.f32 %v944, 0.0
      %v946 = vld [vmem:[%s4] sm:$0xff]
      %v947 = vld [vmem:[%s4 + $0x8] sm:$0xff]
      %v948 = vld [vmem:[%s4 + $0x10] sm:$0xff]
      %v949 = vld [vmem:[%s4 + $0x18] sm:$0xff]
      %v950 = vld [vmem:[%s4 + $0x20] sm:$0xff]
      %v951 = vld [vmem:[%s4 + $0x28] sm:$0xff]
      %v952 = vld [vmem:[%s4 + $0x30] sm:$0xff]
      %v953 = vld [vmem:[%s4 + $0x38] sm:$0xff]
      %v954 = vld [vmem:[%s4 + $0x40] sm:$0xff]
      %v955 = vld [vmem:[%s4 + $0x48] sm:$0xff]
      %v956 = vld [vmem:[%s4 + $0x50] sm:$0xff]
      %v957 = vld [vmem:[%s4 + $0x58] sm:$0xff]
      %v958 = vld [vmem:[%s4 + $0x60] sm:$0xff]
      %v959 = vld [vmem:[%s4 + $0x68] sm:$0xff]
      %v960 = vld [vmem:[%s4 + $0x70] sm:$0xff]
      %v961 = vld [vmem:[%s4 + $0x78] sm:$0xff]
      %s962 = scalar_lea.vmem %s4, 128
      %v963 = vld [vmem:[%s962] sm:$0xff]
      %v964 = vld [vmem:[%s962 + $0x8] sm:$0xff]
      %v965 = vld [vmem:[%s962 + $0x10] sm:$0xff]
      %v966 = vld [vmem:[%s962 + $0x18] sm:$0xff]
      %v967 = vld [vmem:[%s962 + $0x20] sm:$0xff]
      %v968 = vld [vmem:[%s962 + $0x28] sm:$0xff]
      %v969 = vld [vmem:[%s962 + $0x30] sm:$0xff]
      %v970 = vld [vmem:[%s962 + $0x38] sm:$0xff]
      %v971 = vld [vmem:[%s962 + $0x40] sm:$0xff]
      %v972 = vld [vmem:[%s962 + $0x48] sm:$0xff]
      %v973 = vld [vmem:[%s962 + $0x50] sm:$0xff]
      %v974 = vld [vmem:[%s962 + $0x58] sm:$0xff]
      %v975 = vld [vmem:[%s962 + $0x60] sm:$0xff]
      %v976 = vld [vmem:[%s962 + $0x68] sm:$0xff]
      %v977 = vld [vmem:[%s962 + $0x70] sm:$0xff]
      %v978 = vld [vmem:[%s962 + $0x78] sm:$0xff]
      %s979 = scalar_lea.vmem %s4, 256
      %v980 = vld [vmem:[%s979] sm:$0xff]
      %v981 = vld [vmem:[%s979 + $0x8] sm:$0xff]
      %v982 = vld [vmem:[%s979 + $0x10] sm:$0xff]
      %v983 = vld [vmem:[%s979 + $0x18] sm:$0xff]
      %v984 = vld [vmem:[%s979 + $0x20] sm:$0xff]
      %v985 = vld [vmem:[%s979 + $0x28] sm:$0xff]
      %v986 = vld [vmem:[%s979 + $0x30] sm:$0xff]
      %v987 = vld [vmem:[%s979 + $0x38] sm:$0xff]
      %v988 = vld [vmem:[%s979 + $0x40] sm:$0xff]
      %v989 = vld [vmem:[%s979 + $0x48] sm:$0xff]
      %v990 = vld [vmem:[%s979 + $0x50] sm:$0xff]
      %v991 = vld [vmem:[%s979 + $0x58] sm:$0xff]
      %v992 = vld [vmem:[%s979 + $0x60] sm:$0xff]
      %v993 = vld [vmem:[%s979 + $0x68] sm:$0xff]
      %v994 = vld [vmem:[%s979 + $0x70] sm:$0xff]
      %v995 = vld [vmem:[%s979 + $0x78] sm:$0xff]
      %v997 = vrot.slane %v945, 7
      %v999 = vsel %vm495, 0.0, %v997
      %1000 = vmatprep.subr.mxu0 0.0
      %1001 = vmatpush1.msra.mxu0 %v963
      %1002 = vmatprep.subr.mxu0 0.0
      %1003 = vmatpush1.msra.mxu0 %v964
      %1004 = vmatprep.subr.mxu0 0.0
      %1005 = vmatpush1.msra.mxu0 %v965
      %1006 = vmatprep.subr.mxu0 0.0
      %1007 = vmatpush1.msra.mxu0 %v966
      %1008 = vmatprep.subr.mxu0 0.0
      %1009 = vmatpush1.msra.mxu0 %v967
      %1010 = vmatprep.subr.mxu0 0.0
      %1011 = vmatpush1.msra.mxu0 %v968
      %1012 = vmatprep.subr.mxu0 0.0
      %1013 = vmatpush1.msra.mxu0 %v969
      %1014 = vmatprep.subr.mxu0 0.0
      %1015 = vmatpush1.msra.mxu0 %v970
      %1016 = vmatprep.subr.mxu0 0.0
      %1017 = vmatpush1.msra.mxu0 %v971
      %1018 = vmatprep.subr.mxu0 0.0
      %1019 = vmatpush1.msra.mxu0 %v972
      %1020 = vmatprep.subr.mxu0 0.0
      %1021 = vmatpush1.msra.mxu0 %v973
      %1022 = vmatprep.subr.mxu0 0.0
      %1023 = vmatpush1.msra.mxu0 %v974
      %1024 = vmatprep.subr.mxu0 0.0
      %1025 = vmatpush1.msra.mxu0 %v975
      %1026 = vmatprep.subr.mxu0 0.0
      %1027 = vmatpush1.msra.mxu0 %v976
      %1028 = vmatprep.subr.mxu0 0.0
      %1029 = vmatpush1.msra.mxu0 %v977
      %1030 = vmatprep.subr.mxu0 0.0
      %1031 = vmatpush1.msra.mxu0 %v978
      %1032 = vmatprep.subr.mxu0 0.0
      %1033 = vmatpush1.msra.mxu0 0.0
      %1034 = vmatprep.subr.mxu0 0.0
      %1035 = vmatpush1.msra.mxu0 0.0
      %1036 = vmatprep.subr.mxu0 0.0
      %1037 = vmatpush1.msra.mxu0 0.0
      %1038 = vmatprep.subr.mxu0 0.0
      %1039 = vmatpush1.msra.mxu0 0.0
      %1040 = vmatprep.subr.mxu0 0.0
      %1041 = vmatpush1.msra.mxu0 0.0
      %1042 = vmatprep.subr.mxu0 0.0
      %1043 = vmatpush1.msra.mxu0 0.0
      %1044 = vmatprep.subr.mxu0 0.0
      %1045 = vmatpush1.msra.mxu0 0.0
      %1046 = vmatprep.subr.mxu0 0.0
      %1047 = vmatpush1.msra.mxu0 0.0
      %1048 = vmatprep.subr.mxu0 0.0
      %1049 = vmatpush1.msra.mxu0 0.0
      %1050 = vmatprep.subr.mxu0 0.0
      %1051 = vmatpush1.msra.mxu0 0.0
      %1052 = vmatprep.subr.mxu0 0.0
      %1053 = vmatpush1.msra.mxu0 0.0
      %1054 = vmatprep.subr.mxu0 0.0
      %1055 = vmatpush1.msra.mxu0 0.0
      %1056 = vmatprep.subr.mxu0 0.0
      %1057 = vmatpush1.msra.mxu0 0.0
      %1058 = vmatprep.subr.mxu0 0.0
      %1059 = vmatpush1.msra.mxu0 0.0
      %1060 = vmatprep.subr.mxu0 0.0
      %1061 = vmatpush1.msra.mxu0 0.0
      %1062 = vmatprep.subr.mxu0 0.0
      %1063 = vmatpush1.msra.mxu0 0.0
      %1064 = vmatprep.mubr.f32.mxu0 0.0
      %1065 = vmatmul.mubr.f32.gmra.mrb[0].mxu0 %v943
      %v1066 = vpop.f32.mrb[0].mxu0
      %v1067 = vadd.f32 0.0, %v1066
      %v1068 = vpop.f32.mrb[0].mxu0
      %1069 = vdwg.mxu0
      %1070 = vmatprep.subr.mxu0 0.0
      %1071 = vmatpush1.msra.mxu0 %v946
      %1072 = vmatprep.subr.mxu0 0.0
      %1073 = vmatpush1.msra.mxu0 %v947
      %1074 = vmatprep.subr.mxu0 0.0
      %1075 = vmatpush1.msra.mxu0 %v948
      %1076 = vmatprep.subr.mxu0 0.0
      %1077 = vmatpush1.msra.mxu0 %v949
      %1078 = vmatprep.subr.mxu0 0.0
      %1079 = vmatpush1.msra.mxu0 %v950
      %1080 = vmatprep.subr.mxu0 0.0
      %1081 = vmatpush1.msra.mxu0 %v951
      %1082 = vmatprep.subr.mxu0 0.0
      %1083 = vmatpush1.msra.mxu0 %v952
      %1084 = vmatprep.subr.mxu0 0.0
      %1085 = vmatpush1.msra.mxu0 %v953
      %1086 = vmatprep.subr.mxu0 0.0
      %1087 = vmatpush1.msra.mxu0 %v954
      %1088 = vmatprep.subr.mxu0 0.0
      %1089 = vmatpush1.msra.mxu0 %v955
      %1090 = vmatprep.subr.mxu0 0.0
      %1091 = vmatpush1.msra.mxu0 %v956
      %1092 = vmatprep.subr.mxu0 0.0
      %1093 = vmatpush1.msra.mxu0 %v957
      %1094 = vmatprep.subr.mxu0 0.0
      %1095 = vmatpush1.msra.mxu0 %v958
      %1096 = vmatprep.subr.mxu0 0.0
      %1097 = vmatpush1.msra.mxu0 %v959
      %1098 = vmatprep.subr.mxu0 0.0
      %1099 = vmatpush1.msra.mxu0 %v960
      %1100 = vmatprep.subr.mxu0 0.0
      %1101 = vmatpush1.msra.mxu0 %v961
      %1102 = vmatprep.subr.mxu0 0.0
      %1103 = vmatpush1.msra.mxu0 0.0
      %1104 = vmatprep.subr.mxu0 0.0
      %1105 = vmatpush1.msra.mxu0 0.0
      %1106 = vmatprep.subr.mxu0 0.0
      %1107 = vmatpush1.msra.mxu0 0.0
      %1108 = vmatprep.subr.mxu0 0.0
      %1109 = vmatpush1.msra.mxu0 0.0
      %1110 = vmatprep.subr.mxu0 0.0
      %1111 = vmatpush1.msra.mxu0 0.0
      %1112 = vmatprep.subr.mxu0 0.0
      %1113 = vmatpush1.msra.mxu0 0.0
      %1114 = vmatprep.subr.mxu0 0.0
      %1115 = vmatpush1.msra.mxu0 0.0
      %1116 = vmatprep.subr.mxu0 0.0
      %1117 = vmatpush1.msra.mxu0 0.0
      %1118 = vmatprep.subr.mxu0 0.0
      %1119 = vmatpush1.msra.mxu0 0.0
      %1120 = vmatprep.subr.mxu0 0.0
      %1121 = vmatpush1.msra.mxu0 0.0
      %1122 = vmatprep.subr.mxu0 0.0
      %1123 = vmatpush1.msra.mxu0 0.0
      %1124 = vmatprep.subr.mxu0 0.0
      %1125 = vmatpush1.msra.mxu0 0.0
      %1126 = vmatprep.subr.mxu0 0.0
      %1127 = vmatpush1.msra.mxu0 0.0
      %1128 = vmatprep.subr.mxu0 0.0
      %1129 = vmatpush1.msra.mxu0 0.0
      %1130 = vmatprep.subr.mxu0 0.0
      %1131 = vmatpush1.msra.mxu0 0.0
      %1132 = vmatprep.subr.mxu0 0.0
      %1133 = vmatpush1.msra.mxu0 0.0
      %1134 = vmatprep.mubr.f32.mxu0 0.0
      %1135 = vmatmul.mubr.f32.gmra.mrb[0].mxu0 %v999
      %v1136 = vpop.f32.mrb[0].mxu0
      %v1137 = vadd.f32 %v1067, %v1136
      %v1138 = vpop.f32.mrb[0].mxu0
      %1139 = vdwg.mxu0
      %1140 = vmatprep.subr.mxu0 0.0
      %1141 = vmatpush1.msra.mxu0 %v980
      %1142 = vmatprep.subr.mxu0 0.0
      %1143 = vmatpush1.msra.mxu0 %v981
      %1144 = vmatprep.subr.mxu0 0.0
      %1145 = vmatpush1.msra.mxu0 %v982
      %1146 = vmatprep.subr.mxu0 0.0
      %1147 = vmatpush1.msra.mxu0 %v983
      %1148 = vmatprep.subr.mxu0 0.0
      %1149 = vmatpush1.msra.mxu0 %v984
      %1150 = vmatprep.subr.mxu0 0.0
      %1151 = vmatpush1.msra.mxu0 %v985
      %1152 = vmatprep.subr.mxu0 0.0
      %1153 = vmatpush1.msra.mxu0 %v986
      %1154 = vmatprep.subr.mxu0 0.0
      %1155 = vmatpush1.msra.mxu0 %v987
      %1156 = vmatprep.subr.mxu0 0.0
      %1157 = vmatpush1.msra.mxu0 %v988
      %1158 = vmatprep.subr.mxu0 0.0
      %1159 = vmatpush1.msra.mxu0 %v989
      %1160 = vmatprep.subr.mxu0 0.0
      %1161 = vmatpush1.msra.mxu0 %v990
      %1162 = vmatprep.subr.mxu0 0.0
      %1163 = vmatpush1.msra.mxu0 %v991
      %1164 = vmatprep.subr.mxu0 0.0
      %1165 = vmatpush1.msra.mxu0 %v992
      %1166 = vmatprep.subr.mxu0 0.0
      %1167 = vmatpush1.msra.mxu0 %v993
      %1168 = vmatprep.subr.mxu0 0.0
      %1169 = vmatpush1.msra.mxu0 %v994
      %1170 = vmatprep.subr.mxu0 0.0
      %1171 = vmatpush1.msra.mxu0 %v995
      %1172 = vmatprep.subr.mxu0 0.0
      %1173 = vmatpush1.msra.mxu0 0.0
      %1174 = vmatprep.subr.mxu0 0.0
      %1175 = vmatpush1.msra.mxu0 0.0
      %1176 = vmatprep.subr.mxu0 0.0
      %1177 = vmatpush1.msra.mxu0 0.0
      %1178 = vmatprep.subr.mxu0 0.0
      %1179 = vmatpush1.msra.mxu0 0.0
      %1180 = vmatprep.subr.mxu0 0.0
      %1181 = vmatpush1.msra.mxu0 0.0
      %1182 = vmatprep.subr.mxu0 0.0
      %1183 = vmatpush1.msra.mxu0 0.0
      %1184 = vmatprep.subr.mxu0 0.0
      %1185 = vmatpush1.msra.mxu0 0.0
      %1186 = vmatprep.subr.mxu0 0.0
      %1187 = vmatpush1.msra.mxu0 0.0
      %1188 = vmatprep.subr.mxu0 0.0
      %1189 = vmatpush1.msra.mxu0 0.0
      %1190 = vmatprep.subr.mxu0 0.0
      %1191 = vmatpush1.msra.mxu0 0.0
      %1192 = vmatprep.subr.mxu0 0.0
      %1193 = vmatpush1.msra.mxu0 0.0
      %1194 = vmatprep.subr.mxu0 0.0
      %1195 = vmatpush1.msra.mxu0 0.0
      %1196 = vmatprep.subr.mxu0 0.0
      %1197 = vmatpush1.msra.mxu0 0.0
      %1198 = vmatprep.subr.mxu0 0.0
      %1199 = vmatpush1.msra.mxu0 0.0
      %1200 = vmatprep.subr.mxu0 0.0
      %1201 = vmatpush1.msra.mxu0 0.0
      %1202 = vmatprep.subr.mxu0 0.0
      %1203 = vmatpush1.msra.mxu0 0.0
      %1204 = vmatprep.mubr.f32.mxu0 0.0
      %1205 = vmatmul.mubr.f32.gmra.mrb[0].mxu0 %v945
      %v1206 = vpop.f32.mrb[0].mxu0
      %v1207 = vadd.f32 0.0, %v1206
      %v1208 = vpop.f32.mrb[0].mxu0
      %1209 = vdwg.mxu0
      %v1210 = vadd.f32 %v1137, %v1207
      %1211 = vmatprep.subr.mxu0 0.0
      %1212 = vmatpush1.msra.mxu0 %v963
      %1213 = vmatprep.subr.mxu0 0.0
      %1214 = vmatpush1.msra.mxu0 %v964
      %1215 = vmatprep.subr.mxu0 0.0
      %1216 = vmatpush1.msra.mxu0 %v965
      %1217 = vmatprep.subr.mxu0 0.0
      %1218 = vmatpush1.msra.mxu0 %v966
      %1219 = vmatprep.subr.mxu0 0.0
      %1220 = vmatpush1.msra.mxu0 %v967
      %1221 = vmatprep.subr.mxu0 0.0
      %1222 = vmatpush1.msra.mxu0 %v968
      %1223 = vmatprep.subr.mxu0 0.0
      %1224 = vmatpush1.msra.mxu0 %v969
      %1225 = vmatprep.subr.mxu0 0.0
      %1226 = vmatpush1.msra.mxu0 %v970
      %1227 = vmatprep.subr.mxu0 0.0
      %1228 = vmatpush1.msra.mxu0 %v971
      %1229 = vmatprep.subr.mxu0 0.0
      %1230 = vmatpush1.msra.mxu0 %v972
      %1231 = vmatprep.subr.mxu0 0.0
      %1232 = vmatpush1.msra.mxu0 %v973
      %1233 = vmatprep.subr.mxu0 0.0
      %1234 = vmatpush1.msra.mxu0 %v974
      %1235 = vmatprep.subr.mxu0 0.0
      %1236 = vmatpush1.msra.mxu0 %v975
      %1237 = vmatprep.subr.mxu0 0.0
      %1238 = vmatpush1.msra.mxu0 %v976
      %1239 = vmatprep.subr.mxu0 0.0
      %1240 = vmatpush1.msra.mxu0 %v977
      %1241 = vmatprep.subr.mxu0 0.0
      %1242 = vmatpush1.msra.mxu0 %v978
      %1243 = vmatprep.subr.mxu0 0.0
      %1244 = vmatpush1.msra.mxu0 0.0
      %1245 = vmatprep.subr.mxu0 0.0
      %1246 = vmatpush1.msra.mxu0 0.0
      %1247 = vmatprep.subr.mxu0 0.0
      %1248 = vmatpush1.msra.mxu0 0.0
      %1249 = vmatprep.subr.mxu0 0.0
      %1250 = vmatpush1.msra.mxu0 0.0
      %1251 = vmatprep.subr.mxu0 0.0
      %1252 = vmatpush1.msra.mxu0 0.0
      %1253 = vmatprep.subr.mxu0 0.0
      %1254 = vmatpush1.msra.mxu0 0.0
      %1255 = vmatprep.subr.mxu0 0.0
      %1256 = vmatpush1.msra.mxu0 0.0
      %1257 = vmatprep.subr.mxu0 0.0
      %1258 = vmatpush1.msra.mxu0 0.0
      %1259 = vmatprep.subr.mxu0 0.0
      %1260 = vmatpush1.msra.mxu0 0.0
      %1261 = vmatprep.subr.mxu0 0.0
      %1262 = vmatpush1.msra.mxu0 0.0
      %1263 = vmatprep.subr.mxu0 0.0
      %1264 = vmatpush1.msra.mxu0 0.0
      %1265 = vmatprep.subr.mxu0 0.0
      %1266 = vmatpush1.msra.mxu0 0.0
      %1267 = vmatprep.subr.mxu0 0.0
      %1268 = vmatpush1.msra.mxu0 0.0
      %1269 = vmatprep.subr.mxu0 0.0
      %1270 = vmatpush1.msra.mxu0 0.0
      %1271 = vmatprep.subr.mxu0 0.0
      %1272 = vmatpush1.msra.mxu0 0.0
      %1273 = vmatprep.subr.mxu0 0.0
      %1274 = vmatpush1.msra.mxu0 0.0
      %1275 = vmatprep.mubr.f32.mxu0 0.0
      %1276 = vmatmul.mubr.f32.gmra.mrb[0].mxu0 %v945
      %v1277 = vpop.f32.mrb[0].mxu0
      %v1278 = vadd.f32 0.0, %v1277
      %v1279 = vpop.f32.mrb[0].mxu0
      %1280 = vdwg.mxu0
      %1281 = vmatprep.subr.mxu0 0.0
      %1282 = vmatpush1.msra.mxu0 %v946
      %1283 = vmatprep.subr.mxu0 0.0
      %1284 = vmatpush1.msra.mxu0 %v947
      %1285 = vmatprep.subr.mxu0 0.0
      %1286 = vmatpush1.msra.mxu0 %v948
      %1287 = vmatprep.subr.mxu0 0.0
      %1288 = vmatpush1.msra.mxu0 %v949
      %1289 = vmatprep.subr.mxu0 0.0
      %1290 = vmatpush1.msra.mxu0 %v950
      %1291 = vmatprep.subr.mxu0 0.0
      %1292 = vmatpush1.msra.mxu0 %v951
      %1293 = vmatprep.subr.mxu0 0.0
      %1294 = vmatpush1.msra.mxu0 %v952
      %1295 = vmatprep.subr.mxu0 0.0
      %1296 = vmatpush1.msra.mxu0 %v953
      %1297 = vmatprep.subr.mxu0 0.0
      %1298 = vmatpush1.msra.mxu0 %v954
      %1299 = vmatprep.subr.mxu0 0.0
      %1300 = vmatpush1.msra.mxu0 %v955
      %1301 = vmatprep.subr.mxu0 0.0
      %1302 = vmatpush1.msra.mxu0 %v956
      %1303 = vmatprep.subr.mxu0 0.0
      %1304 = vmatpush1.msra.mxu0 %v957
      %1305 = vmatprep.subr.mxu0 0.0
      %1306 = vmatpush1.msra.mxu0 %v958
      %1307 = vmatprep.subr.mxu0 0.0
      %1308 = vmatpush1.msra.mxu0 %v959
      %1309 = vmatprep.subr.mxu0 0.0
      %1310 = vmatpush1.msra.mxu0 %v960
      %1311 = vmatprep.subr.mxu0 0.0
      %1312 = vmatpush1.msra.mxu0 %v961
      %1313 = vmatprep.subr.mxu0 0.0
      %1314 = vmatpush1.msra.mxu0 0.0
      %1315 = vmatprep.subr.mxu0 0.0
      %1316 = vmatpush1.msra.mxu0 0.0
      %1317 = vmatprep.subr.mxu0 0.0
      %1318 = vmatpush1.msra.mxu0 0.0
      %1319 = vmatprep.subr.mxu0 0.0
      %1320 = vmatpush1.msra.mxu0 0.0
      %1321 = vmatprep.subr.mxu0 0.0
      %1322 = vmatpush1.msra.mxu0 0.0
      %1323 = vmatprep.subr.mxu0 0.0
      %1324 = vmatpush1.msra.mxu0 0.0
      %1325 = vmatprep.subr.mxu0 0.0
      %1326 = vmatpush1.msra.mxu0 0.0
      %1327 = vmatprep.subr.mxu0 0.0
      %1328 = vmatpush1.msra.mxu0 0.0
      %1329 = vmatprep.subr.mxu0 0.0
      %1330 = vmatpush1.msra.mxu0 0.0
      %1331 = vmatprep.subr.mxu0 0.0
      %1332 = vmatpush1.msra.mxu0 0.0
      %1333 = vmatprep.subr.mxu0 0.0
      %1334 = vmatpush1.msra.mxu0 0.0
      %1335 = vmatprep.subr.mxu0 0.0
      %1336 = vmatpush1.msra.mxu0 0.0
      %1337 = vmatprep.subr.mxu0 0.0
      %1338 = vmatpush1.msra.mxu0 0.0
      %1339 = vmatprep.subr.mxu0 0.0
      %1340 = vmatpush1.msra.mxu0 0.0
      %1341 = vmatprep.subr.mxu0 0.0
      %1342 = vmatpush1.msra.mxu0 0.0
      %1343 = vmatprep.subr.mxu0 0.0
      %1344 = vmatpush1.msra.mxu0 0.0
      %1345 = vmatprep.mubr.f32.mxu0 0.0
      %1346 = vmatmul.mubr.f32.gmra.mrb[0].mxu0 %v943
      %v1347 = vpop.f32.mrb[0].mxu0
      %v1348 = vadd.f32 %v1278, %v1347
      %v1349 = vpop.f32.mrb[0].mxu0
      %1350 = vdwg.mxu0
      %v1352 = vrot.slane %v943, 1
      %v1354 = vsel %vm859, %v1352, 0.0
      %1355 = vmatprep.subr.mxu0 0.0
      %1356 = vmatpush1.msra.mxu0 %v980
      %1357 = vmatprep.subr.mxu0 0.0
      %1358 = vmatpush1.msra.mxu0 %v981
      %1359 = vmatprep.subr.mxu0 0.0
      %1360 = vmatpush1.msra.mxu0 %v982
      %1361 = vmatprep.subr.mxu0 0.0
      %1362 = vmatpush1.msra.mxu0 %v983
      %1363 = vmatprep.subr.mxu0 0.0
      %1364 = vmatpush1.msra.mxu0 %v984
      %1365 = vmatprep.subr.mxu0 0.0
      %1366 = vmatpush1.msra.mxu0 %v985
      %1367 = vmatprep.subr.mxu0 0.0
      %1368 = vmatpush1.msra.mxu0 %v986
      %1369 = vmatprep.subr.mxu0 0.0
      %1370 = vmatpush1.msra.mxu0 %v987
      %1371 = vmatprep.subr.mxu0 0.0
      %1372 = vmatpush1.msra.mxu0 %v988
      %1373 = vmatprep.subr.mxu0 0.0
      %1374 = vmatpush1.msra.mxu0 %v989
      %1375 = vmatprep.subr.mxu0 0.0
      %1376 = vmatpush1.msra.mxu0 %v990
      %1377 = vmatprep.subr.mxu0 0.0
      %1378 = vmatpush1.msra.mxu0 %v991
      %1379 = vmatprep.subr.mxu0 0.0
      %1380 = vmatpush1.msra.mxu0 %v992
      %1381 = vmatprep.subr.mxu0 0.0
      %1382 = vmatpush1.msra.mxu0 %v993
      %1383 = vmatprep.subr.mxu0 0.0
      %1384 = vmatpush1.msra.mxu0 %v994
      %1385 = vmatprep.subr.mxu0 0.0
      %1386 = vmatpush1.msra.mxu0 %v995
      %1387 = vmatprep.subr.mxu0 0.0
      %1388 = vmatpush1.msra.mxu0 0.0
      %1389 = vmatprep.subr.mxu0 0.0
      %1390 = vmatpush1.msra.mxu0 0.0
      %1391 = vmatprep.subr.mxu0 0.0
      %1392 = vmatpush1.msra.mxu0 0.0
      %1393 = vmatprep.subr.mxu0 0.0
      %1394 = vmatpush1.msra.mxu0 0.0
      %1395 = vmatprep.subr.mxu0 0.0
      %1396 = vmatpush1.msra.mxu0 0.0
      %1397 = vmatprep.subr.mxu0 0.0
      %1398 = vmatpush1.msra.mxu0 0.0
      %1399 = vmatprep.subr.mxu0 0.0
      %1400 = vmatpush1.msra.mxu0 0.0
      %1401 = vmatprep.subr.mxu0 0.0
      %1402 = vmatpush1.msra.mxu0 0.0
      %1403 = vmatprep.subr.mxu0 0.0
      %1404 = vmatpush1.msra.mxu0 0.0
      %1405 = vmatprep.subr.mxu0 0.0
      %1406 = vmatpush1.msra.mxu0 0.0
      %1407 = vmatprep.subr.mxu0 0.0
      %1408 = vmatpush1.msra.mxu0 0.0
      %1409 = vmatprep.subr.mxu0 0.0
      %1410 = vmatpush1.msra.mxu0 0.0
      %1411 = vmatprep.subr.mxu0 0.0
      %1412 = vmatpush1.msra.mxu0 0.0
      %1413 = vmatprep.subr.mxu0 0.0
      %1414 = vmatpush1.msra.mxu0 0.0
      %1415 = vmatprep.subr.mxu0 0.0
      %1416 = vmatpush1.msra.mxu0 0.0
      %1417 = vmatprep.subr.mxu0 0.0
      %1418 = vmatpush1.msra.mxu0 0.0
      %1419 = vmatprep.mubr.f32.mxu0 0.0
      %1420 = vmatmul.mubr.f32.gmra.mrb[0].mxu0 %v1354
      %v1421 = vpop.f32.mrb[0].mxu0
      %v1422 = vadd.f32 0.0, %v1421
      %v1423 = vpop.f32.mrb[0].mxu0
      %1424 = vdwg.mxu0
      %v1425 = vadd.f32 %v1348, %v1422
      %v1426 = vld [vmem:[%s5] sm:$0x1]
      %v1428 = vlaneseq
      %v1429 = vshrl.u32 %v1428, 7
      %v1430 = vsub.s32 0, %v1429
      %v1431 = vrot.slane %v1426, %v1430
      %v1433 = vadd.f32 %v1210, %v1431
      %v1434 = vmax.f32 %v1433, 0.0
      %v1435 = vadd.f32 %v1434, %v943
      %v1436 = vadd.f32 %v1425, %v1431
      %v1437 = vmax.f32 %v1436, 0.0
      %v1438 = vadd.f32 %v1437, %v945
      %v1440 = vrot.slane %v1435, 7
      %v1442 = vsel %vm495, 0.0, %v1440
      %v1443 = vld [vmem:[%s6] sm:$0xff]
      %v1444 = vld [vmem:[%s6 + $0x8] sm:$0xff]
      %v1445 = vld [vmem:[%s6 + $0x10] sm:$0xff]
      %v1446 = vld [vmem:[%s6 + $0x18] sm:$0xff]
      %v1447 = vld [vmem:[%s6 + $0x20] sm:$0xff]
      %v1448 = vld [vmem:[%s6 + $0x28] sm:$0xff]
      %v1449 = vld [vmem:[%s6 + $0x30] sm:$0xff]
      %v1450 = vld [vmem:[%s6 + $0x38] sm:$0xff]
      %v1451 = vld [vmem:[%s6 + $0x40] sm:$0xff]
      %v1452 = vld [vmem:[%s6 + $0x48] sm:$0xff]
      %v1453 = vld [vmem:[%s6 + $0x50] sm:$0xff]
      %v1454 = vld [vmem:[%s6 + $0x58] sm:$0xff]
      %v1455 = vld [vmem:[%s6 + $0x60] sm:$0xff]
      %v1456 = vld [vmem:[%s6 + $0x68] sm:$0xff]
      %v1457 = vld [vmem:[%s6 + $0x70] sm:$0xff]
      %v1458 = vld [vmem:[%s6 + $0x78] sm:$0xff]
      %v1460 = vrot.slane %v1438, 7
      %v1462 = vsel %vm495, 0.0, %v1460
      %s1463 = scalar_lea.vmem %s6, 128
      %v1464 = vld [vmem:[%s1463] sm:$0xff]
      %v1465 = vld [vmem:[%s1463 + $0x8] sm:$0xff]
      %v1466 = vld [vmem:[%s1463 + $0x10] sm:$0xff]
      %v1467 = vld [vmem:[%s1463 + $0x18] sm:$0xff]
      %v1468 = vld [vmem:[%s1463 + $0x20] sm:$0xff]
      %v1469 = vld [vmem:[%s1463 + $0x28] sm:$0xff]
      %v1470 = vld [vmem:[%s1463 + $0x30] sm:$0xff]
      %v1471 = vld [vmem:[%s1463 + $0x38] sm:$0xff]
      %v1472 = vld [vmem:[%s1463 + $0x40] sm:$0xff]
      %v1473 = vld [vmem:[%s1463 + $0x48] sm:$0xff]
      %v1474 = vld [vmem:[%s1463 + $0x50] sm:$0xff]
      %v1475 = vld [vmem:[%s1463 + $0x58] sm:$0xff]
      %v1476 = vld [vmem:[%s1463 + $0x60] sm:$0xff]
      %v1477 = vld [vmem:[%s1463 + $0x68] sm:$0xff]
      %v1478 = vld [vmem:[%s1463 + $0x70] sm:$0xff]
      %v1479 = vld [vmem:[%s1463 + $0x78] sm:$0xff]
      %1480 = vmatprep.subr.mxu0 0.0
      %1481 = vmatpush1.msra.mxu0 %v1464
      %1482 = vmatprep.subr.mxu0 0.0
      %1483 = vmatpush1.msra.mxu0 %v1465
      %1484 = vmatprep.subr.mxu0 0.0
      %1485 = vmatpush1.msra.mxu0 %v1466
      %1486 = vmatprep.subr.mxu0 0.0
      %1487 = vmatpush1.msra.mxu0 %v1467
      %1488 = vmatprep.subr.mxu0 0.0
      %1489 = vmatpush1.msra.mxu0 %v1468
      %1490 = vmatprep.subr.mxu0 0.0
      %1491 = vmatpush1.msra.mxu0 %v1469
      %1492 = vmatprep.subr.mxu0 0.0
      %1493 = vmatpush1.msra.mxu0 %v1470
      %1494 = vmatprep.subr.mxu0 0.0
      %1495 = vmatpush1.msra.mxu0 %v1471
      %1496 = vmatprep.subr.mxu0 0.0
      %1497 = vmatpush1.msra.mxu0 %v1472
      %1498 = vmatprep.subr.mxu0 0.0
      %1499 = vmatpush1.msra.mxu0 %v1473
      %1500 = vmatprep.subr.mxu0 0.0
      %1501 = vmatpush1.msra.mxu0 %v1474
      %1502 = vmatprep.subr.mxu0 0.0
      %1503 = vmatpush1.msra.mxu0 %v1475
      %1504 = vmatprep.subr.mxu0 0.0
      %1505 = vmatpush1.msra.mxu0 %v1476
      %1506 = vmatprep.subr.mxu0 0.0
      %1507 = vmatpush1.msra.mxu0 %v1477
      %1508 = vmatprep.subr.mxu0 0.0
      %1509 = vmatpush1.msra.mxu0 %v1478
      %1510 = vmatprep.subr.mxu0 0.0
      %1511 = vmatpush1.msra.mxu0 %v1479
      %1512 = vmatprep.subr.mxu0 0.0
      %1513 = vmatpush1.msra.mxu0 0.0
      %1514 = vmatprep.subr.mxu0 0.0
      %1515 = vmatpush1.msra.mxu0 0.0
      %1516 = vmatprep.subr.mxu0 0.0
      %1517 = vmatpush1.msra.mxu0 0.0
      %1518 = vmatprep.subr.mxu0 0.0
      %1519 = vmatpush1.msra.mxu0 0.0
      %1520 = vmatprep.subr.mxu0 0.0
      %1521 = vmatpush1.msra.mxu0 0.0
      %1522 = vmatprep.subr.mxu0 0.0
      %1523 = vmatpush1.msra.mxu0 0.0
      %1524 = vmatprep.subr.mxu0 0.0
      %1525 = vmatpush1.msra.mxu0 0.0
      %1526 = vmatprep.subr.mxu0 0.0
      %1527 = vmatpush1.msra.mxu0 0.0
      %1528 = vmatprep.subr.mxu0 0.0
      %1529 = vmatpush1.msra.mxu0 0.0
      %1530 = vmatprep.subr.mxu0 0.0
      %1531 = vmatpush1.msra.mxu0 0.0
      %1532 = vmatprep.subr.mxu0 0.0
      %1533 = vmatpush1.msra.mxu0 0.0
      %1534 = vmatprep.subr.mxu0 0.0
      %1535 = vmatpush1.msra.mxu0 0.0
      %1536 = vmatprep.subr.mxu0 0.0
      %1537 = vmatpush1.msra.mxu0 0.0
      %1538 = vmatprep.subr.mxu0 0.0
      %1539 = vmatpush1.msra.mxu0 0.0
      %1540 = vmatprep.subr.mxu0 0.0
      %1541 = vmatpush1.msra.mxu0 0.0
      %1542 = vmatprep.subr.mxu0 0.0
      %1543 = vmatpush1.msra.mxu0 0.0
      %1544 = vmatprep.mubr.f32.mxu0 0.0
      %1545 = vmatmul.mubr.f32.gmra.mrb[0].mxu0 %v1462
      %v1546 = vpop.f32.mrb[0].mxu0
      %v1547 = vadd.f32 0.0, %v1546
      %v1548 = vpop.f32.mrb[0].mxu0
      %1549 = vmatprep.mubr.f32.mxu0 0.0
      %1550 = vmatmul.mubr.f32.gmra.mrb[0].mxu0 %v1460
      %v1551 = vpop.f32.mrb[0].mxu0
      %v1552 = vadd.f32 0.0, %v1551
      %v1553 = vpop.f32.mrb[0].mxu0
      %1554 = vdwg.mxu0
      %1555 = vmatprep.subr.mxu0 0.0
      %1556 = vmatpush1.msra.mxu0 %v1443
      %1557 = vmatprep.subr.mxu0 0.0
      %1558 = vmatpush1.msra.mxu0 %v1444
      %1559 = vmatprep.subr.mxu0 0.0
      %1560 = vmatpush1.msra.mxu0 %v1445
      %1561 = vmatprep.subr.mxu0 0.0
      %1562 = vmatpush1.msra.mxu0 %v1446
      %1563 = vmatprep.subr.mxu0 0.0
      %1564 = vmatpush1.msra.mxu0 %v1447
      %1565 = vmatprep.subr.mxu0 0.0
      %1566 = vmatpush1.msra.mxu0 %v1448
      %1567 = vmatprep.subr.mxu0 0.0
      %1568 = vmatpush1.msra.mxu0 %v1449
      %1569 = vmatprep.subr.mxu0 0.0
      %1570 = vmatpush1.msra.mxu0 %v1450
      %1571 = vmatprep.subr.mxu0 0.0
      %1572 = vmatpush1.msra.mxu0 %v1451
      %1573 = vmatprep.subr.mxu0 0.0
      %1574 = vmatpush1.msra.mxu0 %v1452
      %1575 = vmatprep.subr.mxu0 0.0
      %1576 = vmatpush1.msra.mxu0 %v1453
      %1577 = vmatprep.subr.mxu0 0.0
      %1578 = vmatpush1.msra.mxu0 %v1454
      %1579 = vmatprep.subr.mxu0 0.0
      %1580 = vmatpush1.msra.mxu0 %v1455
      %1581 = vmatprep.subr.mxu0 0.0
      %1582 = vmatpush1.msra.mxu0 %v1456
      %1583 = vmatprep.subr.mxu0 0.0
      %1584 = vmatpush1.msra.mxu0 %v1457
      %1585 = vmatprep.subr.mxu0 0.0
      %1586 = vmatpush1.msra.mxu0 %v1458
      %1587 = vmatprep.subr.mxu0 0.0
      %1588 = vmatpush1.msra.mxu0 0.0
      %1589 = vmatprep.subr.mxu0 0.0
      %1590 = vmatpush1.msra.mxu0 0.0
      %1591 = vmatprep.subr.mxu0 0.0
      %1592 = vmatpush1.msra.mxu0 0.0
      %1593 = vmatprep.subr.mxu0 0.0
      %1594 = vmatpush1.msra.mxu0 0.0
      %1595 = vmatprep.subr.mxu0 0.0
      %1596 = vmatpush1.msra.mxu0 0.0
      %1597 = vmatprep.subr.mxu0 0.0
      %1598 = vmatpush1.msra.mxu0 0.0
      %1599 = vmatprep.subr.mxu0 0.0
      %1600 = vmatpush1.msra.mxu0 0.0
      %1601 = vmatprep.subr.mxu0 0.0
      %1602 = vmatpush1.msra.mxu0 0.0
      %1603 = vmatprep.subr.mxu0 0.0
      %1604 = vmatpush1.msra.mxu0 0.0
      %1605 = vmatprep.subr.mxu0 0.0
      %1606 = vmatpush1.msra.mxu0 0.0
      %1607 = vmatprep.subr.mxu0 0.0
      %1608 = vmatpush1.msra.mxu0 0.0
      %1609 = vmatprep.subr.mxu0 0.0
      %1610 = vmatpush1.msra.mxu0 0.0
      %1611 = vmatprep.subr.mxu0 0.0
      %1612 = vmatpush1.msra.mxu0 0.0
      %1613 = vmatprep.subr.mxu0 0.0
      %1614 = vmatpush1.msra.mxu0 0.0
      %1615 = vmatprep.subr.mxu0 0.0
      %1616 = vmatpush1.msra.mxu0 0.0
      %1617 = vmatprep.subr.mxu0 0.0
      %1618 = vmatpush1.msra.mxu0 0.0
      %1619 = vmatprep.mubr.f32.mxu0 0.0
      %1620 = vmatmul.mubr.f32.gmra.mrb[0].mxu0 %v1442
      %v1621 = vpop.f32.mrb[0].mxu0
      %v1622 = vadd.f32 %v1547, %v1621
      %v1623 = vpop.f32.mrb[0].mxu0
      %1624 = vmatprep.mubr.f32.mxu0 0.0
      %1625 = vmatmul.mubr.f32.gmra.mrb[0].mxu0 %v1440
      %v1626 = vpop.f32.mrb[0].mxu0
      %v1627 = vadd.f32 %v1552, %v1626
      %v1628 = vpop.f32.mrb[0].mxu0
      %1629 = vdwg.mxu0
      %s1630 = scalar_lea.vmem %s6, 256
      %v1631 = vld [vmem:[%s1630] sm:$0xff]
      %v1632 = vld [vmem:[%s1630 + $0x8] sm:$0xff]
      %v1633 = vld [vmem:[%s1630 + $0x10] sm:$0xff]
      %v1634 = vld [vmem:[%s1630 + $0x18] sm:$0xff]
      %v1635 = vld [vmem:[%s1630 + $0x20] sm:$0xff]
      %v1636 = vld [vmem:[%s1630 + $0x28] sm:$0xff]
      %v1637 = vld [vmem:[%s1630 + $0x30] sm:$0xff]
      %v1638 = vld [vmem:[%s1630 + $0x38] sm:$0xff]
      %v1639 = vld [vmem:[%s1630 + $0x40] sm:$0xff]
      %v1640 = vld [vmem:[%s1630 + $0x48] sm:$0xff]
      %v1641 = vld [vmem:[%s1630 + $0x50] sm:$0xff]
      %v1642 = vld [vmem:[%s1630 + $0x58] sm:$0xff]
      %v1643 = vld [vmem:[%s1630 + $0x60] sm:$0xff]
      %v1644 = vld [vmem:[%s1630 + $0x68] sm:$0xff]
      %v1645 = vld [vmem:[%s1630 + $0x70] sm:$0xff]
      %v1646 = vld [vmem:[%s1630 + $0x78] sm:$0xff]
      %1647 = vmatprep.subr.mxu0 0.0
      %1648 = vmatpush1.msra.mxu0 %v1631
      %1649 = vmatprep.subr.mxu0 0.0
      %1650 = vmatpush1.msra.mxu0 %v1632
      %1651 = vmatprep.subr.mxu0 0.0
      %1652 = vmatpush1.msra.mxu0 %v1633
      %1653 = vmatprep.subr.mxu0 0.0
      %1654 = vmatpush1.msra.mxu0 %v1634
      %1655 = vmatprep.subr.mxu0 0.0
      %1656 = vmatpush1.msra.mxu0 %v1635
      %1657 = vmatprep.subr.mxu0 0.0
      %1658 = vmatpush1.msra.mxu0 %v1636
      %1659 = vmatprep.subr.mxu0 0.0
      %1660 = vmatpush1.msra.mxu0 %v1637
      %1661 = vmatprep.subr.mxu0 0.0
      %1662 = vmatpush1.msra.mxu0 %v1638
      %1663 = vmatprep.subr.mxu0 0.0
      %1664 = vmatpush1.msra.mxu0 %v1639
      %1665 = vmatprep.subr.mxu0 0.0
      %1666 = vmatpush1.msra.mxu0 %v1640
      %1667 = vmatprep.subr.mxu0 0.0
      %1668 = vmatpush1.msra.mxu0 %v1641
      %1669 = vmatprep.subr.mxu0 0.0
      %1670 = vmatpush1.msra.mxu0 %v1642
      %1671 = vmatprep.subr.mxu0 0.0
      %1672 = vmatpush1.msra.mxu0 %v1643
      %1673 = vmatprep.subr.mxu0 0.0
      %1674 = vmatpush1.msra.mxu0 %v1644
      %1675 = vmatprep.subr.mxu0 0.0
      %1676 = vmatpush1.msra.mxu0 %v1645
      %1677 = vmatprep.subr.mxu0 0.0
      %1678 = vmatpush1.msra.mxu0 %v1646
      %1679 = vmatprep.subr.mxu0 0.0
      %1680 = vmatpush1.msra.mxu0 0.0
      %1681 = vmatprep.subr.mxu0 0.0
      %1682 = vmatpush1.msra.mxu0 0.0
      %1683 = vmatprep.subr.mxu0 0.0
      %1684 = vmatpush1.msra.mxu0 0.0
      %1685 = vmatprep.subr.mxu0 0.0
      %1686 = vmatpush1.msra.mxu0 0.0
      %1687 = vmatprep.subr.mxu0 0.0
      %1688 = vmatpush1.msra.mxu0 0.0
      %1689 = vmatprep.subr.mxu0 0.0
      %1690 = vmatpush1.msra.mxu0 0.0
      %1691 = vmatprep.subr.mxu0 0.0
      %1692 = vmatpush1.msra.mxu0 0.0
      %1693 = vmatprep.subr.mxu0 0.0
      %1694 = vmatpush1.msra.mxu0 0.0
      %1695 = vmatprep.subr.mxu0 0.0
      %1696 = vmatpush1.msra.mxu0 0.0
      %1697 = vmatprep.subr.mxu0 0.0
      %1698 = vmatpush1.msra.mxu0 0.0
      %1699 = vmatprep.subr.mxu0 0.0
      %1700 = vmatpush1.msra.mxu0 0.0
      %1701 = vmatprep.subr.mxu0 0.0
      %1702 = vmatpush1.msra.mxu0 0.0
      %1703 = vmatprep.subr.mxu0 0.0
      %1704 = vmatpush1.msra.mxu0 0.0
      %1705 = vmatprep.subr.mxu0 0.0
      %1706 = vmatpush1.msra.mxu0 0.0
      %1707 = vmatprep.subr.mxu0 0.0
      %1708 = vmatpush1.msra.mxu0 0.0
      %1709 = vmatprep.subr.mxu0 0.0
      %1710 = vmatpush1.msra.mxu0 0.0
      %1711 = vmatprep.mubr.f32.mxu0 0.0
      %1712 = vmatmul.mubr.f32.gmra.mrb[0].mxu0 %v1435
      %v1713 = vpop.f32.mrb[0].mxu0
      %v1714 = vadd.f32 0.0, %v1713
      %v1715 = vpop.f32.mrb[0].mxu0
      %1716 = vmatprep.mubr.f32.mxu0 0.0
      %1717 = vmatmul.mubr.f32.gmra.mrb[0].mxu0 0.0
      %v1718 = vpop.f32.mrb[0].mxu0
      %v1719 = vadd.f32 0.0, %v1718
      %v1720 = vpop.f32.mrb[0].mxu0
      %1721 = vdwg.mxu0
      %v1722 = vadd.f32 %v1622, %v1714
      %v1723 = vadd.f32 %v1627, %v1719
      %s1724 = scalar_lea.vmem %s6, 384
      %v1725 = vld [vmem:[%s1724] sm:$0xff]
      %v1726 = vld [vmem:[%s1724 + $0x8] sm:$0xff]
      %v1727 = vld [vmem:[%s1724 + $0x10] sm:$0xff]
      %v1728 = vld [vmem:[%s1724 + $0x18] sm:$0xff]
      %v1729 = vld [vmem:[%s1724 + $0x20] sm:$0xff]
      %v1730 = vld [vmem:[%s1724 + $0x28] sm:$0xff]
      %v1731 = vld [vmem:[%s1724 + $0x30] sm:$0xff]
      %v1732 = vld [vmem:[%s1724 + $0x38] sm:$0xff]
      %v1733 = vld [vmem:[%s1724 + $0x40] sm:$0xff]
      %v1734 = vld [vmem:[%s1724 + $0x48] sm:$0xff]
      %v1735 = vld [vmem:[%s1724 + $0x50] sm:$0xff]
      %v1736 = vld [vmem:[%s1724 + $0x58] sm:$0xff]
      %v1737 = vld [vmem:[%s1724 + $0x60] sm:$0xff]
      %v1738 = vld [vmem:[%s1724 + $0x68] sm:$0xff]
      %v1739 = vld [vmem:[%s1724 + $0x70] sm:$0xff]
      %v1740 = vld [vmem:[%s1724 + $0x78] sm:$0xff]
      %1741 = vmatprep.subr.mxu0 0.0
      %1742 = vmatpush1.msra.mxu0 %v1725
      %1743 = vmatprep.subr.mxu0 0.0
      %1744 = vmatpush1.msra.mxu0 %v1726
      %1745 = vmatprep.subr.mxu0 0.0
      %1746 = vmatpush1.msra.mxu0 %v1727
      %1747 = vmatprep.subr.mxu0 0.0
      %1748 = vmatpush1.msra.mxu0 %v1728
      %1749 = vmatprep.subr.mxu0 0.0
      %1750 = vmatpush1.msra.mxu0 %v1729
      %1751 = vmatprep.subr.mxu0 0.0
      %1752 = vmatpush1.msra.mxu0 %v1730
      %1753 = vmatprep.subr.mxu0 0.0
      %1754 = vmatpush1.msra.mxu0 %v1731
      %1755 = vmatprep.subr.mxu0 0.0
      %1756 = vmatpush1.msra.mxu0 %v1732
      %1757 = vmatprep.subr.mxu0 0.0
      %1758 = vmatpush1.msra.mxu0 %v1733
      %1759 = vmatprep.subr.mxu0 0.0
      %1760 = vmatpush1.msra.mxu0 %v1734
      %1761 = vmatprep.subr.mxu0 0.0
      %1762 = vmatpush1.msra.mxu0 %v1735
      %1763 = vmatprep.subr.mxu0 0.0
      %1764 = vmatpush1.msra.mxu0 %v1736
      %1765 = vmatprep.subr.mxu0 0.0
      %1766 = vmatpush1.msra.mxu0 %v1737
      %1767 = vmatprep.subr.mxu0 0.0
      %1768 = vmatpush1.msra.mxu0 %v1738
      %1769 = vmatprep.subr.mxu0 0.0
      %1770 = vmatpush1.msra.mxu0 %v1739
      %1771 = vmatprep.subr.mxu0 0.0
      %1772 = vmatpush1.msra.mxu0 %v1740
      %1773 = vmatprep.subr.mxu0 0.0
      %1774 = vmatpush1.msra.mxu0 0.0
      %1775 = vmatprep.subr.mxu0 0.0
      %1776 = vmatpush1.msra.mxu0 0.0
      %1777 = vmatprep.subr.mxu0 0.0
      %1778 = vmatpush1.msra.mxu0 0.0
      %1779 = vmatprep.subr.mxu0 0.0
      %1780 = vmatpush1.msra.mxu0 0.0
      %1781 = vmatprep.subr.mxu0 0.0
      %1782 = vmatpush1.msra.mxu0 0.0
      %1783 = vmatprep.subr.mxu0 0.0
      %1784 = vmatpush1.msra.mxu0 0.0
      %1785 = vmatprep.subr.mxu0 0.0
      %1786 = vmatpush1.msra.mxu0 0.0
      %1787 = vmatprep.subr.mxu0 0.0
      %1788 = vmatpush1.msra.mxu0 0.0
      %1789 = vmatprep.subr.mxu0 0.0
      %1790 = vmatpush1.msra.mxu0 0.0
      %1791 = vmatprep.subr.mxu0 0.0
      %1792 = vmatpush1.msra.mxu0 0.0
      %1793 = vmatprep.subr.mxu0 0.0
      %1794 = vmatpush1.msra.mxu0 0.0
      %1795 = vmatprep.subr.mxu0 0.0
      %1796 = vmatpush1.msra.mxu0 0.0
      %1797 = vmatprep.subr.mxu0 0.0
      %1798 = vmatpush1.msra.mxu0 0.0
      %1799 = vmatprep.subr.mxu0 0.0
      %1800 = vmatpush1.msra.mxu0 0.0
      %1801 = vmatprep.subr.mxu0 0.0
      %1802 = vmatpush1.msra.mxu0 0.0
      %1803 = vmatprep.subr.mxu0 0.0
      %1804 = vmatpush1.msra.mxu0 0.0
      %1805 = vmatprep.mubr.f32.mxu0 0.0
      %1806 = vmatmul.mubr.f32.gmra.mrb[0].mxu0 %v1438
      %v1807 = vpop.f32.mrb[0].mxu0
      %v1808 = vadd.f32 0.0, %v1807
      %v1809 = vpop.f32.mrb[0].mxu0
      %1810 = vmatprep.mubr.f32.mxu0 0.0
      %1811 = vmatmul.mubr.f32.gmra.mrb[0].mxu0 0.0
      %v1812 = vpop.f32.mrb[0].mxu0
      %v1813 = vadd.f32 0.0, %v1812
      %v1814 = vpop.f32.mrb[0].mxu0
      %1815 = vdwg.mxu0
      %v1816 = vadd.f32 %v1722, %v1808
      %v1817 = vadd.f32 %v1723, %v1813
      %v1818 = vld [vmem:[%s7] sm:$0x1]
      %v1820 = vlaneseq
      %v1821 = vshrl.u32 %v1820, 7
      %v1822 = vsub.s32 0, %v1821
      %v1823 = vrot.slane %v1818, %v1822
      %v1825 = vadd.f32 %v1816, %v1823
      %v1826 = vadd.f32 %v1817, %v1823
      %v1827 = vmax.f32 %v1825, 0.0
      %v1828 = vmax.f32 %v1826, 0.0
      %v1830 = vrot.slane %v1827, 7
      %v1832 = vsel %vm495, 0.0, %v1830
      %v1833 = vld [vmem:[%s8] sm:$0xff]
      %v1834 = vld [vmem:[%s8 + $0x8] sm:$0xff]
      %v1835 = vld [vmem:[%s8 + $0x10] sm:$0xff]
      %v1836 = vld [vmem:[%s8 + $0x18] sm:$0xff]
      %v1837 = vld [vmem:[%s8 + $0x20] sm:$0xff]
      %v1838 = vld [vmem:[%s8 + $0x28] sm:$0xff]
      %v1839 = vld [vmem:[%s8 + $0x30] sm:$0xff]
      %v1840 = vld [vmem:[%s8 + $0x38] sm:$0xff]
      %v1841 = vld [vmem:[%s8 + $0x40] sm:$0xff]
      %v1842 = vld [vmem:[%s8 + $0x48] sm:$0xff]
      %v1843 = vld [vmem:[%s8 + $0x50] sm:$0xff]
      %v1844 = vld [vmem:[%s8 + $0x58] sm:$0xff]
      %v1845 = vld [vmem:[%s8 + $0x60] sm:$0xff]
      %v1846 = vld [vmem:[%s8 + $0x68] sm:$0xff]
      %v1847 = vld [vmem:[%s8 + $0x70] sm:$0xff]
      %v1848 = vld [vmem:[%s8 + $0x78] sm:$0xff]
      %s1849 = scalar_lea.vmem %s8, 128
      %v1850 = vld [vmem:[%s1849] sm:$0xff]
      %v1851 = vld [vmem:[%s1849 + $0x8] sm:$0xff]
      %v1852 = vld [vmem:[%s1849 + $0x10] sm:$0xff]
      %v1853 = vld [vmem:[%s1849 + $0x18] sm:$0xff]
      %v1854 = vld [vmem:[%s1849 + $0x20] sm:$0xff]
      %v1855 = vld [vmem:[%s1849 + $0x28] sm:$0xff]
      %v1856 = vld [vmem:[%s1849 + $0x30] sm:$0xff]
      %v1857 = vld [vmem:[%s1849 + $0x38] sm:$0xff]
      %v1858 = vld [vmem:[%s1849 + $0x40] sm:$0xff]
      %v1859 = vld [vmem:[%s1849 + $0x48] sm:$0xff]
      %v1860 = vld [vmem:[%s1849 + $0x50] sm:$0xff]
      %v1861 = vld [vmem:[%s1849 + $0x58] sm:$0xff]
      %v1862 = vld [vmem:[%s1849 + $0x60] sm:$0xff]
      %v1863 = vld [vmem:[%s1849 + $0x68] sm:$0xff]
      %v1864 = vld [vmem:[%s1849 + $0x70] sm:$0xff]
      %v1865 = vld [vmem:[%s1849 + $0x78] sm:$0xff]
      %1866 = vmatprep.subr.mxu0 0.0
      %1867 = vmatpush1.msra.mxu0 %v1850
      %1868 = vmatprep.subr.mxu0 0.0
      %1869 = vmatpush1.msra.mxu0 %v1851
      %1870 = vmatprep.subr.mxu0 0.0
      %1871 = vmatpush1.msra.mxu0 %v1852
      %1872 = vmatprep.subr.mxu0 0.0
      %1873 = vmatpush1.msra.mxu0 %v1853
      %1874 = vmatprep.subr.mxu0 0.0
      %1875 = vmatpush1.msra.mxu0 %v1854
      %1876 = vmatprep.subr.mxu0 0.0
      %1877 = vmatpush1.msra.mxu0 %v1855
      %1878 = vmatprep.subr.mxu0 0.0
      %1879 = vmatpush1.msra.mxu0 %v1856
      %1880 = vmatprep.subr.mxu0 0.0
      %1881 = vmatpush1.msra.mxu0 %v1857
      %1882 = vmatprep.subr.mxu0 0.0
      %1883 = vmatpush1.msra.mxu0 %v1858
      %1884 = vmatprep.subr.mxu0 0.0
      %1885 = vmatpush1.msra.mxu0 %v1859
      %1886 = vmatprep.subr.mxu0 0.0
      %1887 = vmatpush1.msra.mxu0 %v1860
      %1888 = vmatprep.subr.mxu0 0.0
      %1889 = vmatpush1.msra.mxu0 %v1861
      %1890 = vmatprep.subr.mxu0 0.0
      %1891 = vmatpush1.msra.mxu0 %v1862
      %1892 = vmatprep.subr.mxu0 0.0
      %1893 = vmatpush1.msra.mxu0 %v1863
      %1894 = vmatprep.subr.mxu0 0.0
      %1895 = vmatpush1.msra.mxu0 %v1864
      %1896 = vmatprep.subr.mxu0 0.0
      %1897 = vmatpush1.msra.mxu0 %v1865
      %1898 = vmatprep.subr.mxu0 0.0
      %1899 = vmatpush1.msra.mxu0 0.0
      %1900 = vmatprep.subr.mxu0 0.0
      %1901 = vmatpush1.msra.mxu0 0.0
      %1902 = vmatprep.subr.mxu0 0.0
      %1903 = vmatpush1.msra.mxu0 0.0
      %1904 = vmatprep.subr.mxu0 0.0
      %1905 = vmatpush1.msra.mxu0 0.0
      %1906 = vmatprep.subr.mxu0 0.0
      %1907 = vmatpush1.msra.mxu0 0.0
      %1908 = vmatprep.subr.mxu0 0.0
      %1909 = vmatpush1.msra.mxu0 0.0
      %1910 = vmatprep.subr.mxu0 0.0
      %1911 = vmatpush1.msra.mxu0 0.0
      %1912 = vmatprep.subr.mxu0 0.0
      %1913 = vmatpush1.msra.mxu0 0.0
      %1914 = vmatprep.subr.mxu0 0.0
      %1915 = vmatpush1.msra.mxu0 0.0
      %1916 = vmatprep.subr.mxu0 0.0
      %1917 = vmatpush1.msra.mxu0 0.0
      %1918 = vmatprep.subr.mxu0 0.0
      %1919 = vmatpush1.msra.mxu0 0.0
      %1920 = vmatprep.subr.mxu0 0.0
      %1921 = vmatpush1.msra.mxu0 0.0
      %1922 = vmatprep.subr.mxu0 0.0
      %1923 = vmatpush1.msra.mxu0 0.0
      %1924 = vmatprep.subr.mxu0 0.0
      %1925 = vmatpush1.msra.mxu0 0.0
      %1926 = vmatprep.subr.mxu0 0.0
      %1927 = vmatpush1.msra.mxu0 0.0
      %1928 = vmatprep.subr.mxu0 0.0
      %1929 = vmatpush1.msra.mxu0 0.0
      %1930 = vmatprep.mubr.f32.mxu0 0.0
      %1931 = vmatmul.mubr.f32.gmra.mrb[0].mxu0 %v1827
      %v1932 = vpop.f32.mrb[0].mxu0
      %v1933 = vadd.f32 0.0, %v1932
      %v1934 = vpop.f32.mrb[0].mxu0
      %1935 = vmatprep.mubr.f32.mxu0 0.0
      %1936 = vmatmul.mubr.f32.gmra.mrb[0].mxu0 %v1828
      %v1937 = vpop.f32.mrb[0].mxu0
      %v1938 = vadd.f32 0.0, %v1937
      %v1939 = vpop.f32.mrb[0].mxu0
      %1940 = vdwg.mxu0
      %1941 = vmatprep.subr.mxu0 0.0
      %1942 = vmatpush1.msra.mxu0 %v1833
      %1943 = vmatprep.subr.mxu0 0.0
      %1944 = vmatpush1.msra.mxu0 %v1834
      %1945 = vmatprep.subr.mxu0 0.0
      %1946 = vmatpush1.msra.mxu0 %v1835
      %1947 = vmatprep.subr.mxu0 0.0
      %1948 = vmatpush1.msra.mxu0 %v1836
      %1949 = vmatprep.subr.mxu0 0.0
      %1950 = vmatpush1.msra.mxu0 %v1837
      %1951 = vmatprep.subr.mxu0 0.0
      %1952 = vmatpush1.msra.mxu0 %v1838
      %1953 = vmatprep.subr.mxu0 0.0
      %1954 = vmatpush1.msra.mxu0 %v1839
      %1955 = vmatprep.subr.mxu0 0.0
      %1956 = vmatpush1.msra.mxu0 %v1840
      %1957 = vmatprep.subr.mxu0 0.0
      %1958 = vmatpush1.msra.mxu0 %v1841
      %1959 = vmatprep.subr.mxu0 0.0
      %1960 = vmatpush1.msra.mxu0 %v1842
      %1961 = vmatprep.subr.mxu0 0.0
      %1962 = vmatpush1.msra.mxu0 %v1843
      %1963 = vmatprep.subr.mxu0 0.0
      %1964 = vmatpush1.msra.mxu0 %v1844
      %1965 = vmatprep.subr.mxu0 0.0
      %1966 = vmatpush1.msra.mxu0 %v1845
      %1967 = vmatprep.subr.mxu0 0.0
      %1968 = vmatpush1.msra.mxu0 %v1846
      %1969 = vmatprep.subr.mxu0 0.0
      %1970 = vmatpush1.msra.mxu0 %v1847
      %1971 = vmatprep.subr.mxu0 0.0
      %1972 = vmatpush1.msra.mxu0 %v1848
      %1973 = vmatprep.subr.mxu0 0.0
      %1974 = vmatpush1.msra.mxu0 0.0
      %1975 = vmatprep.subr.mxu0 0.0
      %1976 = vmatpush1.msra.mxu0 0.0
      %1977 = vmatprep.subr.mxu0 0.0
      %1978 = vmatpush1.msra.mxu0 0.0
      %1979 = vmatprep.subr.mxu0 0.0
      %1980 = vmatpush1.msra.mxu0 0.0
      %1981 = vmatprep.subr.mxu0 0.0
      %1982 = vmatpush1.msra.mxu0 0.0
      %1983 = vmatprep.subr.mxu0 0.0
      %1984 = vmatpush1.msra.mxu0 0.0
      %1985 = vmatprep.subr.mxu0 0.0
      %1986 = vmatpush1.msra.mxu0 0.0
      %1987 = vmatprep.subr.mxu0 0.0
      %1988 = vmatpush1.msra.mxu0 0.0
      %1989 = vmatprep.subr.mxu0 0.0
      %1990 = vmatpush1.msra.mxu0 0.0
      %1991 = vmatprep.subr.mxu0 0.0
      %1992 = vmatpush1.msra.mxu0 0.0
      %1993 = vmatprep.subr.mxu0 0.0
      %1994 = vmatpush1.msra.mxu0 0.0
      %1995 = vmatprep.subr.mxu0 0.0
      %1996 = vmatpush1.msra.mxu0 0.0
      %1997 = vmatprep.subr.mxu0 0.0
      %1998 = vmatpush1.msra.mxu0 0.0
      %1999 = vmatprep.subr.mxu0 0.0
      %2000 = vmatpush1.msra.mxu0 0.0
      %2001 = vmatprep.subr.mxu0 0.0
      %2002 = vmatpush1.msra.mxu0 0.0
      %2003 = vmatprep.subr.mxu0 0.0
      %2004 = vmatpush1.msra.mxu0 0.0
      %2005 = vmatprep.mubr.f32.mxu0 0.0
      %2006 = vmatmul.mubr.f32.gmra.mrb[0].mxu0 %v1832
      %v2007 = vpop.f32.mrb[0].mxu0
      %v2008 = vadd.f32 %v1933, %v2007
      %v2009 = vpop.f32.mrb[0].mxu0
      %2010 = vmatprep.mubr.f32.mxu0 0.0
      %2011 = vmatmul.mubr.f32.gmra.mrb[0].mxu0 %v1830
      %v2012 = vpop.f32.mrb[0].mxu0
      %v2013 = vadd.f32 %v1938, %v2012
      %v2014 = vpop.f32.mrb[0].mxu0
      %2015 = vdwg.mxu0
      %v2017 = vrot.slane %v1827, 1
      %v2018 = vrot.slane %v1828, 1
      %v2019 = vsel %vm859, %v2017, %v2018
      %s2021 = scalar_lea.vmem %s8, 256
      %v2022 = vld [vmem:[%s2021] sm:$0xff]
      %v2023 = vld [vmem:[%s2021 + $0x8] sm:$0xff]
      %v2024 = vld [vmem:[%s2021 + $0x10] sm:$0xff]
      %v2025 = vld [vmem:[%s2021 + $0x18] sm:$0xff]
      %v2026 = vld [vmem:[%s2021 + $0x20] sm:$0xff]
      %v2027 = vld [vmem:[%s2021 + $0x28] sm:$0xff]
      %v2028 = vld [vmem:[%s2021 + $0x30] sm:$0xff]
      %v2029 = vld [vmem:[%s2021 + $0x38] sm:$0xff]
      %v2030 = vld [vmem:[%s2021 + $0x40] sm:$0xff]
      %v2031 = vld [vmem:[%s2021 + $0x48] sm:$0xff]
      %v2032 = vld [vmem:[%s2021 + $0x50] sm:$0xff]
      %v2033 = vld [vmem:[%s2021 + $0x58] sm:$0xff]
      %v2034 = vld [vmem:[%s2021 + $0x60] sm:$0xff]
      %v2035 = vld [vmem:[%s2021 + $0x68] sm:$0xff]
      %v2036 = vld [vmem:[%s2021 + $0x70] sm:$0xff]
      %v2037 = vld [vmem:[%s2021 + $0x78] sm:$0xff]
      %2038 = vmatprep.subr.mxu0 0.0
      %2039 = vmatpush1.msra.mxu0 %v2022
      %2040 = vmatprep.subr.mxu0 0.0
      %2041 = vmatpush1.msra.mxu0 %v2023
      %2042 = vmatprep.subr.mxu0 0.0
      %2043 = vmatpush1.msra.mxu0 %v2024
      %2044 = vmatprep.subr.mxu0 0.0
      %2045 = vmatpush1.msra.mxu0 %v2025
      %2046 = vmatprep.subr.mxu0 0.0
      %2047 = vmatpush1.msra.mxu0 %v2026
      %2048 = vmatprep.subr.mxu0 0.0
      %2049 = vmatpush1.msra.mxu0 %v2027
      %2050 = vmatprep.subr.mxu0 0.0
      %2051 = vmatpush1.msra.mxu0 %v2028
      %2052 = vmatprep.subr.mxu0 0.0
      %2053 = vmatpush1.msra.mxu0 %v2029
      %2054 = vmatprep.subr.mxu0 0.0
      %2055 = vmatpush1.msra.mxu0 %v2030
      %2056 = vmatprep.subr.mxu0 0.0
      %2057 = vmatpush1.msra.mxu0 %v2031
      %2058 = vmatprep.subr.mxu0 0.0
      %2059 = vmatpush1.msra.mxu0 %v2032
      %2060 = vmatprep.subr.mxu0 0.0
      %2061 = vmatpush1.msra.mxu0 %v2033
      %2062 = vmatprep.subr.mxu0 0.0
      %2063 = vmatpush1.msra.mxu0 %v2034
      %2064 = vmatprep.subr.mxu0 0.0
      %2065 = vmatpush1.msra.mxu0 %v2035
      %2066 = vmatprep.subr.mxu0 0.0
      %2067 = vmatpush1.msra.mxu0 %v2036
      %2068 = vmatprep.subr.mxu0 0.0
      %2069 = vmatpush1.msra.mxu0 %v2037
      %2070 = vmatprep.subr.mxu0 0.0
      %2071 = vmatpush1.msra.mxu0 0.0
      %2072 = vmatprep.subr.mxu0 0.0
      %2073 = vmatpush1.msra.mxu0 0.0
      %2074 = vmatprep.subr.mxu0 0.0
      %2075 = vmatpush1.msra.mxu0 0.0
      %2076 = vmatprep.subr.mxu0 0.0
      %2077 = vmatpush1.msra.mxu0 0.0
      %2078 = vmatprep.subr.mxu0 0.0
      %2079 = vmatpush1.msra.mxu0 0.0
      %2080 = vmatprep.subr.mxu0 0.0
      %2081 = vmatpush1.msra.mxu0 0.0
      %2082 = vmatprep.subr.mxu0 0.0
      %2083 = vmatpush1.msra.mxu0 0.0
      %2084 = vmatprep.subr.mxu0 0.0
      %2085 = vmatpush1.msra.mxu0 0.0
      %2086 = vmatprep.subr.mxu0 0.0
      %2087 = vmatpush1.msra.mxu0 0.0
      %2088 = vmatprep.subr.mxu0 0.0
      %2089 = vmatpush1.msra.mxu0 0.0
      %2090 = vmatprep.subr.mxu0 0.0
      %2091 = vmatpush1.msra.mxu0 0.0
      %2092 = vmatprep.subr.mxu0 0.0
      %2093 = vmatpush1.msra.mxu0 0.0
      %2094 = vmatprep.subr.mxu0 0.0
      %2095 = vmatpush1.msra.mxu0 0.0
      %2096 = vmatprep.subr.mxu0 0.0
      %2097 = vmatpush1.msra.mxu0 0.0
      %2098 = vmatprep.subr.mxu0 0.0
      %2099 = vmatpush1.msra.mxu0 0.0
      %2100 = vmatprep.subr.mxu0 0.0
      %2101 = vmatpush1.msra.mxu0 0.0
      %2102 = vmatprep.mubr.f32.mxu0 0.0
      %2103 = vmatmul.mubr.f32.gmra.mrb[0].mxu0 %v2019
      %v2104 = vpop.f32.mrb[0].mxu0
      %v2105 = vadd.f32 0.0, %v2104
      %v2106 = vpop.f32.mrb[0].mxu0
      %2107 = vmatprep.mubr.f32.mxu0 0.0
      %2108 = vmatmul.mubr.f32.gmra.mrb[0].mxu0 0.0
      %v2109 = vpop.f32.mrb[0].mxu0
      %v2110 = vadd.f32 0.0, %v2109
      %v2111 = vpop.f32.mrb[0].mxu0
      %2112 = vdwg.mxu0
      %v2113 = vadd.f32 %v2008, %v2105
      %v2114 = vadd.f32 %v2013, %v2110
      %v2115 = vld [vmem:[%s9] sm:$0x1]
      %v2117 = vlaneseq
      %v2118 = vshrl.u32 %v2117, 7
      %v2119 = vsub.s32 0, %v2118
      %v2120 = vrot.slane %v2115, %v2119
      %v2122 = vadd.f32 %v2113, %v2120
      %v2123 = vadd.f32 %v2114, %v2120
      %v2124 = vmax.f32 %v2122, 0.0
      %v2125 = vmax.f32 %v2123, 0.0
      %v2126 = vadd.f32 %v2124, %v1827
      %v2127 = vadd.f32 %v2125, %v1828
      %v2129 = vrot.slane %v2126, 7
      %v2131 = vsel %vm495, 0.0, %v2129
      %v2132 = vld [vmem:[%s10] sm:$0xff]
      %v2133 = vld [vmem:[%s10 + $0x8] sm:$0xff]
      %v2134 = vld [vmem:[%s10 + $0x10] sm:$0xff]
      %v2135 = vld [vmem:[%s10 + $0x18] sm:$0xff]
      %v2136 = vld [vmem:[%s10 + $0x20] sm:$0xff]
      %v2137 = vld [vmem:[%s10 + $0x28] sm:$0xff]
      %v2138 = vld [vmem:[%s10 + $0x30] sm:$0xff]
      %v2139 = vld [vmem:[%s10 + $0x38] sm:$0xff]
      %v2140 = vld [vmem:[%s10 + $0x40] sm:$0xff]
      %v2141 = vld [vmem:[%s10 + $0x48] sm:$0xff]
      %v2142 = vld [vmem:[%s10 + $0x50] sm:$0xff]
      %v2143 = vld [vmem:[%s10 + $0x58] sm:$0xff]
      %v2144 = vld [vmem:[%s10 + $0x60] sm:$0xff]
      %v2145 = vld [vmem:[%s10 + $0x68] sm:$0xff]
      %v2146 = vld [vmem:[%s10 + $0x70] sm:$0xff]
      %v2147 = vld [vmem:[%s10 + $0x78] sm:$0xff]
      %s2148 = scalar_lea.vmem %s10, 128
      %v2149 = vld [vmem:[%s2148] sm:$0xff]
      %v2150 = vld [vmem:[%s2148 + $0x8] sm:$0xff]
      %v2151 = vld [vmem:[%s2148 + $0x10] sm:$0xff]
      %v2152 = vld [vmem:[%s2148 + $0x18] sm:$0xff]
      %v2153 = vld [vmem:[%s2148 + $0x20] sm:$0xff]
      %v2154 = vld [vmem:[%s2148 + $0x28] sm:$0xff]
      %v2155 = vld [vmem:[%s2148 + $0x30] sm:$0xff]
      %v2156 = vld [vmem:[%s2148 + $0x38] sm:$0xff]
      %v2157 = vld [vmem:[%s2148 + $0x40] sm:$0xff]
      %v2158 = vld [vmem:[%s2148 + $0x48] sm:$0xff]
      %v2159 = vld [vmem:[%s2148 + $0x50] sm:$0xff]
      %v2160 = vld [vmem:[%s2148 + $0x58] sm:$0xff]
      %v2161 = vld [vmem:[%s2148 + $0x60] sm:$0xff]
      %v2162 = vld [vmem:[%s2148 + $0x68] sm:$0xff]
      %v2163 = vld [vmem:[%s2148 + $0x70] sm:$0xff]
      %v2164 = vld [vmem:[%s2148 + $0x78] sm:$0xff]
      %2165 = vmatprep.subr.mxu0 0.0
      %2166 = vmatpush1.msra.mxu0 %v2149
      %2167 = vmatprep.subr.mxu0 0.0
      %2168 = vmatpush1.msra.mxu0 %v2150
      %2169 = vmatprep.subr.mxu0 0.0
      %2170 = vmatpush1.msra.mxu0 %v2151
      %2171 = vmatprep.subr.mxu0 0.0
      %2172 = vmatpush1.msra.mxu0 %v2152
      %2173 = vmatprep.subr.mxu0 0.0
      %2174 = vmatpush1.msra.mxu0 %v2153
      %2175 = vmatprep.subr.mxu0 0.0
      %2176 = vmatpush1.msra.mxu0 %v2154
      %2177 = vmatprep.subr.mxu0 0.0
      %2178 = vmatpush1.msra.mxu0 %v2155
      %2179 = vmatprep.subr.mxu0 0.0
      %2180 = vmatpush1.msra.mxu0 %v2156
      %2181 = vmatprep.subr.mxu0 0.0
      %2182 = vmatpush1.msra.mxu0 %v2157
      %2183 = vmatprep.subr.mxu0 0.0
      %2184 = vmatpush1.msra.mxu0 %v2158
      %2185 = vmatprep.subr.mxu0 0.0
      %2186 = vmatpush1.msra.mxu0 %v2159
      %2187 = vmatprep.subr.mxu0 0.0
      %2188 = vmatpush1.msra.mxu0 %v2160
      %2189 = vmatprep.subr.mxu0 0.0
      %2190 = vmatpush1.msra.mxu0 %v2161
      %2191 = vmatprep.subr.mxu0 0.0
      %2192 = vmatpush1.msra.mxu0 %v2162
      %2193 = vmatprep.subr.mxu0 0.0
      %2194 = vmatpush1.msra.mxu0 %v2163
      %2195 = vmatprep.subr.mxu0 0.0
      %2196 = vmatpush1.msra.mxu0 %v2164
      %2197 = vmatprep.subr.mxu0 0.0
      %2198 = vmatpush1.msra.mxu0 0.0
      %2199 = vmatprep.subr.mxu0 0.0
      %2200 = vmatpush1.msra.mxu0 0.0
      %2201 = vmatprep.subr.mxu0 0.0
      %2202 = vmatpush1.msra.mxu0 0.0
      %2203 = vmatprep.subr.mxu0 0.0
      %2204 = vmatpush1.msra.mxu0 0.0
      %2205 = vmatprep.subr.mxu0 0.0
      %2206 = vmatpush1.msra.mxu0 0.0
      %2207 = vmatprep.subr.mxu0 0.0
      %2208 = vmatpush1.msra.mxu0 0.0
      %2209 = vmatprep.subr.mxu0 0.0
      %2210 = vmatpush1.msra.mxu0 0.0
      %2211 = vmatprep.subr.mxu0 0.0
      %2212 = vmatpush1.msra.mxu0 0.0
      %2213 = vmatprep.subr.mxu0 0.0
      %2214 = vmatpush1.msra.mxu0 0.0
      %2215 = vmatprep.subr.mxu0 0.0
      %2216 = vmatpush1.msra.mxu0 0.0
      %2217 = vmatprep.subr.mxu0 0.0
      %2218 = vmatpush1.msra.mxu0 0.0
      %2219 = vmatprep.subr.mxu0 0.0
      %2220 = vmatpush1.msra.mxu0 0.0
      %2221 = vmatprep.subr.mxu0 0.0
      %2222 = vmatpush1.msra.mxu0 0.0
      %2223 = vmatprep.subr.mxu0 0.0
      %2224 = vmatpush1.msra.mxu0 0.0
      %2225 = vmatprep.subr.mxu0 0.0
      %2226 = vmatpush1.msra.mxu0 0.0
      %2227 = vmatprep.subr.mxu0 0.0
      %2228 = vmatpush1.msra.mxu0 0.0
      %2229 = vmatprep.mubr.f32.mxu0 0.0
      %2230 = vmatmul.mubr.f32.gmra.mrb[0].mxu0 %v2126
      %v2231 = vpop.f32.mrb[0].mxu0
      %v2232 = vadd.f32 0.0, %v2231
      %v2233 = vpop.f32.mrb[0].mxu0
      %2234 = vmatprep.mubr.f32.mxu0 0.0
      %2235 = vmatmul.mubr.f32.gmra.mrb[0].mxu0 %v2127
      %v2236 = vpop.f32.mrb[0].mxu0
      %v2237 = vadd.f32 0.0, %v2236
      %v2238 = vpop.f32.mrb[0].mxu0
      %2239 = vdwg.mxu0
      %2240 = vmatprep.subr.mxu0 0.0
      %2241 = vmatpush1.msra.mxu0 %v2132
      %2242 = vmatprep.subr.mxu0 0.0
      %2243 = vmatpush1.msra.mxu0 %v2133
      %2244 = vmatprep.subr.mxu0 0.0
      %2245 = vmatpush1.msra.mxu0 %v2134
      %2246 = vmatprep.subr.mxu0 0.0
      %2247 = vmatpush1.msra.mxu0 %v2135
      %2248 = vmatprep.subr.mxu0 0.0
      %2249 = vmatpush1.msra.mxu0 %v2136
      %2250 = vmatprep.subr.mxu0 0.0
      %2251 = vmatpush1.msra.mxu0 %v2137
      %2252 = vmatprep.subr.mxu0 0.0
      %2253 = vmatpush1.msra.mxu0 %v2138
      %2254 = vmatprep.subr.mxu0 0.0
      %2255 = vmatpush1.msra.mxu0 %v2139
      %2256 = vmatprep.subr.mxu0 0.0
      %2257 = vmatpush1.msra.mxu0 %v2140
      %2258 = vmatprep.subr.mxu0 0.0
      %2259 = vmatpush1.msra.mxu0 %v2141
      %2260 = vmatprep.subr.mxu0 0.0
      %2261 = vmatpush1.msra.mxu0 %v2142
      %2262 = vmatprep.subr.mxu0 0.0
      %2263 = vmatpush1.msra.mxu0 %v2143
      %2264 = vmatprep.subr.mxu0 0.0
      %2265 = vmatpush1.msra.mxu0 %v2144
      %2266 = vmatprep.subr.mxu0 0.0
      %2267 = vmatpush1.msra.mxu0 %v2145
      %2268 = vmatprep.subr.mxu0 0.0
      %2269 = vmatpush1.msra.mxu0 %v2146
      %2270 = vmatprep.subr.mxu0 0.0
      %2271 = vmatpush1.msra.mxu0 %v2147
      %2272 = vmatprep.subr.mxu0 0.0
      %2273 = vmatpush1.msra.mxu0 0.0
      %2274 = vmatprep.subr.mxu0 0.0
      %2275 = vmatpush1.msra.mxu0 0.0
      %2276 = vmatprep.subr.mxu0 0.0
      %2277 = vmatpush1.msra.mxu0 0.0
      %2278 = vmatprep.subr.mxu0 0.0
      %2279 = vmatpush1.msra.mxu0 0.0
      %2280 = vmatprep.subr.mxu0 0.0
      %2281 = vmatpush1.msra.mxu0 0.0
      %2282 = vmatprep.subr.mxu0 0.0
      %2283 = vmatpush1.msra.mxu0 0.0
      %2284 = vmatprep.subr.mxu0 0.0
      %2285 = vmatpush1.msra.mxu0 0.0
      %2286 = vmatprep.subr.mxu0 0.0
      %2287 = vmatpush1.msra.mxu0 0.0
      %2288 = vmatprep.subr.mxu0 0.0
      %2289 = vmatpush1.msra.mxu0 0.0
      %2290 = vmatprep.subr.mxu0 0.0
      %2291 = vmatpush1.msra.mxu0 0.0
      %2292 = vmatprep.subr.mxu0 0.0
      %2293 = vmatpush1.msra.mxu0 0.0
      %2294 = vmatprep.subr.mxu0 0.0
      %2295 = vmatpush1.msra.mxu0 0.0
      %2296 = vmatprep.subr.mxu0 0.0
      %2297 = vmatpush1.msra.mxu0 0.0
      %2298 = vmatprep.subr.mxu0 0.0
      %2299 = vmatpush1.msra.mxu0 0.0
      %2300 = vmatprep.subr.mxu0 0.0
      %2301 = vmatpush1.msra.mxu0 0.0
      %2302 = vmatprep.subr.mxu0 0.0
      %2303 = vmatpush1.msra.mxu0 0.0
      %2304 = vmatprep.mubr.f32.mxu0 0.0
      %2305 = vmatmul.mubr.f32.gmra.mrb[0].mxu0 %v2131
      %v2306 = vpop.f32.mrb[0].mxu0
      %v2307 = vadd.f32 %v2232, %v2306
      %v2308 = vpop.f32.mrb[0].mxu0
      %2309 = vmatprep.mubr.f32.mxu0 0.0
      %2310 = vmatmul.mubr.f32.gmra.mrb[0].mxu0 %v2129
      %v2311 = vpop.f32.mrb[0].mxu0
      %v2312 = vadd.f32 %v2237, %v2311
      %v2313 = vpop.f32.mrb[0].mxu0
      %2314 = vdwg.mxu0
      %v2316 = vrot.slane %v2126, 1
      %v2317 = vrot.slane %v2127, 1
      %v2318 = vsel %vm859, %v2316, %v2317
      %s2320 = scalar_lea.vmem %s10, 256
      %v2321 = vld [vmem:[%s2320] sm:$0xff]
      %v2322 = vld [vmem:[%s2320 + $0x8] sm:$0xff]
      %v2323 = vld [vmem:[%s2320 + $0x10] sm:$0xff]
      %v2324 = vld [vmem:[%s2320 + $0x18] sm:$0xff]
      %v2325 = vld [vmem:[%s2320 + $0x20] sm:$0xff]
      %v2326 = vld [vmem:[%s2320 + $0x28] sm:$0xff]
      %v2327 = vld [vmem:[%s2320 + $0x30] sm:$0xff]
      %v2328 = vld [vmem:[%s2320 + $0x38] sm:$0xff]
      %v2329 = vld [vmem:[%s2320 + $0x40] sm:$0xff]
      %v2330 = vld [vmem:[%s2320 + $0x48] sm:$0xff]
      %v2331 = vld [vmem:[%s2320 + $0x50] sm:$0xff]
      %v2332 = vld [vmem:[%s2320 + $0x58] sm:$0xff]
      %v2333 = vld [vmem:[%s2320 + $0x60] sm:$0xff]
      %v2334 = vld [vmem:[%s2320 + $0x68] sm:$0xff]
      %v2335 = vld [vmem:[%s2320 + $0x70] sm:$0xff]
      %v2336 = vld [vmem:[%s2320 + $0x78] sm:$0xff]
      %2337 = vmatprep.subr.mxu0 0.0
      %2338 = vmatpush1.msra.mxu0 %v2321
      %2339 = vmatprep.subr.mxu0 0.0
      %2340 = vmatpush1.msra.mxu0 %v2322
      %2341 = vmatprep.subr.mxu0 0.0
      %2342 = vmatpush1.msra.mxu0 %v2323
      %2343 = vmatprep.subr.mxu0 0.0
      %2344 = vmatpush1.msra.mxu0 %v2324
      %2345 = vmatprep.subr.mxu0 0.0
      %2346 = vmatpush1.msra.mxu0 %v2325
      %2347 = vmatprep.subr.mxu0 0.0
      %2348 = vmatpush1.msra.mxu0 %v2326
      %2349 = vmatprep.subr.mxu0 0.0
      %2350 = vmatpush1.msra.mxu0 %v2327
      %2351 = vmatprep.subr.mxu0 0.0
      %2352 = vmatpush1.msra.mxu0 %v2328
      %2353 = vmatprep.subr.mxu0 0.0
      %2354 = vmatpush1.msra.mxu0 %v2329
      %2355 = vmatprep.subr.mxu0 0.0
      %2356 = vmatpush1.msra.mxu0 %v2330
      %2357 = vmatprep.subr.mxu0 0.0
      %2358 = vmatpush1.msra.mxu0 %v2331
      %2359 = vmatprep.subr.mxu0 0.0
      %2360 = vmatpush1.msra.mxu0 %v2332
      %2361 = vmatprep.subr.mxu0 0.0
      %2362 = vmatpush1.msra.mxu0 %v2333
      %2363 = vmatprep.subr.mxu0 0.0
      %2364 = vmatpush1.msra.mxu0 %v2334
      %2365 = vmatprep.subr.mxu0 0.0
      %2366 = vmatpush1.msra.mxu0 %v2335
      %2367 = vmatprep.subr.mxu0 0.0
      %2368 = vmatpush1.msra.mxu0 %v2336
      %2369 = vmatprep.subr.mxu0 0.0
      %2370 = vmatpush1.msra.mxu0 0.0
      %2371 = vmatprep.subr.mxu0 0.0
      %2372 = vmatpush1.msra.mxu0 0.0
      %2373 = vmatprep.subr.mxu0 0.0
      %2374 = vmatpush1.msra.mxu0 0.0
      %2375 = vmatprep.subr.mxu0 0.0
      %2376 = vmatpush1.msra.mxu0 0.0
      %2377 = vmatprep.subr.mxu0 0.0
      %2378 = vmatpush1.msra.mxu0 0.0
      %2379 = vmatprep.subr.mxu0 0.0
      %2380 = vmatpush1.msra.mxu0 0.0
      %2381 = vmatprep.subr.mxu0 0.0
      %2382 = vmatpush1.msra.mxu0 0.0
      %2383 = vmatprep.subr.mxu0 0.0
      %2384 = vmatpush1.msra.mxu0 0.0
      %2385 = vmatprep.subr.mxu0 0.0
      %2386 = vmatpush1.msra.mxu0 0.0
      %2387 = vmatprep.subr.mxu0 0.0
      %2388 = vmatpush1.msra.mxu0 0.0
      %2389 = vmatprep.subr.mxu0 0.0
      %2390 = vmatpush1.msra.mxu0 0.0
      %2391 = vmatprep.subr.mxu0 0.0
      %2392 = vmatpush1.msra.mxu0 0.0
      %2393 = vmatprep.subr.mxu0 0.0
      %2394 = vmatpush1.msra.mxu0 0.0
      %2395 = vmatprep.subr.mxu0 0.0
      %2396 = vmatpush1.msra.mxu0 0.0
      %2397 = vmatprep.subr.mxu0 0.0
      %2398 = vmatpush1.msra.mxu0 0.0
      %2399 = vmatprep.subr.mxu0 0.0
      %2400 = vmatpush1.msra.mxu0 0.0
      %2401 = vmatprep.mubr.f32.mxu0 0.0
      %2402 = vmatmul.mubr.f32.gmra.mrb[0].mxu0 %v2318
      %v2403 = vpop.f32.mrb[0].mxu0
      %v2404 = vadd.f32 0.0, %v2403
      %v2405 = vpop.f32.mrb[0].mxu0
      %2406 = vmatprep.mubr.f32.mxu0 0.0
      %2407 = vmatmul.mubr.f32.gmra.mrb[0].mxu0 0.0
      %v2408 = vpop.f32.mrb[0].mxu0
      %v2409 = vadd.f32 0.0, %v2408
      %v2410 = vpop.f32.mrb[0].mxu0
      %2411 = vdwg.mxu0
      %v2412 = vadd.f32 %v2307, %v2404
      %v2413 = vadd.f32 %v2312, %v2409
      %v2414 = vld [vmem:[%s11] sm:$0x1]
      %v2416 = vlaneseq
      %v2417 = vshrl.u32 %v2416, 7
      %v2418 = vsub.s32 0, %v2417
      %v2419 = vrot.slane %v2414, %v2418
      %v2421 = vadd.f32 %v2412, %v2419
      %v2422 = vadd.f32 %v2413, %v2419
      %v2423 = vmax.f32 %v2421, 0.0
      %v2424 = vmax.f32 %v2422, 0.0
      %v2425 = vadd.f32 %v2423, %v2126
      %v2426 = vadd.f32 %v2424, %v2127
      %v2427 = vld [vmem:[%s13] sm:$0xff]
      %v2428 = vld [vmem:[%s13 + $0x8] sm:$0xff]
      %v2429 = vld [vmem:[%s13 + $0x10] sm:$0xff]
      %v2430 = vld [vmem:[%s13 + $0x18] sm:$0xff]
      %v2431 = vld [vmem:[%s13 + $0x20] sm:$0xff]
      %v2432 = vld [vmem:[%s13 + $0x28] sm:$0xff]
      %v2433 = vld [vmem:[%s13 + $0x30] sm:$0xff]
      %v2434 = vld [vmem:[%s13 + $0x38] sm:$0xff]
      %v2435 = vld [vmem:[%s13 + $0x40] sm:$0xff]
      %v2436 = vld [vmem:[%s13 + $0x48] sm:$0xff]
      %v2437 = vld [vmem:[%s13 + $0x50] sm:$0xff]
      %v2438 = vld [vmem:[%s13 + $0x58] sm:$0xff]
      %v2439 = vld [vmem:[%s13 + $0x60] sm:$0xff]
      %v2440 = vld [vmem:[%s13 + $0x68] sm:$0xff]
      %v2441 = vld [vmem:[%s13 + $0x70] sm:$0xff]
      %v2442 = vld [vmem:[%s13 + $0x78] sm:$0xff]
      %v2443 = vmax.f32 %v2425, 0.0
      %v2444 = vmax.f32 %v2426, 0.0
      %v2446 = vrot.slane %v2443, 7
      %v2448 = vsel %vm495, 0.0, %v2446
      %v2449 = vld [vmem:[%s12] sm:$0xff]
      %v2450 = vld [vmem:[%s12 + $0x8] sm:$0xff]
      %v2451 = vld [vmem:[%s12 + $0x10] sm:$0xff]
      %v2452 = vld [vmem:[%s12 + $0x18] sm:$0xff]
      %v2453 = vld [vmem:[%s12 + $0x20] sm:$0xff]
      %v2454 = vld [vmem:[%s12 + $0x28] sm:$0xff]
      %v2455 = vld [vmem:[%s12 + $0x30] sm:$0xff]
      %v2456 = vld [vmem:[%s12 + $0x38] sm:$0xff]
      %v2457 = vld [vmem:[%s12 + $0x40] sm:$0xff]
      %v2458 = vld [vmem:[%s12 + $0x48] sm:$0xff]
      %v2459 = vld [vmem:[%s12 + $0x50] sm:$0xff]
      %v2460 = vld [vmem:[%s12 + $0x58] sm:$0xff]
      %v2461 = vld [vmem:[%s12 + $0x60] sm:$0xff]
      %v2462 = vld [vmem:[%s12 + $0x68] sm:$0xff]
      %v2463 = vld [vmem:[%s12 + $0x70] sm:$0xff]
      %v2464 = vld [vmem:[%s12 + $0x78] sm:$0xff]
      %s2465 = scalar_lea.vmem %s12, 128
      %v2466 = vld [vmem:[%s2465] sm:$0xff]
      %v2467 = vld [vmem:[%s2465 + $0x8] sm:$0xff]
      %v2468 = vld [vmem:[%s2465 + $0x10] sm:$0xff]
      %v2469 = vld [vmem:[%s2465 + $0x18] sm:$0xff]
      %v2470 = vld [vmem:[%s2465 + $0x20] sm:$0xff]
      %v2471 = vld [vmem:[%s2465 + $0x28] sm:$0xff]
      %v2472 = vld [vmem:[%s2465 + $0x30] sm:$0xff]
      %v2473 = vld [vmem:[%s2465 + $0x38] sm:$0xff]
      %v2474 = vld [vmem:[%s2465 + $0x40] sm:$0xff]
      %v2475 = vld [vmem:[%s2465 + $0x48] sm:$0xff]
      %v2476 = vld [vmem:[%s2465 + $0x50] sm:$0xff]
      %v2477 = vld [vmem:[%s2465 + $0x58] sm:$0xff]
      %v2478 = vld [vmem:[%s2465 + $0x60] sm:$0xff]
      %v2479 = vld [vmem:[%s2465 + $0x68] sm:$0xff]
      %v2480 = vld [vmem:[%s2465 + $0x70] sm:$0xff]
      %v2481 = vld [vmem:[%s2465 + $0x78] sm:$0xff]
      %2482 = vmatprep.subr.mxu0 0.0
      %2483 = vmatpush1.msra.mxu0 %v2466
      %2484 = vmatprep.subr.mxu0 0.0
      %2485 = vmatpush1.msra.mxu0 %v2467
      %2486 = vmatprep.subr.mxu0 0.0
      %2487 = vmatpush1.msra.mxu0 %v2468
      %2488 = vmatprep.subr.mxu0 0.0
      %2489 = vmatpush1.msra.mxu0 %v2469
      %2490 = vmatprep.subr.mxu0 0.0
      %2491 = vmatpush1.msra.mxu0 %v2470
      %2492 = vmatprep.subr.mxu0 0.0
      %2493 = vmatpush1.msra.mxu0 %v2471
      %2494 = vmatprep.subr.mxu0 0.0
      %2495 = vmatpush1.msra.mxu0 %v2472
      %2496 = vmatprep.subr.mxu0 0.0
      %2497 = vmatpush1.msra.mxu0 %v2473
      %2498 = vmatprep.subr.mxu0 0.0
      %2499 = vmatpush1.msra.mxu0 %v2474
      %2500 = vmatprep.subr.mxu0 0.0
      %2501 = vmatpush1.msra.mxu0 %v2475
      %2502 = vmatprep.subr.mxu0 0.0
      %2503 = vmatpush1.msra.mxu0 %v2476
      %2504 = vmatprep.subr.mxu0 0.0
      %2505 = vmatpush1.msra.mxu0 %v2477
      %2506 = vmatprep.subr.mxu0 0.0
      %2507 = vmatpush1.msra.mxu0 %v2478
      %2508 = vmatprep.subr.mxu0 0.0
      %2509 = vmatpush1.msra.mxu0 %v2479
      %2510 = vmatprep.subr.mxu0 0.0
      %2511 = vmatpush1.msra.mxu0 %v2480
      %2512 = vmatprep.subr.mxu0 0.0
      %2513 = vmatpush1.msra.mxu0 %v2481
      %2514 = vmatprep.subr.mxu0 0.0
      %2515 = vmatpush1.msra.mxu0 0.0
      %2516 = vmatprep.subr.mxu0 0.0
      %2517 = vmatpush1.msra.mxu0 0.0
      %2518 = vmatprep.subr.mxu0 0.0
      %2519 = vmatpush1.msra.mxu0 0.0
      %2520 = vmatprep.subr.mxu0 0.0
      %2521 = vmatpush1.msra.mxu0 0.0
      %2522 = vmatprep.subr.mxu0 0.0
      %2523 = vmatpush1.msra.mxu0 0.0
      %2524 = vmatprep.subr.mxu0 0.0
      %2525 = vmatpush1.msra.mxu0 0.0
      %2526 = vmatprep.subr.mxu0 0.0
      %2527 = vmatpush1.msra.mxu0 0.0
      %2528 = vmatprep.subr.mxu0 0.0
      %2529 = vmatpush1.msra.mxu0 0.0
      %2530 = vmatprep.subr.mxu0 0.0
      %2531 = vmatpush1.msra.mxu0 0.0
      %2532 = vmatprep.subr.mxu0 0.0
      %2533 = vmatpush1.msra.mxu0 0.0
      %2534 = vmatprep.subr.mxu0 0.0
      %2535 = vmatpush1.msra.mxu0 0.0
      %2536 = vmatprep.subr.mxu0 0.0
      %2537 = vmatpush1.msra.mxu0 0.0
      %2538 = vmatprep.subr.mxu0 0.0
      %2539 = vmatpush1.msra.mxu0 0.0
      %2540 = vmatprep.subr.mxu0 0.0
      %2541 = vmatpush1.msra.mxu0 0.0
      %2542 = vmatprep.subr.mxu0 0.0
      %2543 = vmatpush1.msra.mxu0 0.0
      %2544 = vmatprep.subr.mxu0 0.0
      %2545 = vmatpush1.msra.mxu0 0.0
      %2546 = vmatprep.mubr.f32.mxu0 0.0
      %2547 = vmatmul.mubr.f32.gmra.mrb[0].mxu0 %v2443
      %v2548 = vpop.f32.mrb[0].mxu0
      %v2549 = vadd.f32 0.0, %v2548
      %v2550 = vpop.f32.mrb[0].mxu0
      %2551 = vmatprep.mubr.f32.mxu0 0.0
      %2552 = vmatmul.mubr.f32.gmra.mrb[0].mxu0 %v2444
      %v2553 = vpop.f32.mrb[0].mxu0
      %v2554 = vadd.f32 0.0, %v2553
      %v2555 = vpop.f32.mrb[0].mxu0
      %2556 = vdwg.mxu0
      %2557 = vmatprep.subr.mxu0 0.0
      %2558 = vmatpush1.msra.mxu0 %v2449
      %2559 = vmatprep.subr.mxu0 0.0
      %2560 = vmatpush1.msra.mxu0 %v2450
      %2561 = vmatprep.subr.mxu0 0.0
      %2562 = vmatpush1.msra.mxu0 %v2451
      %2563 = vmatprep.subr.mxu0 0.0
      %2564 = vmatpush1.msra.mxu0 %v2452
      %2565 = vmatprep.subr.mxu0 0.0
      %2566 = vmatpush1.msra.mxu0 %v2453
      %2567 = vmatprep.subr.mxu0 0.0
      %2568 = vmatpush1.msra.mxu0 %v2454
      %2569 = vmatprep.subr.mxu0 0.0
      %2570 = vmatpush1.msra.mxu0 %v2455
      %2571 = vmatprep.subr.mxu0 0.0
      %2572 = vmatpush1.msra.mxu0 %v2456
      %2573 = vmatprep.subr.mxu0 0.0
      %2574 = vmatpush1.msra.mxu0 %v2457
      %2575 = vmatprep.subr.mxu0 0.0
      %2576 = vmatpush1.msra.mxu0 %v2458
      %2577 = vmatprep.subr.mxu0 0.0
      %2578 = vmatpush1.msra.mxu0 %v2459
      %2579 = vmatprep.subr.mxu0 0.0
      %2580 = vmatpush1.msra.mxu0 %v2460
      %2581 = vmatprep.subr.mxu0 0.0
      %2582 = vmatpush1.msra.mxu0 %v2461
      %2583 = vmatprep.subr.mxu0 0.0
      %2584 = vmatpush1.msra.mxu0 %v2462
      %2585 = vmatprep.subr.mxu0 0.0
      %2586 = vmatpush1.msra.mxu0 %v2463
      %2587 = vmatprep.subr.mxu0 0.0
      %2588 = vmatpush1.msra.mxu0 %v2464
      %2589 = vmatprep.subr.mxu0 0.0
      %2590 = vmatpush1.msra.mxu0 0.0
      %2591 = vmatprep.subr.mxu0 0.0
      %2592 = vmatpush1.msra.mxu0 0.0
      %2593 = vmatprep.subr.mxu0 0.0
      %2594 = vmatpush1.msra.mxu0 0.0
      %2595 = vmatprep.subr.mxu0 0.0
      %2596 = vmatpush1.msra.mxu0 0.0
      %2597 = vmatprep.subr.mxu0 0.0
      %2598 = vmatpush1.msra.mxu0 0.0
      %2599 = vmatprep.subr.mxu0 0.0
      %2600 = vmatpush1.msra.mxu0 0.0
      %2601 = vmatprep.subr.mxu0 0.0
      %2602 = vmatpush1.msra.mxu0 0.0
      %2603 = vmatprep.subr.mxu0 0.0
      %2604 = vmatpush1.msra.mxu0 0.0
      %2605 = vmatprep.subr.mxu0 0.0
      %2606 = vmatpush1.msra.mxu0 0.0
      %2607 = vmatprep.subr.mxu0 0.0
      %2608 = vmatpush1.msra.mxu0 0.0
      %2609 = vmatprep.subr.mxu0 0.0
      %2610 = vmatpush1.msra.mxu0 0.0
      %2611 = vmatprep.subr.mxu0 0.0
      %2612 = vmatpush1.msra.mxu0 0.0
      %2613 = vmatprep.subr.mxu0 0.0
      %2614 = vmatpush1.msra.mxu0 0.0
      %2615 = vmatprep.subr.mxu0 0.0
      %2616 = vmatpush1.msra.mxu0 0.0
      %2617 = vmatprep.subr.mxu0 0.0
      %2618 = vmatpush1.msra.mxu0 0.0
      %2619 = vmatprep.subr.mxu0 0.0
      %2620 = vmatpush1.msra.mxu0 0.0
      %2621 = vmatprep.mubr.f32.mxu0 0.0
      %2622 = vmatmul.mubr.f32.gmra.mrb[0].mxu0 %v2448
      %v2623 = vpop.f32.mrb[0].mxu0
      %v2624 = vadd.f32 %v2549, %v2623
      %v2625 = vpop.f32.mrb[0].mxu0
      %2626 = vmatprep.mubr.f32.mxu0 0.0
      %2627 = vmatmul.mubr.f32.gmra.mrb[0].mxu0 %v2446
      %v2628 = vpop.f32.mrb[0].mxu0
      %v2629 = vadd.f32 %v2554, %v2628
      %v2630 = vpop.f32.mrb[0].mxu0
      %2631 = vdwg.mxu0
      %v2633 = vrot.slane %v2443, 1
      %v2634 = vrot.slane %v2444, 1
      %v2635 = vsel %vm859, %v2633, %v2634
      %s2637 = scalar_lea.vmem %s12, 256
      %v2638 = vld [vmem:[%s2637] sm:$0xff]
      %v2639 = vld [vmem:[%s2637 + $0x8] sm:$0xff]
      %v2640 = vld [vmem:[%s2637 + $0x10] sm:$0xff]
      %v2641 = vld [vmem:[%s2637 + $0x18] sm:$0xff]
      %v2642 = vld [vmem:[%s2637 + $0x20] sm:$0xff]
      %v2643 = vld [vmem:[%s2637 + $0x28] sm:$0xff]
      %v2644 = vld [vmem:[%s2637 + $0x30] sm:$0xff]
      %v2645 = vld [vmem:[%s2637 + $0x38] sm:$0xff]
      %v2646 = vld [vmem:[%s2637 + $0x40] sm:$0xff]
      %v2647 = vld [vmem:[%s2637 + $0x48] sm:$0xff]
      %v2648 = vld [vmem:[%s2637 + $0x50] sm:$0xff]
      %v2649 = vld [vmem:[%s2637 + $0x58] sm:$0xff]
      %v2650 = vld [vmem:[%s2637 + $0x60] sm:$0xff]
      %v2651 = vld [vmem:[%s2637 + $0x68] sm:$0xff]
      %v2652 = vld [vmem:[%s2637 + $0x70] sm:$0xff]
      %v2653 = vld [vmem:[%s2637 + $0x78] sm:$0xff]
      %2654 = vmatprep.subr.mxu0 0.0
      %2655 = vmatpush1.msra.mxu0 %v2638
      %2656 = vmatprep.subr.mxu0 0.0
      %2657 = vmatpush1.msra.mxu0 %v2639
      %2658 = vmatprep.subr.mxu0 0.0
      %2659 = vmatpush1.msra.mxu0 %v2640
      %2660 = vmatprep.subr.mxu0 0.0
      %2661 = vmatpush1.msra.mxu0 %v2641
      %2662 = vmatprep.subr.mxu0 0.0
      %2663 = vmatpush1.msra.mxu0 %v2642
      %2664 = vmatprep.subr.mxu0 0.0
      %2665 = vmatpush1.msra.mxu0 %v2643
      %2666 = vmatprep.subr.mxu0 0.0
      %2667 = vmatpush1.msra.mxu0 %v2644
      %2668 = vmatprep.subr.mxu0 0.0
      %2669 = vmatpush1.msra.mxu0 %v2645
      %2670 = vmatprep.subr.mxu0 0.0
      %2671 = vmatpush1.msra.mxu0 %v2646
      %2672 = vmatprep.subr.mxu0 0.0
      %2673 = vmatpush1.msra.mxu0 %v2647
      %2674 = vmatprep.subr.mxu0 0.0
      %2675 = vmatpush1.msra.mxu0 %v2648
      %2676 = vmatprep.subr.mxu0 0.0
      %2677 = vmatpush1.msra.mxu0 %v2649
      %2678 = vmatprep.subr.mxu0 0.0
      %2679 = vmatpush1.msra.mxu0 %v2650
      %2680 = vmatprep.subr.mxu0 0.0
      %2681 = vmatpush1.msra.mxu0 %v2651
      %2682 = vmatprep.subr.mxu0 0.0
      %2683 = vmatpush1.msra.mxu0 %v2652
      %2684 = vmatprep.subr.mxu0 0.0
      %2685 = vmatpush1.msra.mxu0 %v2653
      %2686 = vmatprep.subr.mxu0 0.0
      %2687 = vmatpush1.msra.mxu0 0.0
      %2688 = vmatprep.subr.mxu0 0.0
      %2689 = vmatpush1.msra.mxu0 0.0
      %2690 = vmatprep.subr.mxu0 0.0
      %2691 = vmatpush1.msra.mxu0 0.0
      %2692 = vmatprep.subr.mxu0 0.0
      %2693 = vmatpush1.msra.mxu0 0.0
      %2694 = vmatprep.subr.mxu0 0.0
      %2695 = vmatpush1.msra.mxu0 0.0
      %2696 = vmatprep.subr.mxu0 0.0
      %2697 = vmatpush1.msra.mxu0 0.0
      %2698 = vmatprep.subr.mxu0 0.0
      %2699 = vmatpush1.msra.mxu0 0.0
      %2700 = vmatprep.subr.mxu0 0.0
      %2701 = vmatpush1.msra.mxu0 0.0
      %2702 = vmatprep.subr.mxu0 0.0
      %2703 = vmatpush1.msra.mxu0 0.0
      %2704 = vmatprep.subr.mxu0 0.0
      %2705 = vmatpush1.msra.mxu0 0.0
      %2706 = vmatprep.subr.mxu0 0.0
      %2707 = vmatpush1.msra.mxu0 0.0
      %2708 = vmatprep.subr.mxu0 0.0
      %2709 = vmatpush1.msra.mxu0 0.0
      %2710 = vmatprep.subr.mxu0 0.0
      %2711 = vmatpush1.msra.mxu0 0.0
      %2712 = vmatprep.subr.mxu0 0.0
      %2713 = vmatpush1.msra.mxu0 0.0
      %2714 = vmatprep.subr.mxu0 0.0
      %2715 = vmatpush1.msra.mxu0 0.0
      %2716 = vmatprep.subr.mxu0 0.0
      %2717 = vmatpush1.msra.mxu0 0.0
      %2718 = vmatprep.mubr.f32.mxu0 0.0
      %2719 = vmatmul.mubr.f32.gmra.mrb[0].mxu0 %v2635
      %v2720 = vpop.f32.mrb[0].mxu0
      %v2721 = vadd.f32 0.0, %v2720
      %v2722 = vpop.f32.mrb[0].mxu0
      %2723 = vmatprep.mubr.f32.mxu0 0.0
      %2724 = vmatmul.mubr.f32.gmra.mrb[0].mxu0 0.0
      %v2725 = vpop.f32.mrb[0].mxu0
      %v2726 = vadd.f32 0.0, %v2725
      %v2727 = vpop.f32.mrb[0].mxu0
      %2728 = vdwg.mxu0
      %v2729 = vadd.f32 %v2624, %v2721
      %v2730 = vadd.f32 %v2629, %v2726
      %v2731 = vmax.f32 %v2729, 0.0
      %v2732 = vmax.f32 %v2730, 0.0
      %2733 = vmatprep.subr.mxu0 0.0
      %2734 = vmatpush1.msra.mxu0 %v2427
      %2735 = vmatprep.subr.mxu0 0.0
      %2736 = vmatpush1.msra.mxu0 %v2428
      %2737 = vmatprep.subr.mxu0 0.0
      %2738 = vmatpush1.msra.mxu0 %v2429
      %2739 = vmatprep.subr.mxu0 0.0
      %2740 = vmatpush1.msra.mxu0 %v2430
      %2741 = vmatprep.subr.mxu0 0.0
      %2742 = vmatpush1.msra.mxu0 %v2431
      %2743 = vmatprep.subr.mxu0 0.0
      %2744 = vmatpush1.msra.mxu0 %v2432
      %2745 = vmatprep.subr.mxu0 0.0
      %2746 = vmatpush1.msra.mxu0 %v2433
      %2747 = vmatprep.subr.mxu0 0.0
      %2748 = vmatpush1.msra.mxu0 %v2434
      %2749 = vmatprep.subr.mxu0 0.0
      %2750 = vmatpush1.msra.mxu0 %v2435
      %2751 = vmatprep.subr.mxu0 0.0
      %2752 = vmatpush1.msra.mxu0 %v2436
      %2753 = vmatprep.subr.mxu0 0.0
      %2754 = vmatpush1.msra.mxu0 %v2437
      %2755 = vmatprep.subr.mxu0 0.0
      %2756 = vmatpush1.msra.mxu0 %v2438
      %2757 = vmatprep.subr.mxu0 0.0
      %2758 = vmatpush1.msra.mxu0 %v2439
      %2759 = vmatprep.subr.mxu0 0.0
      %2760 = vmatpush1.msra.mxu0 %v2440
      %2761 = vmatprep.subr.mxu0 0.0
      %2762 = vmatpush1.msra.mxu0 %v2441
      %2763 = vmatprep.subr.mxu0 0.0
      %2764 = vmatpush1.msra.mxu0 %v2442
      %2765 = vmatprep.subr.mxu0 0.0
      %2766 = vmatpush1.msra.mxu0 0.0
      %2767 = vmatprep.subr.mxu0 0.0
      %2768 = vmatpush1.msra.mxu0 0.0
      %2769 = vmatprep.subr.mxu0 0.0
      %2770 = vmatpush1.msra.mxu0 0.0
      %2771 = vmatprep.subr.mxu0 0.0
      %2772 = vmatpush1.msra.mxu0 0.0
      %2773 = vmatprep.subr.mxu0 0.0
      %2774 = vmatpush1.msra.mxu0 0.0
      %2775 = vmatprep.subr.mxu0 0.0
      %2776 = vmatpush1.msra.mxu0 0.0
      %2777 = vmatprep.subr.mxu0 0.0
      %2778 = vmatpush1.msra.mxu0 0.0
      %2779 = vmatprep.subr.mxu0 0.0
      %2780 = vmatpush1.msra.mxu0 0.0
      %2781 = vmatprep.subr.mxu0 0.0
      %2782 = vmatpush1.msra.mxu0 0.0
      %2783 = vmatprep.subr.mxu0 0.0
      %2784 = vmatpush1.msra.mxu0 0.0
      %2785 = vmatprep.subr.mxu0 0.0
      %2786 = vmatpush1.msra.mxu0 0.0
      %2787 = vmatprep.subr.mxu0 0.0
      %2788 = vmatpush1.msra.mxu0 0.0
      %2789 = vmatprep.subr.mxu0 0.0
      %2790 = vmatpush1.msra.mxu0 0.0
      %2791 = vmatprep.subr.mxu0 0.0
      %2792 = vmatpush1.msra.mxu0 0.0
      %2793 = vmatprep.subr.mxu0 0.0
      %2794 = vmatpush1.msra.mxu0 0.0
      %2795 = vmatprep.subr.mxu0 0.0
      %2796 = vmatpush1.msra.mxu0 0.0
      %2797 = vmatprep.mubr.f32.mxu0 0.0
      %2798 = vmatmul.mubr.f32.gmra.mrb[0].mxu0 %v2731
      %v2799 = vpop.f32.mrb[0].mxu0
      %v2800 = vadd.f32 0.0, %v2799
      %v2801 = vpop.f32.mrb[0].mxu0
      %2802 = vmatprep.mubr.f32.mxu0 0.0
      %2803 = vmatmul.mubr.f32.gmra.mrb[0].mxu0 %v2732
      %v2804 = vpop.f32.mrb[0].mxu0
      %v2805 = vadd.f32 0.0, %v2804
      %v2806 = vpop.f32.mrb[0].mxu0
      %2807 = vdwg.mxu0
      %v2808 = vadd.f32 %v2425, %v2800
      %v2809 = vadd.f32 %v2426, %v2805
      %v2810 = vmax.f32 %v2808, 0.0
      %v2811 = vmax.f32 %v2809, 0.0
      %v2813 = vrot.slane %v2810, 7
      %v2815 = vsel %vm495, 0.0, %v2813
      %2816 = vmatprep.subr.mxu0 0.0
      %2817 = vmatpush1.msra.mxu0 %v2466
      %2818 = vmatprep.subr.mxu0 0.0
      %2819 = vmatpush1.msra.mxu0 %v2467
      %2820 = vmatprep.subr.mxu0 0.0
      %2821 = vmatpush1.msra.mxu0 %v2468
      %2822 = vmatprep.subr.mxu0 0.0
      %2823 = vmatpush1.msra.mxu0 %v2469
      %2824 = vmatprep.subr.mxu0 0.0
      %2825 = vmatpush1.msra.mxu0 %v2470
      %2826 = vmatprep.subr.mxu0 0.0
      %2827 = vmatpush1.msra.mxu0 %v2471
      %2828 = vmatprep.subr.mxu0 0.0
      %2829 = vmatpush1.msra.mxu0 %v2472
      %2830 = vmatprep.subr.mxu0 0.0
      %2831 = vmatpush1.msra.mxu0 %v2473
      %2832 = vmatprep.subr.mxu0 0.0
      %2833 = vmatpush1.msra.mxu0 %v2474
      %2834 = vmatprep.subr.mxu0 0.0
      %2835 = vmatpush1.msra.mxu0 %v2475
      %2836 = vmatprep.subr.mxu0 0.0
      %2837 = vmatpush1.msra.mxu0 %v2476
      %2838 = vmatprep.subr.mxu0 0.0
      %2839 = vmatpush1.msra.mxu0 %v2477
      %2840 = vmatprep.subr.mxu0 0.0
      %2841 = vmatpush1.msra.mxu0 %v2478
      %2842 = vmatprep.subr.mxu0 0.0
      %2843 = vmatpush1.msra.mxu0 %v2479
      %2844 = vmatprep.subr.mxu0 0.0
      %2845 = vmatpush1.msra.mxu0 %v2480
      %2846 = vmatprep.subr.mxu0 0.0
      %2847 = vmatpush1.msra.mxu0 %v2481
      %2848 = vmatprep.subr.mxu0 0.0
      %2849 = vmatpush1.msra.mxu0 0.0
      %2850 = vmatprep.subr.mxu0 0.0
      %2851 = vmatpush1.msra.mxu0 0.0
      %2852 = vmatprep.subr.mxu0 0.0
      %2853 = vmatpush1.msra.mxu0 0.0
      %2854 = vmatprep.subr.mxu0 0.0
      %2855 = vmatpush1.msra.mxu0 0.0
      %2856 = vmatprep.subr.mxu0 0.0
      %2857 = vmatpush1.msra.mxu0 0.0
      %2858 = vmatprep.subr.mxu0 0.0
      %2859 = vmatpush1.msra.mxu0 0.0
      %2860 = vmatprep.subr.mxu0 0.0
      %2861 = vmatpush1.msra.mxu0 0.0
      %2862 = vmatprep.subr.mxu0 0.0
      %2863 = vmatpush1.msra.mxu0 0.0
      %2864 = vmatprep.subr.mxu0 0.0
      %2865 = vmatpush1.msra.mxu0 0.0
      %2866 = vmatprep.subr.mxu0 0.0
      %2867 = vmatpush1.msra.mxu0 0.0
      %2868 = vmatprep.subr.mxu0 0.0
      %2869 = vmatpush1.msra.mxu0 0.0
      %2870 = vmatprep.subr.mxu0 0.0
      %2871 = vmatpush1.msra.mxu0 0.0
      %2872 = vmatprep.subr.mxu0 0.0
      %2873 = vmatpush1.msra.mxu0 0.0
      %2874 = vmatprep.subr.mxu0 0.0
      %2875 = vmatpush1.msra.mxu0 0.0
      %2876 = vmatprep.subr.mxu0 0.0
      %2877 = vmatpush1.msra.mxu0 0.0
      %2878 = vmatprep.subr.mxu0 0.0
      %2879 = vmatpush1.msra.mxu0 0.0
      %2880 = vmatprep.mubr.f32.mxu0 0.0
      %2881 = vmatmul.mubr.f32.gmra.mrb[0].mxu0 %v2810
      %v2882 = vpop.f32.mrb[0].mxu0
      %v2883 = vadd.f32 0.0, %v2882
      %v2884 = vpop.f32.mrb[0].mxu0
      %2885 = vmatprep.mubr.f32.mxu0 0.0
      %2886 = vmatmul.mubr.f32.gmra.mrb[0].mxu0 %v2811
      %v2887 = vpop.f32.mrb[0].mxu0
      %v2888 = vadd.f32 0.0, %v2887
      %v2889 = vpop.f32.mrb[0].mxu0
      %2890 = vdwg.mxu0
      %2891 = vmatprep.subr.mxu0 0.0
      %2892 = vmatpush1.msra.mxu0 %v2449
      %2893 = vmatprep.subr.mxu0 0.0
      %2894 = vmatpush1.msra.mxu0 %v2450
      %2895 = vmatprep.subr.mxu0 0.0
      %2896 = vmatpush1.msra.mxu0 %v2451
      %2897 = vmatprep.subr.mxu0 0.0
      %2898 = vmatpush1.msra.mxu0 %v2452
      %2899 = vmatprep.subr.mxu0 0.0
      %2900 = vmatpush1.msra.mxu0 %v2453
      %2901 = vmatprep.subr.mxu0 0.0
      %2902 = vmatpush1.msra.mxu0 %v2454
      %2903 = vmatprep.subr.mxu0 0.0
      %2904 = vmatpush1.msra.mxu0 %v2455
      %2905 = vmatprep.subr.mxu0 0.0
      %2906 = vmatpush1.msra.mxu0 %v2456
      %2907 = vmatprep.subr.mxu0 0.0
      %2908 = vmatpush1.msra.mxu0 %v2457
      %2909 = vmatprep.subr.mxu0 0.0
      %2910 = vmatpush1.msra.mxu0 %v2458
      %2911 = vmatprep.subr.mxu0 0.0
      %2912 = vmatpush1.msra.mxu0 %v2459
      %2913 = vmatprep.subr.mxu0 0.0
      %2914 = vmatpush1.msra.mxu0 %v2460
      %2915 = vmatprep.subr.mxu0 0.0
      %2916 = vmatpush1.msra.mxu0 %v2461
      %2917 = vmatprep.subr.mxu0 0.0
      %2918 = vmatpush1.msra.mxu0 %v2462
      %2919 = vmatprep.subr.mxu0 0.0
      %2920 = vmatpush1.msra.mxu0 %v2463
      %2921 = vmatprep.subr.mxu0 0.0
      %2922 = vmatpush1.msra.mxu0 %v2464
      %2923 = vmatprep.subr.mxu0 0.0
      %2924 = vmatpush1.msra.mxu0 0.0
      %2925 = vmatprep.subr.mxu0 0.0
      %2926 = vmatpush1.msra.mxu0 0.0
      %2927 = vmatprep.subr.mxu0 0.0
      %2928 = vmatpush1.msra.mxu0 0.0
      %2929 = vmatprep.subr.mxu0 0.0
      %2930 = vmatpush1.msra.mxu0 0.0
      %2931 = vmatprep.subr.mxu0 0.0
      %2932 = vmatpush1.msra.mxu0 0.0
      %2933 = vmatprep.subr.mxu0 0.0
      %2934 = vmatpush1.msra.mxu0 0.0
      %2935 = vmatprep.subr.mxu0 0.0
      %2936 = vmatpush1.msra.mxu0 0.0
      %2937 = vmatprep.subr.mxu0 0.0
      %2938 = vmatpush1.msra.mxu0 0.0
      %2939 = vmatprep.subr.mxu0 0.0
      %2940 = vmatpush1.msra.mxu0 0.0
      %2941 = vmatprep.subr.mxu0 0.0
      %2942 = vmatpush1.msra.mxu0 0.0
      %2943 = vmatprep.subr.mxu0 0.0
      %2944 = vmatpush1.msra.mxu0 0.0
      %2945 = vmatprep.subr.mxu0 0.0
      %2946 = vmatpush1.msra.mxu0 0.0
      %2947 = vmatprep.subr.mxu0 0.0
      %2948 = vmatpush1.msra.mxu0 0.0
      %2949 = vmatprep.subr.mxu0 0.0
      %2950 = vmatpush1.msra.mxu0 0.0
      %2951 = vmatprep.subr.mxu0 0.0
      %2952 = vmatpush1.msra.mxu0 0.0
      %2953 = vmatprep.subr.mxu0 0.0
      %2954 = vmatpush1.msra.mxu0 0.0
      %2955 = vmatprep.mubr.f32.mxu0 0.0
      %2956 = vmatmul.mubr.f32.gmra.mrb[0].mxu0 %v2815
      %v2957 = vpop.f32.mrb[0].mxu0
      %v2958 = vadd.f32 %v2883, %v2957
      %v2959 = vpop.f32.mrb[0].mxu0
      %2960 = vmatprep.mubr.f32.mxu0 0.0
      %2961 = vmatmul.mubr.f32.gmra.mrb[0].mxu0 %v2813
      %v2962 = vpop.f32.mrb[0].mxu0
      %v2963 = vadd.f32 %v2888, %v2962
      %v2964 = vpop.f32.mrb[0].mxu0
      %2965 = vdwg.mxu0
      %v2967 = vrot.slane %v2810, 1
      %v2968 = vrot.slane %v2811, 1
      %v2969 = vsel %vm859, %v2967, %v2968
      %2971 = vmatprep.subr.mxu0 0.0
      %2972 = vmatpush1.msra.mxu0 %v2638
      %2973 = vmatprep.subr.mxu0 0.0
      %2974 = vmatpush1.msra.mxu0 %v2639
      %2975 = vmatprep.subr.mxu0 0.0
      %2976 = vmatpush1.msra.mxu0 %v2640
      %2977 = vmatprep.subr.mxu0 0.0
      %2978 = vmatpush1.msra.mxu0 %v2641
      %2979 = vmatprep.subr.mxu0 0.0
      %2980 = vmatpush1.msra.mxu0 %v2642
      %2981 = vmatprep.subr.mxu0 0.0
      %2982 = vmatpush1.msra.mxu0 %v2643
      %2983 = vmatprep.subr.mxu0 0.0
      %2984 = vmatpush1.msra.mxu0 %v2644
      %2985 = vmatprep.subr.mxu0 0.0
      %2986 = vmatpush1.msra.mxu0 %v2645
      %2987 = vmatprep.subr.mxu0 0.0
      %2988 = vmatpush1.msra.mxu0 %v2646
      %2989 = vmatprep.subr.mxu0 0.0
      %2990 = vmatpush1.msra.mxu0 %v2647
      %2991 = vmatprep.subr.mxu0 0.0
      %2992 = vmatpush1.msra.mxu0 %v2648
      %2993 = vmatprep.subr.mxu0 0.0
      %2994 = vmatpush1.msra.mxu0 %v2649
      %2995 = vmatprep.subr.mxu0 0.0
      %2996 = vmatpush1.msra.mxu0 %v2650
      %2997 = vmatprep.subr.mxu0 0.0
      %2998 = vmatpush1.msra.mxu0 %v2651
      %2999 = vmatprep.subr.mxu0 0.0
      %3000 = vmatpush1.msra.mxu0 %v2652
      %3001 = vmatprep.subr.mxu0 0.0
      %3002 = vmatpush1.msra.mxu0 %v2653
      %3003 = vmatprep.subr.mxu0 0.0
      %3004 = vmatpush1.msra.mxu0 0.0
      %3005 = vmatprep.subr.mxu0 0.0
      %3006 = vmatpush1.msra.mxu0 0.0
      %3007 = vmatprep.subr.mxu0 0.0
      %3008 = vmatpush1.msra.mxu0 0.0
      %3009 = vmatprep.subr.mxu0 0.0
      %3010 = vmatpush1.msra.mxu0 0.0
      %3011 = vmatprep.subr.mxu0 0.0
      %3012 = vmatpush1.msra.mxu0 0.0
      %3013 = vmatprep.subr.mxu0 0.0
      %3014 = vmatpush1.msra.mxu0 0.0
      %3015 = vmatprep.subr.mxu0 0.0
      %3016 = vmatpush1.msra.mxu0 0.0
      %3017 = vmatprep.subr.mxu0 0.0
      %3018 = vmatpush1.msra.mxu0 0.0
      %3019 = vmatprep.subr.mxu0 0.0
      %3020 = vmatpush1.msra.mxu0 0.0
      %3021 = vmatprep.subr.mxu0 0.0
      %3022 = vmatpush1.msra.mxu0 0.0
      %3023 = vmatprep.subr.mxu0 0.0
      %3024 = vmatpush1.msra.mxu0 0.0
      %3025 = vmatprep.subr.mxu0 0.0
      %3026 = vmatpush1.msra.mxu0 0.0
      %3027 = vmatprep.subr.mxu0 0.0
      %3028 = vmatpush1.msra.mxu0 0.0
      %3029 = vmatprep.subr.mxu0 0.0
      %3030 = vmatpush1.msra.mxu0 0.0
      %3031 = vmatprep.subr.mxu0 0.0
      %3032 = vmatpush1.msra.mxu0 0.0
      %3033 = vmatprep.subr.mxu0 0.0
      %3034 = vmatpush1.msra.mxu0 0.0
      %3035 = vmatprep.mubr.f32.mxu0 0.0
      %3036 = vmatmul.mubr.f32.gmra.mrb[0].mxu0 %v2969
      %v3037 = vpop.f32.mrb[0].mxu0
      %v3038 = vadd.f32 0.0, %v3037
      %v3039 = vpop.f32.mrb[0].mxu0
      %3040 = vmatprep.mubr.f32.mxu0 0.0
      %3041 = vmatmul.mubr.f32.gmra.mrb[0].mxu0 0.0
      %v3042 = vpop.f32.mrb[0].mxu0
      %v3043 = vadd.f32 0.0, %v3042
      %v3044 = vpop.f32.mrb[0].mxu0
      %3045 = vdwg.mxu0
      %v3046 = vadd.f32 %v2958, %v3038
      %v3047 = vadd.f32 %v2963, %v3043
      %v3048 = vmax.f32 %v3046, 0.0
      %v3049 = vmax.f32 %v3047, 0.0
      %3050 = vmatprep.subr.mxu0 0.0
      %3051 = vmatpush1.msra.mxu0 %v2427
      %3052 = vmatprep.subr.mxu0 0.0
      %3053 = vmatpush1.msra.mxu0 %v2428
      %3054 = vmatprep.subr.mxu0 0.0
      %3055 = vmatpush1.msra.mxu0 %v2429
      %3056 = vmatprep.subr.mxu0 0.0
      %3057 = vmatpush1.msra.mxu0 %v2430
      %3058 = vmatprep.subr.mxu0 0.0
      %3059 = vmatpush1.msra.mxu0 %v2431
      %3060 = vmatprep.subr.mxu0 0.0
      %3061 = vmatpush1.msra.mxu0 %v2432
      %3062 = vmatprep.subr.mxu0 0.0
      %3063 = vmatpush1.msra.mxu0 %v2433
      %3064 = vmatprep.subr.mxu0 0.0
      %3065 = vmatpush1.msra.mxu0 %v2434
      %3066 = vmatprep.subr.mxu0 0.0
      %3067 = vmatpush1.msra.mxu0 %v2435
      %3068 = vmatprep.subr.mxu0 0.0
      %3069 = vmatpush1.msra.mxu0 %v2436
      %3070 = vmatprep.subr.mxu0 0.0
      %3071 = vmatpush1.msra.mxu0 %v2437
      %3072 = vmatprep.subr.mxu0 0.0
      %3073 = vmatpush1.msra.mxu0 %v2438
      %3074 = vmatprep.subr.mxu0 0.0
      %3075 = vmatpush1.msra.mxu0 %v2439
      %3076 = vmatprep.subr.mxu0 0.0
      %3077 = vmatpush1.msra.mxu0 %v2440
      %3078 = vmatprep.subr.mxu0 0.0
      %3079 = vmatpush1.msra.mxu0 %v2441
      %3080 = vmatprep.subr.mxu0 0.0
      %3081 = vmatpush1.msra.mxu0 %v2442
      %3082 = vmatprep.subr.mxu0 0.0
      %3083 = vmatpush1.msra.mxu0 0.0
      %3084 = vmatprep.subr.mxu0 0.0
      %3085 = vmatpush1.msra.mxu0 0.0
      %3086 = vmatprep.subr.mxu0 0.0
      %3087 = vmatpush1.msra.mxu0 0.0
      %3088 = vmatprep.subr.mxu0 0.0
      %3089 = vmatpush1.msra.mxu0 0.0
      %3090 = vmatprep.subr.mxu0 0.0
      %3091 = vmatpush1.msra.mxu0 0.0
      %3092 = vmatprep.subr.mxu0 0.0
      %3093 = vmatpush1.msra.mxu0 0.0
      %3094 = vmatprep.subr.mxu0 0.0
      %3095 = vmatpush1.msra.mxu0 0.0
      %3096 = vmatprep.subr.mxu0 0.0
      %3097 = vmatpush1.msra.mxu0 0.0
      %3098 = vmatprep.subr.mxu0 0.0
      %3099 = vmatpush1.msra.mxu0 0.0
      %3100 = vmatprep.subr.mxu0 0.0
      %3101 = vmatpush1.msra.mxu0 0.0
      %3102 = vmatprep.subr.mxu0 0.0
      %3103 = vmatpush1.msra.mxu0 0.0
      %3104 = vmatprep.subr.mxu0 0.0
      %3105 = vmatpush1.msra.mxu0 0.0
      %3106 = vmatprep.subr.mxu0 0.0
      %3107 = vmatpush1.msra.mxu0 0.0
      %3108 = vmatprep.subr.mxu0 0.0
      %3109 = vmatpush1.msra.mxu0 0.0
      %3110 = vmatprep.subr.mxu0 0.0
      %3111 = vmatpush1.msra.mxu0 0.0
      %3112 = vmatprep.subr.mxu0 0.0
      %3113 = vmatpush1.msra.mxu0 0.0
      %3114 = vmatprep.mubr.f32.mxu0 0.0
      %3115 = vmatmul.mubr.f32.gmra.mrb[0].mxu0 %v3048
      %v3116 = vpop.f32.mrb[0].mxu0
      %v3117 = vadd.f32 0.0, %v3116
      %v3118 = vpop.f32.mrb[0].mxu0
      %3119 = vmatprep.mubr.f32.mxu0 0.0
      %3120 = vmatmul.mubr.f32.gmra.mrb[0].mxu0 %v3049
      %v3121 = vpop.f32.mrb[0].mxu0
      %v3122 = vadd.f32 0.0, %v3121
      %v3123 = vpop.f32.mrb[0].mxu0
      %3124 = vdwg.mxu0
      %v3125 = vadd.f32 %v2808, %v3117
      %v3126 = vadd.f32 %v2809, %v3122
      %v3127 = vmax.f32 %v3125, 0.0
      %v3128 = vmax.f32 %v3126, 0.0
      %v3129 = vadd.f32 %v3127, %v2425
      %v3130 = vadd.f32 %v3128, %v2426
      %3131 = vst [vmem:[%s481] sm:$0xff] %v3129
      %3132 = vst [vmem:[%s481 + $0x8] sm:$0x1] %v3130
      %p3133 = scmp.lt.s32.totalorder %s25, 1
      %s3134 = scalar_select %p3133, %s25, 1
      %s3135 = smul.addr %s3134, 2
      %s3136 = smul.addr %s3135, 8
      %s3137 = scalar_lea.vmem %s14, %s3136
      // Predicated region
      $region77: #{_jitted_forward.1} parent=75 // pred_check
        %p3138 = pneg %p347
      $region78: #{_jitted_forward.1} parent=75 // pred_check_branch
        %3140 = sbr.rel (%p3138) target = $region80
      $region79: #{_jitted_forward.1} parent=75 // pred_region
        _
      $region80: #{_jitted_forward.1} parent=75 // pred_fallthru
        _
    $region76: #{_jitted_forward.1} parent=5 // pred_fallthru
      _
    %p3141 = scmp.le.s32.totalorder 2, %s20
    // Predicated region
    $region81: #{_jitted_forward.1} parent=5 // pred_check
      %p3142 = pneg %p3141
    $region82: #{_jitted_forward.1} parent=5 // pred_check_branch
      %3144 = sbr.rel (%p3142) target = $region84
    $region83: #{_jitted_forward.1} parent=5 // pred_region
      %s3145 = ssub.s32 %s20, 2
      // Predicated region
      $region85: #{_jitted_forward.1} parent=83 // pred_check
        %p3146 = pneg %p353
      $region86: #{_jitted_forward.1} parent=83 // pred_check_branch
        %3148 = sbr.rel (%p3146) target = $region88
      $region87: #{_jitted_forward.1} parent=83 // pred_region
        %p3149 = scmp.lt.s32.totalorder %s26, 1
        %s3150 = scalar_select %p3149, %s26, 1
        %s3151 = smul.addr %s3150, 2
        %s3152 = smul.addr %s3151, 8
        %s3153 = scalar_lea.vmem %s14, %s3152
      $region88: #{_jitted_forward.1} parent=83 // pred_fallthru
        _
    $region84: #{_jitted_forward.1} parent=5 // pred_fallthru
      _
  $region6: #{_jitted_forward.1} parent=0 // loop_footer
    %s24 = sadd.s32 1, %s20
  $region7: #{_jitted_forward.1} parent=0 // loop_footer_branch
    %19 = sbr.rel target = $region3
  $region8: #{_jitted_forward.1} parent=0 // loop_exit
    _

</llo_original>
